<compile_context>
chip_gen: v7x
topology: tpu7x:2x2x1
jax: 0.10.0
libtpu: 0.0.40
codegen_flags: <defaults>
</compile_context>

<pallas_src>
import numpy as np
import jax
import jax.numpy as jnp
from jax import lax
from jax.experimental import pallas as pl
from jax.experimental.pallas import tpu as pltpu

BN_EPS = 1e-5  # PyTorch BatchNorm2d default


def _round_up(x, m):
    return (x + m - 1) // m * m


# ------------------------------ Pallas kernel ------------------------------ #
def make_repconv_kernel(h, w, cin_p, rs, m_pad):
    """Fused deploy-mode RepConv: im2col-in-VMEM + one K=9*cin dot + SiLU."""

    def kernel(x_ref, w_ref, b_ref, o_ref, xs_ref, col_ref):
        # x_ref  : (1, rows_total, cin_p)  bf16  zero-padded image, rows flattened
        # w_ref  : (9*cin_p, cout_p)       bf16  fused 3x3 weight, tap order (ky,kx,cin)
        # b_ref  : (1, cout_p)             f32   fused bias
        # o_ref  : (1, h, w, cout_p)       bf16  NHWC output block
        # xs_ref : (rows_total, cin_p)     f32   staging scratch (unpacked slices)
        # col_ref: (m_pad, 9*cin_p)        bf16  im2col scratch

        # 1) one aligned full-tile upcast of the packed bf16 input
        xs_ref[...] = x_ref[0].astype(jnp.float32)

        # 2) build the im2col matrix: 9 shifted row-slices (static offsets),
        #    destination columns are 128-aligned
        for ky in range(3):
            for kx in range(3):
                t = ky * 3 + kx
                start = ky * rs + kx
                col_ref[:, t * cin_p:(t + 1) * cin_p] = (
                    xs_ref[start:start + m_pad, :].astype(jnp.bfloat16))

        # 3) single deep MXU contraction, K = 9*cin_p
        acc = jnp.dot(col_ref[...], w_ref[...],
                      preferred_element_type=jnp.float32)
        z = acc + b_ref[...]

        # 4) numerically stable SiLU: sigmoid(z) = 0.5*(1 + tanh(z/2)) (EUP)
        act = z * (0.5 * jnp.tanh(0.5 * z) + 0.5)

        # 5) strip the 2 "wrap" columns per stretched row while storing NHWC bf16
        for i in range(h):
            o_ref[0, i] = act[i * rs:i * rs + w, :].astype(o_ref.dtype)

    return kernel


# ------------------------- parameter folding (glue) ------------------------- #
def bn_fold(gamma, beta, mean, var):
    scale = gamma / jnp.sqrt(var + BN_EPS)
    return scale, beta - scale * mean


def fold_repconv(p, cin, cout):
    """RepVGG deploy fusion: fold BN + 1x1 (+ identity BN) into one 3x3 conv (f32)."""
    s3, sh3 = bn_fold(p["g3"], p["b3"], p["m3"], p["v3"])
    s1, sh1 = bn_fold(p["g1"], p["b1"], p["m1"], p["v1"])
    wf = jnp.transpose(p["w3"] * s3[:, None, None, None], (2, 3, 1, 0))   # (3,3,cin,cout)
    center = wf[1, 1] + (p["w1"][:, :, 0, 0] * s1[:, None]).T             # (cin,cout)
    bias = sh3 + sh1
    if "gid" in p:                                # identity branch (in_c == out_c, s == 1)
        sid, shid = bn_fold(p["gid"], p["bid"], p["mid"], p["vid"])
        center = center + jnp.eye(cin, dtype=jnp.float32) * sid[None, :]
        bias = bias + shid
    wf = wf.at[1, 1].set(center)
    return wf, bias                               # (3,3,cin,cout) f32, (cout,) f32


# --------------------------------- wrapper ---------------------------------- #
def repconv_forward(x_nchw, p, out_nchw_f32=True):
    n, cin, h, w = x_nchw.shape
    cout = p["w3"].shape[0]
    cin_p = _round_up(cin, 128)
    cout_p = _round_up(cout, 128)

    # ---- fused weights / bias (folded in f32, cast to bf16 at the end) ----
    wf, bias = fold_repconv(p, cin, cout)
    wf = jnp.pad(wf, ((0, 0), (0, 0), (0, cin_p - cin), (0, cout_p - cout)))
    w_mat = wf.reshape(9 * cin_p, cout_p).astype(jnp.bfloat16)
    bias = jnp.pad(bias, (0, cout_p - cout)).reshape(1, cout_p).astype(jnp.float32)

    # ---- geometry of the row-stretched padded image ----
    rs = w + 2                      # row stride of the padded image
    m = h * rs                      # stretched output rows actually needed
    m_pad = _round_up(m, 8)         # im2col / dot M dimension
    rows_needed = 2 * rs + 2 + m_pad            # deepest shifted slice
    base_rows = (h + 2) * rs
    h_extra = max(0, -(-(rows_needed - base_rows) // rs))
    rows_total = (h + 2 + h_extra) * rs

    # ---- input path: cast once to bf16, ONE pad (halo + extra bottom rows) ----
    x_bf = x_nchw.astype(jnp.bfloat16)
    x_nhwc = jnp.transpose(x_bf, (0, 2, 3, 1))
    x_pad = jnp.pad(x_nhwc, ((0, 0), (1, 1 + h_extra), (1, 1), (0, cin_p - cin)))
    x2d = x_pad.reshape(n, rows_total, cin_p)

    kernel = make_repconv_kernel(h, w, cin_p, rs, m_pad)
    out = pl.pallas_call(
        kernel,
        out_shape=jax.ShapeDtypeStruct((n, h, w, cout_p), jnp.bfloat16),
        grid_spec=pltpu.PrefetchScalarGridSpec(
            num_scalar_prefetch=0,
            grid=(n,),
            in_specs=[
                pl.BlockSpec((1, rows_total, cin_p), lambda b: (b, 0, 0)),
                pl.BlockSpec((9 * cin_p, cout_p), lambda b: (0, 0)),   # resident
                pl.BlockSpec((1, cout_p), lambda b: (0, 0)),           # resident
            ],
            out_specs=pl.BlockSpec((1, h, w, cout_p), lambda b: (b, 0, 0, 0)),
            scratch_shapes=[
                pltpu.VMEM((rows_total, cin_p), jnp.float32),    # f32 staging tile
                pltpu.VMEM((m_pad, 9 * cin_p), jnp.bfloat16),    # im2col matrix
            ],
        ),
        compiler_params=pltpu.CompilerParams(
            dimension_semantics=("parallel",),
        ),
    )(x2d, w_mat, bias)

    y = out[:, :, :, :cout]                       # strip lane padding (no-op if aligned)
    if out_nchw_f32:                              # PyTorch-parity layout/dtype
        y = jnp.transpose(y.astype(jnp.float32), (0, 3, 1, 2))
    return y


# ----------------------------- pure-JAX reference --------------------------- #
def ref_repconv(x_nchw, p):
    def conv(x, wgt, pad):
        return lax.conv_general_dilated(
            x, wgt, (1, 1), [(pad, pad), (pad, pad)],
            dimension_numbers=("NCHW", "OIHW", "NCHW"))

    s3, sh3 = bn_fold(p["g3"], p["b3"], p["m3"], p["v3"])
    s1, sh1 = bn_fold(p["g1"], p["b1"], p["m1"], p["v1"])
    z = conv(x_nchw, p["w3"], 1) * s3[None, :, None, None] + sh3[None, :, None, None]
    z = z + conv(x_nchw, p["w1"], 0) * s1[None, :, None, None] + sh1[None, :, None, None]
    if "gid" in p:
        sid, shid = bn_fold(p["gid"], p["bid"], p["mid"], p["vid"])
        z = z + x_nchw * sid[None, :, None, None] + shid[None, :, None, None]
    return z * jax.nn.sigmoid(z)


# -------------------------------- parameters -------------------------------- #
def make_params(key, cin, cout):
    ks = jax.random.split(key, 14)
    nrm = jax.random.normal
    p = {
        "w3": 0.02 * nrm(ks[0], (cout, cin, 3, 3), jnp.float32),
        "w1": 0.02 * nrm(ks[1], (cout, cin, 1, 1), jnp.float32),
        "g3": 1.0 + 0.1 * nrm(ks[2], (cout,), jnp.float32),
        "b3": 0.1 * nrm(ks[3], (cout,), jnp.float32),
        "m3": 0.1 * nrm(ks[4], (cout,), jnp.float32),
        "v3": 1.0 + 0.1 * jnp.abs(nrm(ks[5], (cout,), jnp.float32)),
        "g1": 1.0 + 0.1 * nrm(ks[6], (cout,), jnp.float32),
        "b1": 0.1 * nrm(ks[7], (cout,), jnp.float32),
        "m1": 0.1 * nrm(ks[8], (cout,), jnp.float32),
        "v1": 1.0 + 0.1 * jnp.abs(nrm(ks[9], (cout,), jnp.float32)),
    }
    if cin == cout:   # RepConv identity branch (BatchNorm2d on the input)
        p.update({
            "gid": 1.0 + 0.1 * nrm(ks[10], (cin,), jnp.float32),
            "bid": 0.1 * nrm(ks[11], (cin,), jnp.float32),
            "mid": 0.1 * nrm(ks[12], (cin,), jnp.float32),
            "vid": 1.0 + 0.1 * jnp.abs(nrm(ks[13], (cin,), jnp.float32)),
        })
    return p


# ----------------------------------- main ----------------------------------- #
if __name__ == "__main__":
    key = jax.random.PRNGKey(0)
    kx, kp1, kp2 = jax.random.split(key, 3)

    cases = [
        # (batch, in_c, out_c, h, w): out_c = 2*in_c -> no identity branch
        (2, 128, 256, 16, 16),
        # in_c == out_c -> identity (BatchNorm) branch active
        (2, 128, 128, 16, 16),
    ]
    keys_x = jax.random.split(kx, len(cases))
    keys_p = [kp1, kp2]

    for (bsz, cin, cout, h, w), kxi, kpi in zip(cases, keys_x, keys_p):
        x = jax.random.normal(kxi, (bsz, cin, h, w), jnp.float32)
        p = make_params(kpi, cin, cout)
        y = jax.block_until_ready(repconv_forward(x, p))
        assert y.shape == (bsz, cout, h, w)
        r = ref_repconv(x, p)
        # bf16 activations / weights / output -> loose tolerance vs f32 reference
        np.testing.assert_allclose(np.asarray(y), np.asarray(r), rtol=5e-2, atol=5e-2)

    print("KERNEL_OK")
</pallas_src>

<mosaic_0001>
module attributes {stable_mosaic.version = 11 : i64} {
  func.func @kernel(%arg0: i32, %arg1: memref<1x342x128xbf16, #tpu.memory_space<vmem>>, %arg2: memref<1152x256xbf16, #tpu.memory_space<vmem>>, %arg3: memref<1x256xf32, #tpu.memory_space<vmem>>, %arg4: memref<1x16x16x256xbf16, #tpu.memory_space<vmem>>, %arg5: memref<342x128xf32, #tpu.memory_space<vmem>>, %arg6: memref<288x1152xbf16, #tpu.memory_space<vmem>>) attributes {dimension_semantics = [#tpu.dimension_semantics<parallel>], iteration_bounds = array<i64: 2>, scalar_prefetch = 0 : i64, scratch_operands = 2 : i64, tpu.core_type = #tpu.core_type<tc>, window_params = [{transform_indices = @transform_0, window_bounds = array<i64: 1, 342, 128>}, {pipeline_mode = #tpu.pipeline_mode<synchronous>, transform_indices = @transform_1, window_bounds = array<i64: 1152, 256>}, {pipeline_mode = #tpu.pipeline_mode<synchronous>, transform_indices = @transform_2, window_bounds = array<i64: 1, 256>}, {transform_indices = @transform_3, window_bounds = array<i64: 1, 16, 16, 256>}]} {
    %c0 = arith.constant 0 : index
    %c0_0 = arith.constant 0 : index
    %c0_1 = arith.constant 0 : index
    %0 = vector.load %arg1[%c0, %c0_0, %c0_1] : memref<1x342x128xbf16, #tpu.memory_space<vmem>>, vector<1x342x128xbf16>
    %1 = vector.shape_cast %0 : vector<1x342x128xbf16> to vector<342x128xbf16>
    %2 = arith.extf %1 : vector<342x128xbf16> to vector<342x128xf32>
    %c0_2 = arith.constant 0 : index
    %c0_3 = arith.constant 0 : index
    %3 = vector.load %arg5[%c0_2, %c0_3] : memref<342x128xf32, #tpu.memory_space<vmem>>, vector<342x128xf32>
    tpu.vector_store %arg5[%c0_2, %c0_3], %2 {strides = array<i32>} : memref<342x128xf32, #tpu.memory_space<vmem>>, vector<342x128xf32>,
    %c0_4 = arith.constant 0 : index
    %c0_5 = arith.constant 0 : index
    %4 = vector.load %arg5[%c0_4, %c0_5] : memref<342x128xf32, #tpu.memory_space<vmem>>, vector<288x128xf32>
    %5 = arith.truncf %4 : vector<288x128xf32> to vector<288x128xbf16>
    %c0_6 = arith.constant 0 : index
    %c0_7 = arith.constant 0 : index
    %6 = vector.load %arg6[%c0_6, %c0_7] : memref<288x1152xbf16, #tpu.memory_space<vmem>>, vector<288x128xbf16>
    tpu.vector_store %arg6[%c0_6, %c0_7], %5 {strides = array<i32>} : memref<288x1152xbf16, #tpu.memory_space<vmem>>, vector<288x128xbf16>,
    %c1 = arith.constant 1 : index
    %c0_8 = arith.constant 0 : index
    %7 = vector.load %arg5[%c1, %c0_8] : memref<342x128xf32, #tpu.memory_space<vmem>>, vector<288x128xf32>
    %8 = arith.truncf %7 : vector<288x128xf32> to vector<288x128xbf16>
    %c0_9 = arith.constant 0 : index
    %c128 = arith.constant 128 : index
    %9 = vector.load %arg6[%c0_9, %c128] : memref<288x1152xbf16, #tpu.memory_space<vmem>>, vector<288x128xbf16>
    tpu.vector_store %arg6[%c0_9, %c128], %8 {strides = array<i32>} : memref<288x1152xbf16, #tpu.memory_space<vmem>>, vector<288x128xbf16>,
    %c2 = arith.constant 2 : index
    %c0_10 = arith.constant 0 : index
    %10 = vector.load %arg5[%c2, %c0_10] : memref<342x128xf32, #tpu.memory_space<vmem>>, vector<288x128xf32>
    %11 = arith.truncf %10 : vector<288x128xf32> to vector<288x128xbf16>
    %c0_11 = arith.constant 0 : index
    %c256 = arith.constant 256 : index
    %12 = vector.load %arg6[%c0_11, %c256] : memref<288x1152xbf16, #tpu.memory_space<vmem>>, vector<288x128xbf16>
    tpu.vector_store %arg6[%c0_11, %c256], %11 {strides = array<i32>} : memref<288x1152xbf16, #tpu.memory_space<vmem>>, vector<288x128xbf16>,
    %c18 = arith.constant 18 : index
    %c0_12 = arith.constant 0 : index
    %13 = vector.load %arg5[%c18, %c0_12] : memref<342x128xf32, #tpu.memory_space<vmem>>, vector<288x128xf32>
    %14 = arith.truncf %13 : vector<288x128xf32> to vector<288x128xbf16>
    %c0_13 = arith.constant 0 : index
    %c384 = arith.constant 384 : index
    %15 = vector.load %arg6[%c0_13, %c384] : memref<288x1152xbf16, #tpu.memory_space<vmem>>, vector<288x128xbf16>
    tpu.vector_store %arg6[%c0_13, %c384], %14 {strides = array<i32>} : memref<288x1152xbf16, #tpu.memory_space<vmem>>, vector<288x128xbf16>,
    %c19 = arith.constant 19 : index
    %c0_14 = arith.constant 0 : index
    %16 = vector.load %arg5[%c19, %c0_14] : memref<342x128xf32, #tpu.memory_space<vmem>>, vector<288x128xf32>
    %17 = arith.truncf %16 : vector<288x128xf32> to vector<288x128xbf16>
    %c0_15 = arith.constant 0 : index
    %c512 = arith.constant 512 : index
    %18 = vector.load %arg6[%c0_15, %c512] : memref<288x1152xbf16, #tpu.memory_space<vmem>>, vector<288x128xbf16>
    tpu.vector_store %arg6[%c0_15, %c512], %17 {strides = array<i32>} : memref<288x1152xbf16, #tpu.memory_space<vmem>>, vector<288x128xbf16>,
    %c20 = arith.constant 20 : index
    %c0_16 = arith.constant 0 : index
    %19 = vector.load %arg5[%c20, %c0_16] : memref<342x128xf32, #tpu.memory_space<vmem>>, vector<288x128xf32>
    %20 = arith.truncf %19 : vector<288x128xf32> to vector<288x128xbf16>
    %c0_17 = arith.constant 0 : index
    %c640 = arith.constant 640 : index
    %21 = vector.load %arg6[%c0_17, %c640] : memref<288x1152xbf16, #tpu.memory_space<vmem>>, vector<288x128xbf16>
    tpu.vector_store %arg6[%c0_17, %c640], %20 {strides = array<i32>} : memref<288x1152xbf16, #tpu.memory_space<vmem>>, vector<288x128xbf16>,
    %c36 = arith.constant 36 : index
    %c0_18 = arith.constant 0 : index
    %22 = vector.load %arg5[%c36, %c0_18] : memref<342x128xf32, #tpu.memory_space<vmem>>, vector<288x128xf32>
    %23 = arith.truncf %22 : vector<288x128xf32> to vector<288x128xbf16>
    %c0_19 = arith.constant 0 : index
    %c768 = arith.constant 768 : index
    %24 = vector.load %arg6[%c0_19, %c768] : memref<288x1152xbf16, #tpu.memory_space<vmem>>, vector<288x128xbf16>
    tpu.vector_store %arg6[%c0_19, %c768], %23 {strides = array<i32>} : memref<288x1152xbf16, #tpu.memory_space<vmem>>, vector<288x128xbf16>,
    %c37 = arith.constant 37 : index
    %c0_20 = arith.constant 0 : index
    %25 = vector.load %arg5[%c37, %c0_20] : memref<342x128xf32, #tpu.memory_space<vmem>>, vector<288x128xf32>
    %26 = arith.truncf %25 : vector<288x128xf32> to vector<288x128xbf16>
    %c0_21 = arith.constant 0 : index
    %c896 = arith.constant 896 : index
    %27 = vector.load %arg6[%c0_21, %c896] : memref<288x1152xbf16, #tpu.memory_space<vmem>>, vector<288x128xbf16>
    tpu.vector_store %arg6[%c0_21, %c896], %26 {strides = array<i32>} : memref<288x1152xbf16, #tpu.memory_space<vmem>>, vector<288x128xbf16>,
    %c38 = arith.constant 38 : index
    %c0_22 = arith.constant 0 : index
    %28 = vector.load %arg5[%c38, %c0_22] : memref<342x128xf32, #tpu.memory_space<vmem>>, vector<288x128xf32>
    %29 = arith.truncf %28 : vector<288x128xf32> to vector<288x128xbf16>
    %c0_23 = arith.constant 0 : index
    %c1024 = arith.constant 1024 : index
    %30 = vector.load %arg6[%c0_23, %c1024] : memref<288x1152xbf16, #tpu.memory_space<vmem>>, vector<288x128xbf16>
    tpu.vector_store %arg6[%c0_23, %c1024], %29 {strides = array<i32>} : memref<288x1152xbf16, #tpu.memory_space<vmem>>, vector<288x128xbf16>,
    %c0_24 = arith.constant 0 : index
    %c0_25 = arith.constant 0 : index
    %31 = vector.load %arg6[%c0_24, %c0_25] : memref<288x1152xbf16, #tpu.memory_space<vmem>>, vector<288x1152xbf16>
    %c0_26 = arith.constant 0 : index
    %c0_27 = arith.constant 0 : index
    %32 = vector.load %arg2[%c0_26, %c0_27] : memref<1152x256xbf16, #tpu.memory_space<vmem>>, vector<1152x256xbf16>
    %cst = arith.constant dense<0.000000e+00> : vector<288x256xf32>
    %33 = tpu.matmul %31, %32, %cst {dimension_numbers = #tpu.dot_dimension_numbers<[1], [0], [0], [1], [0, 0, 1, 1], [], []>} : vector<288x1152xbf16>, vector<1152x256xbf16>, vector<288x256xf32> -> vector<288x256xf32>
    %c0_28 = arith.constant 0 : index
    %c0_29 = arith.constant 0 : index
    %34 = vector.load %arg3[%c0_28, %c0_29] : memref<1x256xf32, #tpu.memory_space<vmem>>, vector<1x256xf32>
    %35 = vector.broadcast %34 : vector<1x256xf32> to vector<288x256xf32>
    %36 = arith.addf %33, %35 : vector<288x256xf32>
    %cst_30 = arith.constant 5.000000e-01 : f32
    %37 = vector.broadcast %cst_30 : f32 to vector<288x256xf32>
    %38 = arith.mulf %37, %36 : vector<288x256xf32>
    %39 = math.tanh %38 : vector<288x256xf32>
    %cst_31 = arith.constant 5.000000e-01 : f32
    %40 = vector.broadcast %cst_31 : f32 to vector<288x256xf32>
    %41 = arith.mulf %40, %39 : vector<288x256xf32>
    %cst_32 = arith.constant 5.000000e-01 : f32
    %42 = vector.broadcast %cst_32 : f32 to vector<288x256xf32>
    %43 = arith.addf %41, %42 : vector<288x256xf32>
    %44 = arith.mulf %36, %43 : vector<288x256xf32>
    %45 = vector.extract_strided_slice %44 {offsets = [0, 0], sizes = [16, 256], strides = [1, 1]} : vector<288x256xf32> to vector<16x256xf32>
    %46 = arith.truncf %45 : vector<16x256xf32> to vector<16x256xbf16>
    %c0_33 = arith.constant 0 : index
    %c0_34 = arith.constant 0 : index
    %c0_35 = arith.constant 0 : index
    %c0_36 = arith.constant 0 : index
    %47 = vector.load %arg4[%c0_33, %c0_34, %c0_35, %c0_36] : memref<1x16x16x256xbf16, #tpu.memory_space<vmem>>, vector<1x1x16x256xbf16>
    %48 = vector.shape_cast %47 : vector<1x1x16x256xbf16> to vector<16x256xbf16>
    %49 = vector.shape_cast %46 : vector<16x256xbf16> to vector<1x1x16x256xbf16>
    tpu.vector_store %arg4[%c0_33, %c0_34, %c0_35, %c0_36], %49 {strides = array<i32>} : memref<1x16x16x256xbf16, #tpu.memory_space<vmem>>, vector<1x1x16x256xbf16>,
    %50 = vector.extract_strided_slice %44 {offsets = [18, 0], sizes = [16, 256], strides = [1, 1]} : vector<288x256xf32> to vector<16x256xf32>
    %51 = arith.truncf %50 : vector<16x256xf32> to vector<16x256xbf16>
    %c0_37 = arith.constant 0 : index
    %c1_38 = arith.constant 1 : index
    %c0_39 = arith.constant 0 : index
    %c0_40 = arith.constant 0 : index
    %52 = vector.load %arg4[%c0_37, %c1_38, %c0_39, %c0_40] : memref<1x16x16x256xbf16, #tpu.memory_space<vmem>>, vector<1x1x16x256xbf16>
    %53 = vector.shape_cast %52 : vector<1x1x16x256xbf16> to vector<16x256xbf16>
    %54 = vector.shape_cast %51 : vector<16x256xbf16> to vector<1x1x16x256xbf16>
    tpu.vector_store %arg4[%c0_37, %c1_38, %c0_39, %c0_40], %54 {strides = array<i32>} : memref<1x16x16x256xbf16, #tpu.memory_space<vmem>>, vector<1x1x16x256xbf16>,
    %55 = vector.extract_strided_slice %44 {offsets = [36, 0], sizes = [16, 256], strides = [1, 1]} : vector<288x256xf32> to vector<16x256xf32>
    %56 = arith.truncf %55 : vector<16x256xf32> to vector<16x256xbf16>
    %c0_41 = arith.constant 0 : index
    %c2_42 = arith.constant 2 : index
    %c0_43 = arith.constant 0 : index
    %c0_44 = arith.constant 0 : index
    %57 = vector.load %arg4[%c0_41, %c2_42, %c0_43, %c0_44] : memref<1x16x16x256xbf16, #tpu.memory_space<vmem>>, vector<1x1x16x256xbf16>
    %58 = vector.shape_cast %57 : vector<1x1x16x256xbf16> to vector<16x256xbf16>
    %59 = vector.shape_cast %56 : vector<16x256xbf16> to vector<1x1x16x256xbf16>
    tpu.vector_store %arg4[%c0_41, %c2_42, %c0_43, %c0_44], %59 {strides = array<i32>} : memref<1x16x16x256xbf16, #tpu.memory_space<vmem>>, vector<1x1x16x256xbf16>,
    %60 = vector.extract_strided_slice %44 {offsets = [54, 0], sizes = [16, 256], strides = [1, 1]} : vector<288x256xf32> to vector<16x256xf32>
    %61 = arith.truncf %60 : vector<16x256xf32> to vector<16x256xbf16>
    %c0_45 = arith.constant 0 : index
    %c3 = arith.constant 3 : index
    %c0_46 = arith.constant 0 : index
    %c0_47 = arith.constant 0 : index
    %62 = vector.load %arg4[%c0_45, %c3, %c0_46, %c0_47] : memref<1x16x16x256xbf16, #tpu.memory_space<vmem>>, vector<1x1x16x256xbf16>
    %63 = vector.shape_cast %62 : vector<1x1x16x256xbf16> to vector<16x256xbf16>
    %64 = vector.shape_cast %61 : vector<16x256xbf16> to vector<1x1x16x256xbf16>
    tpu.vector_store %arg4[%c0_45, %c3, %c0_46, %c0_47], %64 {strides = array<i32>} : memref<1x16x16x256xbf16, #tpu.memory_space<vmem>>, vector<1x1x16x256xbf16>,
    %65 = vector.extract_strided_slice %44 {offsets = [72, 0], sizes = [16, 256], strides = [1, 1]} : vector<288x256xf32> to vector<16x256xf32>
    %66 = arith.truncf %65 : vector<16x256xf32> to vector<16x256xbf16>
    %c0_48 = arith.constant 0 : index
    %c4 = arith.constant 4 : index
    %c0_49 = arith.constant 0 : index
    %c0_50 = arith.constant 0 : index
    %67 = vector.load %arg4[%c0_48, %c4, %c0_49, %c0_50] : memref<1x16x16x256xbf16, #tpu.memory_space<vmem>>, vector<1x1x16x256xbf16>
    %68 = vector.shape_cast %67 : vector<1x1x16x256xbf16> to vector<16x256xbf16>
    %69 = vector.shape_cast %66 : vector<16x256xbf16> to vector<1x1x16x256xbf16>
    tpu.vector_store %arg4[%c0_48, %c4, %c0_49, %c0_50], %69 {strides = array<i32>} : memref<1x16x16x256xbf16, #tpu.memory_space<vmem>>, vector<1x1x16x256xbf16>,
    %70 = vector.extract_strided_slice %44 {offsets = [90, 0], sizes = [16, 256], strides = [1, 1]} : vector<288x256xf32> to vector<16x256xf32>
    %71 = arith.truncf %70 : vector<16x256xf32> to vector<16x256xbf16>
    %c0_51 = arith.constant 0 : index
    %c5 = arith.constant 5 : index
    %c0_52 = arith.constant 0 : index
    %c0_53 = arith.constant 0 : index
    %72 = vector.load %arg4[%c0_51, %c5, %c0_52, %c0_53] : memref<1x16x16x256xbf16, #tpu.memory_space<vmem>>, vector<1x1x16x256xbf16>
    %73 = vector.shape_cast %72 : vector<1x1x16x256xbf16> to vector<16x256xbf16>
    %74 = vector.shape_cast %71 : vector<16x256xbf16> to vector<1x1x16x256xbf16>
    tpu.vector_store %arg4[%c0_51, %c5, %c0_52, %c0_53], %74 {strides = array<i32>} : memref<1x16x16x256xbf16, #tpu.memory_space<vmem>>, vector<1x1x16x256xbf16>,
    %75 = vector.extract_strided_slice %44 {offsets = [108, 0], sizes = [16, 256], strides = [1, 1]} : vector<288x256xf32> to vector<16x256xf32>
    %76 = arith.truncf %75 : vector<16x256xf32> to vector<16x256xbf16>
    %c0_54 = arith.constant 0 : index
    %c6 = arith.constant 6 : index
    %c0_55 = arith.constant 0 : index
    %c0_56 = arith.constant 0 : index
    %77 = vector.load %arg4[%c0_54, %c6, %c0_55, %c0_56] : memref<1x16x16x256xbf16, #tpu.memory_space<vmem>>, vector<1x1x16x256xbf16>
    %78 = vector.shape_cast %77 : vector<1x1x16x256xbf16> to vector<16x256xbf16>
    %79 = vector.shape_cast %76 : vector<16x256xbf16> to vector<1x1x16x256xbf16>
    tpu.vector_store %arg4[%c0_54, %c6, %c0_55, %c0_56], %79 {strides = array<i32>} : memref<1x16x16x256xbf16, #tpu.memory_space<vmem>>, vector<1x1x16x256xbf16>,
    %80 = vector.extract_strided_slice %44 {offsets = [126, 0], sizes = [16, 256], strides = [1, 1]} : vector<288x256xf32> to vector<16x256xf32>
    %81 = arith.truncf %80 : vector<16x256xf32> to vector<16x256xbf16>
    %c0_57 = arith.constant 0 : index
    %c7 = arith.constant 7 : index
    %c0_58 = arith.constant 0 : index
    %c0_59 = arith.constant 0 : index
    %82 = vector.load %arg4[%c0_57, %c7, %c0_58, %c0_59] : memref<1x16x16x256xbf16, #tpu.memory_space<vmem>>, vector<1x1x16x256xbf16>
    %83 = vector.shape_cast %82 : vector<1x1x16x256xbf16> to vector<16x256xbf16>
    %84 = vector.shape_cast %81 : vector<16x256xbf16> to vector<1x1x16x256xbf16>
    tpu.vector_store %arg4[%c0_57, %c7, %c0_58, %c0_59], %84 {strides = array<i32>} : memref<1x16x16x256xbf16, #tpu.memory_space<vmem>>, vector<1x1x16x256xbf16>,
    %85 = vector.extract_strided_slice %44 {offsets = [144, 0], sizes = [16, 256], strides = [1, 1]} : vector<288x256xf32> to vector<16x256xf32>
    %86 = arith.truncf %85 : vector<16x256xf32> to vector<16x256xbf16>
    %c0_60 = arith.constant 0 : index
    %c8 = arith.constant 8 : index
    %c0_61 = arith.constant 0 : index
    %c0_62 = arith.constant 0 : index
    %87 = vector.load %arg4[%c0_60, %c8, %c0_61, %c0_62] : memref<1x16x16x256xbf16, #tpu.memory_space<vmem>>, vector<1x1x16x256xbf16>
    %88 = vector.shape_cast %87 : vector<1x1x16x256xbf16> to vector<16x256xbf16>
    %89 = vector.shape_cast %86 : vector<16x256xbf16> to vector<1x1x16x256xbf16>
    tpu.vector_store %arg4[%c0_60, %c8, %c0_61, %c0_62], %89 {strides = array<i32>} : memref<1x16x16x256xbf16, #tpu.memory_space<vmem>>, vector<1x1x16x256xbf16>,
    %90 = vector.extract_strided_slice %44 {offsets = [162, 0], sizes = [16, 256], strides = [1, 1]} : vector<288x256xf32> to vector<16x256xf32>
    %91 = arith.truncf %90 : vector<16x256xf32> to vector<16x256xbf16>
    %c0_63 = arith.constant 0 : index
    %c9 = arith.constant 9 : index
    %c0_64 = arith.constant 0 : index
    %c0_65 = arith.constant 0 : index
    %92 = vector.load %arg4[%c0_63, %c9, %c0_64, %c0_65] : memref<1x16x16x256xbf16, #tpu.memory_space<vmem>>, vector<1x1x16x256xbf16>
    %93 = vector.shape_cast %92 : vector<1x1x16x256xbf16> to vector<16x256xbf16>
    %94 = vector.shape_cast %91 : vector<16x256xbf16> to vector<1x1x16x256xbf16>
    tpu.vector_store %arg4[%c0_63, %c9, %c0_64, %c0_65], %94 {strides = array<i32>} : memref<1x16x16x256xbf16, #tpu.memory_space<vmem>>, vector<1x1x16x256xbf16>,
    %95 = vector.extract_strided_slice %44 {offsets = [180, 0], sizes = [16, 256], strides = [1, 1]} : vector<288x256xf32> to vector<16x256xf32>
    %96 = arith.truncf %95 : vector<16x256xf32> to vector<16x256xbf16>
    %c0_66 = arith.constant 0 : index
    %c10 = arith.constant 10 : index
    %c0_67 = arith.constant 0 : index
    %c0_68 = arith.constant 0 : index
    %97 = vector.load %arg4[%c0_66, %c10, %c0_67, %c0_68] : memref<1x16x16x256xbf16, #tpu.memory_space<vmem>>, vector<1x1x16x256xbf16>
    %98 = vector.shape_cast %97 : vector<1x1x16x256xbf16> to vector<16x256xbf16>
    %99 = vector.shape_cast %96 : vector<16x256xbf16> to vector<1x1x16x256xbf16>
    tpu.vector_store %arg4[%c0_66, %c10, %c0_67, %c0_68], %99 {strides = array<i32>} : memref<1x16x16x256xbf16, #tpu.memory_space<vmem>>, vector<1x1x16x256xbf16>,
    %100 = vector.extract_strided_slice %44 {offsets = [198, 0], sizes = [16, 256], strides = [1, 1]} : vector<288x256xf32> to vector<16x256xf32>
    %101 = arith.truncf %100 : vector<16x256xf32> to vector<16x256xbf16>
    %c0_69 = arith.constant 0 : index
    %c11 = arith.constant 11 : index
    %c0_70 = arith.constant 0 : index
    %c0_71 = arith.constant 0 : index
    %102 = vector.load %arg4[%c0_69, %c11, %c0_70, %c0_71] : memref<1x16x16x256xbf16, #tpu.memory_space<vmem>>, vector<1x1x16x256xbf16>
    %103 = vector.shape_cast %102 : vector<1x1x16x256xbf16> to vector<16x256xbf16>
    %104 = vector.shape_cast %101 : vector<16x256xbf16> to vector<1x1x16x256xbf16>
    tpu.vector_store %arg4[%c0_69, %c11, %c0_70, %c0_71], %104 {strides = array<i32>} : memref<1x16x16x256xbf16, #tpu.memory_space<vmem>>, vector<1x1x16x256xbf16>,
    %105 = vector.extract_strided_slice %44 {offsets = [216, 0], sizes = [16, 256], strides = [1, 1]} : vector<288x256xf32> to vector<16x256xf32>
    %106 = arith.truncf %105 : vector<16x256xf32> to vector<16x256xbf16>
    %c0_72 = arith.constant 0 : index
    %c12 = arith.constant 12 : index
    %c0_73 = arith.constant 0 : index
    %c0_74 = arith.constant 0 : index
    %107 = vector.load %arg4[%c0_72, %c12, %c0_73, %c0_74] : memref<1x16x16x256xbf16, #tpu.memory_space<vmem>>, vector<1x1x16x256xbf16>
    %108 = vector.shape_cast %107 : vector<1x1x16x256xbf16> to vector<16x256xbf16>
    %109 = vector.shape_cast %106 : vector<16x256xbf16> to vector<1x1x16x256xbf16>
    tpu.vector_store %arg4[%c0_72, %c12, %c0_73, %c0_74], %109 {strides = array<i32>} : memref<1x16x16x256xbf16, #tpu.memory_space<vmem>>, vector<1x1x16x256xbf16>,
    %110 = vector.extract_strided_slice %44 {offsets = [234, 0], sizes = [16, 256], strides = [1, 1]} : vector<288x256xf32> to vector<16x256xf32>
    %111 = arith.truncf %110 : vector<16x256xf32> to vector<16x256xbf16>
    %c0_75 = arith.constant 0 : index
    %c13 = arith.constant 13 : index
    %c0_76 = arith.constant 0 : index
    %c0_77 = arith.constant 0 : index
    %112 = vector.load %arg4[%c0_75, %c13, %c0_76, %c0_77] : memref<1x16x16x256xbf16, #tpu.memory_space<vmem>>, vector<1x1x16x256xbf16>
    %113 = vector.shape_cast %112 : vector<1x1x16x256xbf16> to vector<16x256xbf16>
    %114 = vector.shape_cast %111 : vector<16x256xbf16> to vector<1x1x16x256xbf16>
    tpu.vector_store %arg4[%c0_75, %c13, %c0_76, %c0_77], %114 {strides = array<i32>} : memref<1x16x16x256xbf16, #tpu.memory_space<vmem>>, vector<1x1x16x256xbf16>,
    %115 = vector.extract_strided_slice %44 {offsets = [252, 0], sizes = [16, 256], strides = [1, 1]} : vector<288x256xf32> to vector<16x256xf32>
    %116 = arith.truncf %115 : vector<16x256xf32> to vector<16x256xbf16>
    %c0_78 = arith.constant 0 : index
    %c14 = arith.constant 14 : index
    %c0_79 = arith.constant 0 : index
    %c0_80 = arith.constant 0 : index
    %117 = vector.load %arg4[%c0_78, %c14, %c0_79, %c0_80] : memref<1x16x16x256xbf16, #tpu.memory_space<vmem>>, vector<1x1x16x256xbf16>
    %118 = vector.shape_cast %117 : vector<1x1x16x256xbf16> to vector<16x256xbf16>
    %119 = vector.shape_cast %116 : vector<16x256xbf16> to vector<1x1x16x256xbf16>
    tpu.vector_store %arg4[%c0_78, %c14, %c0_79, %c0_80], %119 {strides = array<i32>} : memref<1x16x16x256xbf16, #tpu.memory_space<vmem>>, vector<1x1x16x256xbf16>,
    %120 = vector.extract_strided_slice %44 {offsets = [270, 0], sizes = [16, 256], strides = [1, 1]} : vector<288x256xf32> to vector<16x256xf32>
    %121 = arith.truncf %120 : vector<16x256xf32> to vector<16x256xbf16>
    %c0_81 = arith.constant 0 : index
    %c15 = arith.constant 15 : index
    %c0_82 = arith.constant 0 : index
    %c0_83 = arith.constant 0 : index
    %122 = vector.load %arg4[%c0_81, %c15, %c0_82, %c0_83] : memref<1x16x16x256xbf16, #tpu.memory_space<vmem>>, vector<1x1x16x256xbf16>
    %123 = vector.shape_cast %122 : vector<1x1x16x256xbf16> to vector<16x256xbf16>
    %124 = vector.shape_cast %121 : vector<16x256xbf16> to vector<1x1x16x256xbf16>
    tpu.vector_store %arg4[%c0_81, %c15, %c0_82, %c0_83], %124 {strides = array<i32>} : memref<1x16x16x256xbf16, #tpu.memory_space<vmem>>, vector<1x1x16x256xbf16>,
    return
  }
  func.func @transform_0(%arg0: i32) -> (i32, i32, i32) {
    %c0_i32 = arith.constant 0 : i32
    %c0_i32_0 = arith.constant 0 : i32
    %c0_i32_1 = arith.constant 0 : i32
    return %arg0, %c0_i32, %c0_i32_0 : i32, i32, i32
  }
  func.func @transform_1(%arg0: i32) -> (i32, i32) {
    %c0_i32 = arith.constant 0 : i32
    %c0_i32_0 = arith.constant 0 : i32
    %c0_i32_1 = arith.constant 0 : i32
    return %c0_i32, %c0_i32_0 : i32, i32
  }
  func.func @transform_2(%arg0: i32) -> (i32, i32) {
    %c0_i32 = arith.constant 0 : i32
    %c0_i32_0 = arith.constant 0 : i32
    %c0_i32_1 = arith.constant 0 : i32
    return %c0_i32, %c0_i32_0 : i32, i32
  }
  func.func @transform_3(%arg0: i32) -> (i32, i32, i32, i32) {
    %c0_i32 = arith.constant 0 : i32
    %c0_i32_0 = arith.constant 0 : i32
    %c0_i32_1 = arith.constant 0 : i32
    %c0_i32_2 = arith.constant 0 : i32
    return %arg0, %c0_i32, %c0_i32_0, %c0_i32_1 : i32, i32, i32, i32
  }
}

</mosaic_0001>

<llo_original>
// kernel: tpu_custom_call.1
$region0: #{tpu_custom_call.1}
  #allocation0 [shape = 'u32[]', space=smem, size = 0x4, offset = 0x4, fixed_abs, tag = 'smem constant byte address 0x4 - core index']
  #allocation1 [shape = 'u32[144,128]{1,0:T(1,128)}', space=vmem, size = 0x12000, scoped, tag = 'internal scratch']
  #allocation2 [shape = 'f32[342,128]{1,0:T(8,128)}', space=vmem, size = 0x2b000, scoped, tag = 'scratch operand']
  #allocation3 [shape = 'bf16[288,1152]{1,0:T(16,128)(2,1)}', space=vmem, size = 0xa2000, scoped, tag = 'scratch operand']
  %s0 = inlined_call_operand.vmem [shape: bf16[2,342,128], index: 0, kind: input, shape index: {}]
  %s1 = inlined_call_operand.hbm [shape: bf16[1152,256], index: 1, kind: input, shape index: {}]
  %s2 = inlined_call_operand.vmem [shape: f32[1,256], index: 2, kind: input, shape index: {}]
  %s3 = inlined_call_operand.hbm [shape: bf16[2,16,16,256], index: 3, kind: output, shape index: {}]
  %s4 = sld [smem:[#allocation0]]
  $region49: #{tpu_custom_call.1} parent=0
    _
  %s6 = ssub.s32 1, %s4
  %s7 = scalar_select 0, %s6, %s4
  $region1: #{tpu_custom_call.1} parent=0
    #allocation4 [shape = 'u8[589824]{0}', space=vmem, size = 0x90000, scoped, tag = 'input window, operand 1, single buffered']
    #allocation5 [shape = 's32[2]{0}', space=sflag, size = 0x8, scoped, tag = 'scoped memory for tpu_custom_call.1']
    #allocation6 [shape = 's32[2]{0}', space=sflag, size = 0x8, scoped, tag = 'scoped memory for tpu_custom_call.1']
    #allocation7 [shape = 'u8[262144]{0}', space=vmem, size = 0x40000, scoped, tag = 'output window, operand 0']
    %8 = vsyncpa [#allocation5], 0
    %9 = vsyncpa [#allocation6], 0
    %s10 = scalar_lea.sflag [#allocation6], 1
    %11 = vsyncpa %s10, 0
    loop: start=0, step=1, limit=4
    $region2: #{tpu_custom_call.1} parent=1 // loop_pre_header
      _
    $region3: #{tpu_custom_call.1} parent=1 // loop_header
      %s13 = sphi 0, %s17
      %p14 = scmp.ge.s32.totalorder %s13, 4
      %s23 = sphi 0, %s25
      %s26 = sphi 0, %s23
      %s27 = sphi 0, %s26
      %s43 = sphi 0, %s27
      %s47 = sphi 0, %s47
      %s49 = sphi 0, %s47
      %s50 = sphi 0, %s49
      %s64 = sphi 0, %s50
      %s68 = sphi 0, %s68
      %s70 = sphi 0, %s68
      %s71 = sphi 0, %s70
      %s85 = sphi 0, %s71
      %s91 = sphi 0, %s93
      %s94 = sphi 0, %s91
      %s95 = sphi 0, %s94
      %s111 = sphi 0, %s95
    $region4: #{tpu_custom_call.1} parent=1 // loop_header_branch
      %16 = sbr.rel (%p14) target = $region8
    $region5: #{tpu_custom_call.1} parent=1 // loop_body
      %s18 = ssub.s32 %s13, 1
      %s19 = ssub.s32 %s13, 2
      %s20 = sadd.s32 %s13, 1
      %s21 = ssub.s32 %s13, %s20
      %p22 = scmp.eq.s32.totalorder %s21, 0
      %s24 = sadd.s32 %s23, 1
      %s25 = scalar_select %p22, %s23, %s24
      %p28 = pneg %p22
      %p29 = scmp.eq.s32.totalorder %s13, 1
      %p30 = por %p28, %p29
      %p31 = scmp.ne.s32.totalorder %s23, %s26
      %p32 = scmp.eq.s32.totalorder %s13, 0
      %p33 = por %p31, %p32
      %p34 = scmp.ne.s32.totalorder %s23, %s26
      %p35 = scmp.eq.s32.totalorder %s18, 1
      %p36 = por %p34, %p35
      %p37 = scmp.ne.s32.totalorder %s26, %s27
      %p38 = scmp.eq.s32.totalorder %s18, 0
      %p39 = por %p37, %p38
      %p40 = scmp.ne.s32.totalorder %s26, %s27
      %p41 = scmp.eq.s32.totalorder %s19, 1
      %p42 = por %p40, %p41
      %p44 = scmp.ne.s32.totalorder %s27, %s43
      %p45 = scmp.eq.s32.totalorder %s19, 0
      %p46 = por %p44, %p45
      %s48 = sadd.s32 %s47, 1
      %p51 = scmp.eq.s32.totalorder %s13, 1
      %p52 = scmp.ne.s32.totalorder %s47, %s49
      %p53 = scmp.eq.s32.totalorder %s13, 0
      %p54 = por %p52, %p53
      %p55 = scmp.ne.s32.totalorder %s47, %s49
      %p56 = scmp.eq.s32.totalorder %s18, 1
      %p57 = por %p55, %p56
      %p58 = scmp.ne.s32.totalorder %s49, %s50
      %p59 = scmp.eq.s32.totalorder %s18, 0
      %p60 = por %p58, %p59
      %p61 = scmp.ne.s32.totalorder %s49, %s50
      %p62 = scmp.eq.s32.totalorder %s19, 1
      %p63 = por %p61, %p62
      %p65 = scmp.ne.s32.totalorder %s50, %s64
      %p66 = scmp.eq.s32.totalorder %s19, 0
      %p67 = por %p65, %p66
      %s69 = sadd.s32 %s68, 1
      %p72 = scmp.eq.s32.totalorder %s13, 1
      %p73 = scmp.ne.s32.totalorder %s68, %s70
      %p74 = scmp.eq.s32.totalorder %s13, 0
      %p75 = por %p73, %p74
      %p76 = scmp.ne.s32.totalorder %s68, %s70
      %p77 = scmp.eq.s32.totalorder %s18, 1
      %p78 = por %p76, %p77
      %p79 = scmp.ne.s32.totalorder %s70, %s71
      %p80 = scmp.eq.s32.totalorder %s18, 0
      %p81 = por %p79, %p80
      %p82 = scmp.ne.s32.totalorder %s70, %s71
      %p83 = scmp.eq.s32.totalorder %s19, 1
      %p84 = por %p82, %p83
      %p86 = scmp.ne.s32.totalorder %s71, %s85
      %p87 = scmp.eq.s32.totalorder %s19, 0
      %p88 = por %p86, %p87
      %s89 = ssub.s32 %s13, %s20
      %p90 = scmp.eq.s32.totalorder %s89, 0
      %s92 = sadd.s32 %s91, 1
      %s93 = scalar_select %p90, %s91, %s92
      %p96 = pneg %p90
      %p97 = scmp.eq.s32.totalorder %s13, 1
      %p98 = por %p96, %p97
      %p99 = scmp.ne.s32.totalorder %s91, %s94
      %p100 = scmp.eq.s32.totalorder %s13, 0
      %p101 = por %p99, %p100
      %p102 = scmp.ne.s32.totalorder %s91, %s94
      %p103 = scmp.eq.s32.totalorder %s18, 1
      %p104 = por %p102, %p103
      %p105 = scmp.ne.s32.totalorder %s94, %s95
      %p106 = scmp.eq.s32.totalorder %s18, 0
      %p107 = por %p105, %p106
      %p108 = scmp.ne.s32.totalorder %s94, %s95
      %p109 = scmp.eq.s32.totalorder %s19, 1
      %p110 = por %p108, %p109
      %p112 = scmp.ne.s32.totalorder %s95, %s111
      %p113 = scmp.eq.s32.totalorder %s19, 0
      %p114 = por %p112, %p113
      %p115 = scmp.le.s32.totalorder 1, %s13
      %p116 = scmp.lt.s32.totalorder %s13, 3
      %p117 = pnand %p115, %p116
      %p118 = pneg %p117
      // Predicated region
      $region9: #{tpu_custom_call.1} parent=5 // pred_check
        _
      $region10: #{tpu_custom_call.1} parent=5 // pred_check_branch
        %120 = sbr.rel (%p117) target = $region12
      $region11: #{tpu_custom_call.1} parent=5 // pred_region
        %s121 = ssub.s32 %s13, 1
        // Predicated region
        $region13: #{tpu_custom_call.1} parent=11 // pred_check
          %p122 = pneg %p60
        $region14: #{tpu_custom_call.1} parent=11 // pred_check_branch
          %124 = sbr.rel (%p122) target = $region16
        $region15: #{tpu_custom_call.1} parent=11 // pred_region
          %s126 = ssub.s32 18432, 18432
          %127 = vsyncadd [#allocation5], %s126
          %s128 = sshll.u32 [#allocation4], 4
          %s129 = int_to_ptr.vmem [resolvable:$true] %s128
          %134 = dma.hbm_to_vmem [thread:$0]  %s1, 18432, %s129, [#allocation5], 128, 128, 8
        $region16: #{tpu_custom_call.1} parent=11 // pred_fallthru
          _
        // Predicated region
        $region17: #{tpu_custom_call.1} parent=11 // pred_check
          %p135 = pneg %p81
        $region18: #{tpu_custom_call.1} parent=11 // pred_check_branch
          %137 = sbr.rel (%p135) target = $region20
        $region19: #{tpu_custom_call.1} parent=11 // pred_region
          _
        $region20: #{tpu_custom_call.1} parent=11 // pred_fallthru
          _
      $region12: #{tpu_custom_call.1} parent=5 // pred_fallthru
        _
      %p138 = scmp.lt.s32.totalorder %s13, 2
      // Predicated region
      $region21: #{tpu_custom_call.1} parent=5 // pred_check
        %p139 = pneg %p138
      $region22: #{tpu_custom_call.1} parent=5 // pred_check_branch
        %141 = sbr.rel (%p139) target = $region24
      $region23: #{tpu_custom_call.1} parent=5 // pred_region
        // Predicated region
        $region25: #{tpu_custom_call.1} parent=23 // pred_check
          %p142 = pneg %p33
        $region26: #{tpu_custom_call.1} parent=23 // pred_check_branch
          %144 = sbr.rel (%p142) target = $region28
        $region27: #{tpu_custom_call.1} parent=23 // pred_region
          %p145 = scmp.lt.s32.totalorder %s13, 1
          %s146 = scalar_select %p145, %s13, 1
          %s147 = smul.addr %s146, 43
          %s148 = smul.addr %s147, 4
          %s149 = scalar_lea.vmem %s0, %s148
        $region28: #{tpu_custom_call.1} parent=23 // pred_fallthru
          _
      $region24: #{tpu_custom_call.1} parent=5 // pred_fallthru
        _
      %p150 = scmp.le.s32.totalorder 1, %s13
      %p151 = scmp.lt.s32.totalorder %s13, 3
      %p152 = pnand %p150, %p151
      %p153 = pneg %p152
      // Predicated region
      $region29: #{tpu_custom_call.1} parent=5 // pred_check
        _
      $region30: #{tpu_custom_call.1} parent=5 // pred_check_branch
        %155 = sbr.rel (%p152) target = $region32
      $region31: #{tpu_custom_call.1} parent=5 // pred_region
        %s156 = ssub.s32 %s13, 1
        // Predicated region
        $region33: #{tpu_custom_call.1} parent=31 // pred_check
          %p157 = pneg %p60
        $region34: #{tpu_custom_call.1} parent=31 // pred_check_branch
          %159 = sbr.rel (%p157) target = $region36
        $region35: #{tpu_custom_call.1} parent=31 // pred_region
          %160 = dma.done [#allocation5], 18432
        $region36: #{tpu_custom_call.1} parent=31 // pred_fallthru
          _
        %p161 = scmp.lt.s32.totalorder %s18, 1
        %s162 = scalar_select %p161, %s18, 1
        %s163 = smul.addr %s162, 43
        %s164 = smul.addr %s163, 4
        %s165 = scalar_lea.vmem %s0, %s164
        %p166 = pneg %p39
        %p167 = pneg %p36
        %p168 = pneg %p60
        %p169 = pneg %p57
        %p170 = pneg %p81
        %p171 = pneg %p78
        %p172 = pneg %p107
        %p173 = pneg %p104
        %s174 = sand.u32 %s94, 1
        %s175 = scalar_lea.sflag [#allocation6], %s174
        %s176 = sand.u32 %s94, 1
        %s177 = smul.addr %s176, 256
        %s178 = scalar_lea.vmem [#allocation7], %s177
        %p179 = scmp.lt.s32.totalorder %s18, 1
        %s180 = scalar_select %p179, %s18, 1
        %s181 = smul.addr %s180, 43
        %s182 = smul.addr %s181, 4
        %s183 = scalar_lea.vmem %s0, %s182
        %v185 = vld [vmem:[%s183] sm:$0xf]
        %v186 = vld [vmem:[%s183 + $0x4] sm:$0xf]
        %v187 = vld [vmem:[%s183 + $0x8] sm:$0xf]
        %v188 = vld [vmem:[%s183 + $0xc] sm:$0xf]
        %v189 = vld [vmem:[%s183 + $0x10] sm:$0xf]
        %v190 = vld [vmem:[%s183 + $0x14] sm:$0xf]
        %v191 = vld [vmem:[%s183 + $0x18] sm:$0xf]
        %v192 = vld [vmem:[%s183 + $0x1c] sm:$0xf]
        %v193 = vld [vmem:[%s183 + $0x20] sm:$0xf]
        %v194 = vld [vmem:[%s183 + $0x24] sm:$0xf]
        %v195 = vld [vmem:[%s183 + $0x28] sm:$0xf]
        %v196 = vld [vmem:[%s183 + $0x2c] sm:$0xf]
        %v197 = vld [vmem:[%s183 + $0x30] sm:$0xf]
        %v198 = vld [vmem:[%s183 + $0x34] sm:$0xf]
        %v199 = vld [vmem:[%s183 + $0x38] sm:$0xf]
        %v200 = vld [vmem:[%s183 + $0x3c] sm:$0xf]
        %v201 = vld [vmem:[%s183 + $0x40] sm:$0xf]
        %v202 = vld [vmem:[%s183 + $0x44] sm:$0xf]
        %v203 = vld [vmem:[%s183 + $0x48] sm:$0xf]
        %v204 = vld [vmem:[%s183 + $0x4c] sm:$0xf]
        %v205 = vld [vmem:[%s183 + $0x50] sm:$0xf]
        %v206 = vld [vmem:[%s183 + $0x54] sm:$0xf]
        %v207 = vld [vmem:[%s183 + $0x58] sm:$0xf]
        %v208 = vld [vmem:[%s183 + $0x5c] sm:$0xf]
        %v209 = vld [vmem:[%s183 + $0x60] sm:$0xf]
        %v210 = vld [vmem:[%s183 + $0x64] sm:$0xf]
        %v211 = vld [vmem:[%s183 + $0x68] sm:$0xf]
        %v212 = vld [vmem:[%s183 + $0x6c] sm:$0xf]
        %v213 = vld [vmem:[%s183 + $0x70] sm:$0xf]
        %v214 = vld [vmem:[%s183 + $0x74] sm:$0xf]
        %v215 = vld [vmem:[%s183 + $0x78] sm:$0xf]
        %v216 = vld [vmem:[%s183 + $0x7c] sm:$0xf]
        %v217 = vld [vmem:[%s183 + $0x80] sm:$0xf]
        %v218 = vld [vmem:[%s183 + $0x84] sm:$0xf]
        %v219 = vld [vmem:[%s183 + $0x88] sm:$0xf]
        %v220 = vld [vmem:[%s183 + $0x8c] sm:$0xf]
        %v221 = vld [vmem:[%s183 + $0x90] sm:$0xf]
        %v222 = vld [vmem:[%s183 + $0x94] sm:$0xf]
        %v223 = vld [vmem:[%s183 + $0x98] sm:$0xf]
        %v224 = vld [vmem:[%s183 + $0x9c] sm:$0xf]
        %v225 = vld [vmem:[%s183 + $0xa0] sm:$0xf]
        %v226 = vld [vmem:[%s183 + $0xa4] sm:$0xf]
        %v227 = vld [vmem:[%s183 + $0xa8] sm:$0x7]
        %v228 = vunpack.c.l.bf16 %v185
        %v229 = vunpack.c.l.bf16 %v186
        %v230 = vunpack.c.l.bf16 %v187
        %v231 = vunpack.c.l.bf16 %v188
        %v232 = vunpack.c.l.bf16 %v189
        %v233 = vunpack.c.l.bf16 %v190
        %v234 = vunpack.c.l.bf16 %v191
        %v235 = vunpack.c.l.bf16 %v192
        %v236 = vunpack.c.l.bf16 %v193
        %v237 = vunpack.c.l.bf16 %v194
        %v238 = vunpack.c.l.bf16 %v195
        %v239 = vunpack.c.l.bf16 %v196
        %v240 = vunpack.c.l.bf16 %v197
        %v241 = vunpack.c.l.bf16 %v198
        %v242 = vunpack.c.l.bf16 %v199
        %v243 = vunpack.c.l.bf16 %v200
        %v244 = vunpack.c.l.bf16 %v201
        %v245 = vunpack.c.l.bf16 %v202
        %v246 = vunpack.c.l.bf16 %v203
        %v247 = vunpack.c.l.bf16 %v204
        %v248 = vunpack.c.l.bf16 %v205
        %v249 = vunpack.c.l.bf16 %v206
        %v250 = vunpack.c.l.bf16 %v207
        %v251 = vunpack.c.l.bf16 %v208
        %v252 = vunpack.c.l.bf16 %v209
        %v253 = vunpack.c.l.bf16 %v210
        %v254 = vunpack.c.l.bf16 %v211
        %v255 = vunpack.c.l.bf16 %v212
        %v256 = vunpack.c.l.bf16 %v213
        %v257 = vunpack.c.l.bf16 %v214
        %v258 = vunpack.c.l.bf16 %v215
        %v259 = vunpack.c.l.bf16 %v216
        %v260 = vunpack.c.l.bf16 %v217
        %v261 = vunpack.c.l.bf16 %v218
        %v262 = vunpack.c.l.bf16 %v219
        %v263 = vunpack.c.l.bf16 %v220
        %v264 = vunpack.c.l.bf16 %v221
        %v265 = vunpack.c.l.bf16 %v222
        %v266 = vunpack.c.l.bf16 %v223
        %v267 = vunpack.c.l.bf16 %v224
        %v268 = vunpack.c.l.bf16 %v225
        %v269 = vunpack.c.l.bf16 %v226
        %v270 = vunpack.c.l.bf16 %v227
        %271 = vst [vmem:[#allocation2] sm:$0xff] %v228
        %272 = vst [vmem:[#allocation2 + $0x8] sm:$0xff] %v229
        %273 = vst [vmem:[#allocation2 + $0x10] sm:$0xff] %v230
        %274 = vst [vmem:[#allocation2 + $0x18] sm:$0xff] %v231
        %275 = vst [vmem:[#allocation2 + $0x20] sm:$0xff] %v232
        %276 = vst [vmem:[#allocation2 + $0x28] sm:$0xff] %v233
        %277 = vst [vmem:[#allocation2 + $0x30] sm:$0xff] %v234
        %278 = vst [vmem:[#allocation2 + $0x38] sm:$0xff] %v235
        %279 = vst [vmem:[#allocation2 + $0x40] sm:$0xff] %v236
        %280 = vst [vmem:[#allocation2 + $0x48] sm:$0xff] %v237
        %281 = vst [vmem:[#allocation2 + $0x50] sm:$0xff] %v238
        %282 = vst [vmem:[#allocation2 + $0x58] sm:$0xff] %v239
        %283 = vst [vmem:[#allocation2 + $0x60] sm:$0xff] %v240
        %284 = vst [vmem:[#allocation2 + $0x68] sm:$0xff] %v241
        %285 = vst [vmem:[#allocation2 + $0x70] sm:$0xff] %v242
        %286 = vst [vmem:[#allocation2 + $0x78] sm:$0xff] %v243
        %287 = vst [vmem:[#allocation2 + $0x80] sm:$0xff] %v244
        %288 = vst [vmem:[#allocation2 + $0x88] sm:$0xff] %v245
        %289 = vst [vmem:[#allocation2 + $0x90] sm:$0xff] %v246
        %290 = vst [vmem:[#allocation2 + $0x98] sm:$0xff] %v247
        %291 = vst [vmem:[#allocation2 + $0xa0] sm:$0xff] %v248
        %292 = vst [vmem:[#allocation2 + $0xa8] sm:$0xff] %v249
        %293 = vst [vmem:[#allocation2 + $0xb0] sm:$0xff] %v250
        %294 = vst [vmem:[#allocation2 + $0xb8] sm:$0xff] %v251
        %295 = vst [vmem:[#allocation2 + $0xc0] sm:$0xff] %v252
        %296 = vst [vmem:[#allocation2 + $0xc8] sm:$0xff] %v253
        %297 = vst [vmem:[#allocation2 + $0xd0] sm:$0xff] %v254
        %298 = vst [vmem:[#allocation2 + $0xd8] sm:$0xff] %v255
        %299 = vst [vmem:[#allocation2 + $0xe0] sm:$0xff] %v256
        %300 = vst [vmem:[#allocation2 + $0xe8] sm:$0xff] %v257
        %301 = vst [vmem:[#allocation2 + $0xf0] sm:$0xff] %v258
        %302 = vst [vmem:[#allocation2 + $0xf8] sm:$0xff] %v259
        %303 = vst [vmem:[#allocation2 + $0x100] sm:$0xff] %v260
        %304 = vst [vmem:[#allocation2 + $0x108] sm:$0xff] %v261
        %305 = vst [vmem:[#allocation2 + $0x110] sm:$0xff] %v262
        %306 = vst [vmem:[#allocation2 + $0x118] sm:$0xff] %v263
        %307 = vst [vmem:[#allocation2 + $0x120] sm:$0xff] %v264
        %308 = vst [vmem:[#allocation2 + $0x128] sm:$0xff] %v265
        %309 = vst [vmem:[#allocation2 + $0x130] sm:$0xff] %v266
        %310 = vst [vmem:[#allocation2 + $0x138] sm:$0xff] %v267
        %311 = vst [vmem:[#allocation2 + $0x140] sm:$0xff] %v268
        %312 = vst [vmem:[#allocation2 + $0x148] sm:$0xff] %v269
        %313 = vst [vmem:[#allocation2 + $0x150] sm:$0x3f] %v270
        %v314 = vld [vmem:[#allocation2] sm:$0xff]
        %v315 = vld [vmem:[#allocation2 + $0x8] sm:$0xff]
        %v316 = vld [vmem:[#allocation2 + $0x10] sm:$0xff]
        %v317 = vld [vmem:[#allocation2 + $0x18] sm:$0xff]
        %v318 = vld [vmem:[#allocation2 + $0x20] sm:$0xff]
        %v319 = vld [vmem:[#allocation2 + $0x28] sm:$0xff]
        %v320 = vld [vmem:[#allocation2 + $0x30] sm:$0xff]
        %v321 = vld [vmem:[#allocation2 + $0x38] sm:$0xff]
        %v322 = vld [vmem:[#allocation2 + $0x40] sm:$0xff]
        %v323 = vld [vmem:[#allocation2 + $0x48] sm:$0xff]
        %v324 = vld [vmem:[#allocation2 + $0x50] sm:$0xff]
        %v325 = vld [vmem:[#allocation2 + $0x58] sm:$0xff]
        %v326 = vld [vmem:[#allocation2 + $0x60] sm:$0xff]
        %v327 = vld [vmem:[#allocation2 + $0x68] sm:$0xff]
        %v328 = vld [vmem:[#allocation2 + $0x70] sm:$0xff]
        %v329 = vld [vmem:[#allocation2 + $0x78] sm:$0xff]
        %v330 = vld [vmem:[#allocation2 + $0x80] sm:$0xff]
        %v331 = vld [vmem:[#allocation2 + $0x88] sm:$0xff]
        %v332 = vld [vmem:[#allocation2 + $0x90] sm:$0xff]
        %v333 = vld [vmem:[#allocation2 + $0x98] sm:$0xff]
        %v334 = vld [vmem:[#allocation2 + $0xa0] sm:$0xff]
        %v335 = vld [vmem:[#allocation2 + $0xa8] sm:$0xff]
        %v336 = vld [vmem:[#allocation2 + $0xb0] sm:$0xff]
        %v337 = vld [vmem:[#allocation2 + $0xb8] sm:$0xff]
        %v338 = vld [vmem:[#allocation2 + $0xc0] sm:$0xff]
        %v339 = vld [vmem:[#allocation2 + $0xc8] sm:$0xff]
        %v340 = vld [vmem:[#allocation2 + $0xd0] sm:$0xff]
        %v341 = vld [vmem:[#allocation2 + $0xd8] sm:$0xff]
        %v342 = vld [vmem:[#allocation2 + $0xe0] sm:$0xff]
        %v343 = vld [vmem:[#allocation2 + $0xe8] sm:$0xff]
        %v344 = vld [vmem:[#allocation2 + $0xf0] sm:$0xff]
        %v345 = vld [vmem:[#allocation2 + $0xf8] sm:$0xff]
        %v346 = vld [vmem:[#allocation2 + $0x100] sm:$0xff]
        %v347 = vld [vmem:[#allocation2 + $0x108] sm:$0xff]
        %v348 = vld [vmem:[#allocation2 + $0x110] sm:$0xff]
        %v349 = vld [vmem:[#allocation2 + $0x118] sm:$0xff]
        %v350 = vpack.c.bf16 %v315, %v314
        %v351 = vpack.c.bf16 %v317, %v316
        %v352 = vpack.c.bf16 %v319, %v318
        %v353 = vpack.c.bf16 %v321, %v320
        %v354 = vpack.c.bf16 %v323, %v322
        %v355 = vpack.c.bf16 %v325, %v324
        %v356 = vpack.c.bf16 %v327, %v326
        %v357 = vpack.c.bf16 %v329, %v328
        %v358 = vpack.c.bf16 %v331, %v330
        %v359 = vpack.c.bf16 %v333, %v332
        %v360 = vpack.c.bf16 %v335, %v334
        %v361 = vpack.c.bf16 %v337, %v336
        %v362 = vpack.c.bf16 %v339, %v338
        %v363 = vpack.c.bf16 %v341, %v340
        %v364 = vpack.c.bf16 %v343, %v342
        %v365 = vpack.c.bf16 %v345, %v344
        %v366 = vpack.c.bf16 %v347, %v346
        %v367 = vpack.c.bf16 %v349, %v348
        %368 = vst [vmem:[#allocation3] sm:$0xff] %v350
        %369 = vst [vmem:[#allocation3 + $0x48] sm:$0xff] %v351
        %370 = vst [vmem:[#allocation3 + $0x90] sm:$0xff] %v352
        %371 = vst [vmem:[#allocation3 + $0xd8] sm:$0xff] %v353
        %372 = vst [vmem:[#allocation3 + $0x120] sm:$0xff] %v354
        %373 = vst [vmem:[#allocation3 + $0x168] sm:$0xff] %v355
        %374 = vst [vmem:[#allocation3 + $0x1b0] sm:$0xff] %v356
        %375 = vst [vmem:[#allocation3 + $0x1f8] sm:$0xff] %v357
        %376 = vst [vmem:[#allocation3 + $0x240] sm:$0xff] %v358
        %377 = vst [vmem:[#allocation3 + $0x288] sm:$0xff] %v359
        %378 = vst [vmem:[#allocation3 + $0x2d0] sm:$0xff] %v360
        %379 = vst [vmem:[#allocation3 + $0x318] sm:$0xff] %v361
        %380 = vst [vmem:[#allocation3 + $0x360] sm:$0xff] %v362
        %381 = vst [vmem:[#allocation3 + $0x3a8] sm:$0xff] %v363
        %382 = vst [vmem:[#allocation3 + $0x3f0] sm:$0xff] %v364
        %383 = vst [vmem:[#allocation3 + $0x438] sm:$0xff] %v365
        %384 = vst [vmem:[#allocation3 + $0x480] sm:$0xff] %v366
        %385 = vst [vmem:[#allocation3 + $0x4c8] sm:$0xff] %v367
        %v386 = vld [vmem:[#allocation2 + $0x1] sm:$0xff]
        %v387 = vld [vmem:[#allocation2 + $0x9] sm:$0xff]
        %v388 = vld [vmem:[#allocation2 + $0x11] sm:$0xff]
        %v389 = vld [vmem:[#allocation2 + $0x19] sm:$0xff]
        %v390 = vld [vmem:[#allocation2 + $0x21] sm:$0xff]
        %v391 = vld [vmem:[#allocation2 + $0x29] sm:$0xff]
        %v392 = vld [vmem:[#allocation2 + $0x31] sm:$0xff]
        %v393 = vld [vmem:[#allocation2 + $0x39] sm:$0xff]
        %v394 = vld [vmem:[#allocation2 + $0x41] sm:$0xff]
        %v395 = vld [vmem:[#allocation2 + $0x49] sm:$0xff]
        %v396 = vld [vmem:[#allocation2 + $0x51] sm:$0xff]
        %v397 = vld [vmem:[#allocation2 + $0x59] sm:$0xff]
        %v398 = vld [vmem:[#allocation2 + $0x61] sm:$0xff]
        %v399 = vld [vmem:[#allocation2 + $0x69] sm:$0xff]
        %v400 = vld [vmem:[#allocation2 + $0x71] sm:$0xff]
        %v401 = vld [vmem:[#allocation2 + $0x79] sm:$0xff]
        %v402 = vld [vmem:[#allocation2 + $0x81] sm:$0xff]
        %v403 = vld [vmem:[#allocation2 + $0x89] sm:$0xff]
        %v404 = vld [vmem:[#allocation2 + $0x91] sm:$0xff]
        %v405 = vld [vmem:[#allocation2 + $0x99] sm:$0xff]
        %v406 = vld [vmem:[#allocation2 + $0xa1] sm:$0xff]
        %v407 = vld [vmem:[#allocation2 + $0xa9] sm:$0xff]
        %v408 = vld [vmem:[#allocation2 + $0xb1] sm:$0xff]
        %v409 = vld [vmem:[#allocation2 + $0xb9] sm:$0xff]
        %v410 = vld [vmem:[#allocation2 + $0xc1] sm:$0xff]
        %v411 = vld [vmem:[#allocation2 + $0xc9] sm:$0xff]
        %v412 = vld [vmem:[#allocation2 + $0xd1] sm:$0xff]
        %v413 = vld [vmem:[#allocation2 + $0xd9] sm:$0xff]
        %v414 = vld [vmem:[#allocation2 + $0xe1] sm:$0xff]
        %v415 = vld [vmem:[#allocation2 + $0xe9] sm:$0xff]
        %v416 = vld [vmem:[#allocation2 + $0xf1] sm:$0xff]
        %v417 = vld [vmem:[#allocation2 + $0xf9] sm:$0xff]
        %v418 = vld [vmem:[#allocation2 + $0x101] sm:$0xff]
        %v419 = vld [vmem:[#allocation2 + $0x109] sm:$0xff]
        %v420 = vld [vmem:[#allocation2 + $0x111] sm:$0xff]
        %v421 = vld [vmem:[#allocation2 + $0x119] sm:$0xff]
        %v422 = vpack.c.bf16 %v387, %v386
        %v423 = vpack.c.bf16 %v389, %v388
        %v424 = vpack.c.bf16 %v391, %v390
        %v425 = vpack.c.bf16 %v393, %v392
        %v426 = vpack.c.bf16 %v395, %v394
        %v427 = vpack.c.bf16 %v397, %v396
        %v428 = vpack.c.bf16 %v399, %v398
        %v429 = vpack.c.bf16 %v401, %v400
        %v430 = vpack.c.bf16 %v403, %v402
        %v431 = vpack.c.bf16 %v405, %v404
        %v432 = vpack.c.bf16 %v407, %v406
        %v433 = vpack.c.bf16 %v409, %v408
        %v434 = vpack.c.bf16 %v411, %v410
        %v435 = vpack.c.bf16 %v413, %v412
        %v436 = vpack.c.bf16 %v415, %v414
        %v437 = vpack.c.bf16 %v417, %v416
        %v438 = vpack.c.bf16 %v419, %v418
        %v439 = vpack.c.bf16 %v421, %v420
        %440 = vst [vmem:[#allocation3 + $0x8] sm:$0xff] %v422
        %441 = vst [vmem:[#allocation3 + $0x50] sm:$0xff] %v423
        %442 = vst [vmem:[#allocation3 + $0x98] sm:$0xff] %v424
        %443 = vst [vmem:[#allocation3 + $0xe0] sm:$0xff] %v425
        %444 = vst [vmem:[#allocation3 + $0x128] sm:$0xff] %v426
        %445 = vst [vmem:[#allocation3 + $0x170] sm:$0xff] %v427
        %446 = vst [vmem:[#allocation3 + $0x1b8] sm:$0xff] %v428
        %447 = vst [vmem:[#allocation3 + $0x200] sm:$0xff] %v429
        %448 = vst [vmem:[#allocation3 + $0x248] sm:$0xff] %v430
        %449 = vst [vmem:[#allocation3 + $0x290] sm:$0xff] %v431
        %450 = vst [vmem:[#allocation3 + $0x2d8] sm:$0xff] %v432
        %451 = vst [vmem:[#allocation3 + $0x320] sm:$0xff] %v433
        %452 = vst [vmem:[#allocation3 + $0x368] sm:$0xff] %v434
        %453 = vst [vmem:[#allocation3 + $0x3b0] sm:$0xff] %v435
        %454 = vst [vmem:[#allocation3 + $0x3f8] sm:$0xff] %v436
        %455 = vst [vmem:[#allocation3 + $0x440] sm:$0xff] %v437
        %456 = vst [vmem:[#allocation3 + $0x488] sm:$0xff] %v438
        %457 = vst [vmem:[#allocation3 + $0x4d0] sm:$0xff] %v439
        %v458 = vld [vmem:[#allocation2 + $0x2] sm:$0xff]
        %v459 = vld [vmem:[#allocation2 + $0xa] sm:$0xff]
        %v460 = vld [vmem:[#allocation2 + $0x12] sm:$0xff]
        %v461 = vld [vmem:[#allocation2 + $0x1a] sm:$0xff]
        %v462 = vld [vmem:[#allocation2 + $0x22] sm:$0xff]
        %v463 = vld [vmem:[#allocation2 + $0x2a] sm:$0xff]
        %v464 = vld [vmem:[#allocation2 + $0x32] sm:$0xff]
        %v465 = vld [vmem:[#allocation2 + $0x3a] sm:$0xff]
        %v466 = vld [vmem:[#allocation2 + $0x42] sm:$0xff]
        %v467 = vld [vmem:[#allocation2 + $0x4a] sm:$0xff]
        %v468 = vld [vmem:[#allocation2 + $0x52] sm:$0xff]
        %v469 = vld [vmem:[#allocation2 + $0x5a] sm:$0xff]
        %v470 = vld [vmem:[#allocation2 + $0x62] sm:$0xff]
        %v471 = vld [vmem:[#allocation2 + $0x6a] sm:$0xff]
        %v472 = vld [vmem:[#allocation2 + $0x72] sm:$0xff]
        %v473 = vld [vmem:[#allocation2 + $0x7a] sm:$0xff]
        %v474 = vld [vmem:[#allocation2 + $0x82] sm:$0xff]
        %v475 = vld [vmem:[#allocation2 + $0x8a] sm:$0xff]
        %v476 = vld [vmem:[#allocation2 + $0x92] sm:$0xff]
        %v477 = vld [vmem:[#allocation2 + $0x9a] sm:$0xff]
        %v478 = vld [vmem:[#allocation2 + $0xa2] sm:$0xff]
        %v479 = vld [vmem:[#allocation2 + $0xaa] sm:$0xff]
        %v480 = vld [vmem:[#allocation2 + $0xb2] sm:$0xff]
        %v481 = vld [vmem:[#allocation2 + $0xba] sm:$0xff]
        %v482 = vld [vmem:[#allocation2 + $0xc2] sm:$0xff]
        %v483 = vld [vmem:[#allocation2 + $0xca] sm:$0xff]
        %v484 = vld [vmem:[#allocation2 + $0xd2] sm:$0xff]
        %v485 = vld [vmem:[#allocation2 + $0xda] sm:$0xff]
        %v486 = vld [vmem:[#allocation2 + $0xe2] sm:$0xff]
        %v487 = vld [vmem:[#allocation2 + $0xea] sm:$0xff]
        %v488 = vld [vmem:[#allocation2 + $0xf2] sm:$0xff]
        %v489 = vld [vmem:[#allocation2 + $0xfa] sm:$0xff]
        %v490 = vld [vmem:[#allocation2 + $0x102] sm:$0xff]
        %v491 = vld [vmem:[#allocation2 + $0x10a] sm:$0xff]
        %v492 = vld [vmem:[#allocation2 + $0x112] sm:$0xff]
        %v493 = vld [vmem:[#allocation2 + $0x11a] sm:$0xff]
        %v494 = vpack.c.bf16 %v459, %v458
        %v495 = vpack.c.bf16 %v461, %v460
        %v496 = vpack.c.bf16 %v463, %v462
        %v497 = vpack.c.bf16 %v465, %v464
        %v498 = vpack.c.bf16 %v467, %v466
        %v499 = vpack.c.bf16 %v469, %v468
        %v500 = vpack.c.bf16 %v471, %v470
        %v501 = vpack.c.bf16 %v473, %v472
        %v502 = vpack.c.bf16 %v475, %v474
        %v503 = vpack.c.bf16 %v477, %v476
        %v504 = vpack.c.bf16 %v479, %v478
        %v505 = vpack.c.bf16 %v481, %v480
        %v506 = vpack.c.bf16 %v483, %v482
        %v507 = vpack.c.bf16 %v485, %v484
        %v508 = vpack.c.bf16 %v487, %v486
        %v509 = vpack.c.bf16 %v489, %v488
        %v510 = vpack.c.bf16 %v491, %v490
        %v511 = vpack.c.bf16 %v493, %v492
        %512 = vst [vmem:[#allocation3 + $0x10] sm:$0xff] %v494
        %513 = vst [vmem:[#allocation3 + $0x58] sm:$0xff] %v495
        %514 = vst [vmem:[#allocation3 + $0xa0] sm:$0xff] %v496
        %515 = vst [vmem:[#allocation3 + $0xe8] sm:$0xff] %v497
        %516 = vst [vmem:[#allocation3 + $0x130] sm:$0xff] %v498
        %517 = vst [vmem:[#allocation3 + $0x178] sm:$0xff] %v499
        %518 = vst [vmem:[#allocation3 + $0x1c0] sm:$0xff] %v500
        %519 = vst [vmem:[#allocation3 + $0x208] sm:$0xff] %v501
        %520 = vst [vmem:[#allocation3 + $0x250] sm:$0xff] %v502
        %521 = vst [vmem:[#allocation3 + $0x298] sm:$0xff] %v503
        %522 = vst [vmem:[#allocation3 + $0x2e0] sm:$0xff] %v504
        %523 = vst [vmem:[#allocation3 + $0x328] sm:$0xff] %v505
        %524 = vst [vmem:[#allocation3 + $0x370] sm:$0xff] %v506
        %525 = vst [vmem:[#allocation3 + $0x3b8] sm:$0xff] %v507
        %526 = vst [vmem:[#allocation3 + $0x400] sm:$0xff] %v508
        %527 = vst [vmem:[#allocation3 + $0x448] sm:$0xff] %v509
        %528 = vst [vmem:[#allocation3 + $0x490] sm:$0xff] %v510
        %529 = vst [vmem:[#allocation3 + $0x4d8] sm:$0xff] %v511
        %v530 = vld [vmem:[#allocation2 + $0x12] sm:$0xff]
        %v531 = vld [vmem:[#allocation2 + $0x1a] sm:$0xff]
        %v532 = vld [vmem:[#allocation2 + $0x22] sm:$0xff]
        %v533 = vld [vmem:[#allocation2 + $0x2a] sm:$0xff]
        %v534 = vld [vmem:[#allocation2 + $0x32] sm:$0xff]
        %v535 = vld [vmem:[#allocation2 + $0x3a] sm:$0xff]
        %v536 = vld [vmem:[#allocation2 + $0x42] sm:$0xff]
        %v537 = vld [vmem:[#allocation2 + $0x4a] sm:$0xff]
        %v538 = vld [vmem:[#allocation2 + $0x52] sm:$0xff]
        %v539 = vld [vmem:[#allocation2 + $0x5a] sm:$0xff]
        %v540 = vld [vmem:[#allocation2 + $0x62] sm:$0xff]
        %v541 = vld [vmem:[#allocation2 + $0x6a] sm:$0xff]
        %v542 = vld [vmem:[#allocation2 + $0x72] sm:$0xff]
        %v543 = vld [vmem:[#allocation2 + $0x7a] sm:$0xff]
        %v544 = vld [vmem:[#allocation2 + $0x82] sm:$0xff]
        %v545 = vld [vmem:[#allocation2 + $0x8a] sm:$0xff]
        %v546 = vld [vmem:[#allocation2 + $0x92] sm:$0xff]
        %v547 = vld [vmem:[#allocation2 + $0x9a] sm:$0xff]
        %v548 = vld [vmem:[#allocation2 + $0xa2] sm:$0xff]
        %v549 = vld [vmem:[#allocation2 + $0xaa] sm:$0xff]
        %v550 = vld [vmem:[#allocation2 + $0xb2] sm:$0xff]
        %v551 = vld [vmem:[#allocation2 + $0xba] sm:$0xff]
        %v552 = vld [vmem:[#allocation2 + $0xc2] sm:$0xff]
        %v553 = vld [vmem:[#allocation2 + $0xca] sm:$0xff]
        %v554 = vld [vmem:[#allocation2 + $0xd2] sm:$0xff]
        %v555 = vld [vmem:[#allocation2 + $0xda] sm:$0xff]
        %v556 = vld [vmem:[#allocation2 + $0xe2] sm:$0xff]
        %v557 = vld [vmem:[#allocation2 + $0xea] sm:$0xff]
        %v558 = vld [vmem:[#allocation2 + $0xf2] sm:$0xff]
        %v559 = vld [vmem:[#allocation2 + $0xfa] sm:$0xff]
        %v560 = vld [vmem:[#allocation2 + $0x102] sm:$0xff]
        %v561 = vld [vmem:[#allocation2 + $0x10a] sm:$0xff]
        %v562 = vld [vmem:[#allocation2 + $0x112] sm:$0xff]
        %v563 = vld [vmem:[#allocation2 + $0x11a] sm:$0xff]
        %v564 = vld [vmem:[#allocation2 + $0x122] sm:$0xff]
        %v565 = vld [vmem:[#allocation2 + $0x12a] sm:$0xff]
        %v566 = vpack.c.bf16 %v531, %v530
        %v567 = vpack.c.bf16 %v533, %v532
        %v568 = vpack.c.bf16 %v535, %v534
        %v569 = vpack.c.bf16 %v537, %v536
        %v570 = vpack.c.bf16 %v539, %v538
        %v571 = vpack.c.bf16 %v541, %v540
        %v572 = vpack.c.bf16 %v543, %v542
        %v573 = vpack.c.bf16 %v545, %v544
        %v574 = vpack.c.bf16 %v547, %v546
        %v575 = vpack.c.bf16 %v549, %v548
        %v576 = vpack.c.bf16 %v551, %v550
        %v577 = vpack.c.bf16 %v553, %v552
        %v578 = vpack.c.bf16 %v555, %v554
        %v579 = vpack.c.bf16 %v557, %v556
        %v580 = vpack.c.bf16 %v559, %v558
        %v581 = vpack.c.bf16 %v561, %v560
        %v582 = vpack.c.bf16 %v563, %v562
        %v583 = vpack.c.bf16 %v565, %v564
        %584 = vst [vmem:[#allocation3 + $0x18] sm:$0xff] %v566
        %585 = vst [vmem:[#allocation3 + $0x60] sm:$0xff] %v567
        %586 = vst [vmem:[#allocation3 + $0xa8] sm:$0xff] %v568
        %587 = vst [vmem:[#allocation3 + $0xf0] sm:$0xff] %v569
        %588 = vst [vmem:[#allocation3 + $0x138] sm:$0xff] %v570
        %589 = vst [vmem:[#allocation3 + $0x180] sm:$0xff] %v571
        %590 = vst [vmem:[#allocation3 + $0x1c8] sm:$0xff] %v572
        %591 = vst [vmem:[#allocation3 + $0x210] sm:$0xff] %v573
        %592 = vst [vmem:[#allocation3 + $0x258] sm:$0xff] %v574
        %593 = vst [vmem:[#allocation3 + $0x2a0] sm:$0xff] %v575
        %594 = vst [vmem:[#allocation3 + $0x2e8] sm:$0xff] %v576
        %595 = vst [vmem:[#allocation3 + $0x330] sm:$0xff] %v577
        %596 = vst [vmem:[#allocation3 + $0x378] sm:$0xff] %v578
        %597 = vst [vmem:[#allocation3 + $0x3c0] sm:$0xff] %v579
        %598 = vst [vmem:[#allocation3 + $0x408] sm:$0xff] %v580
        %599 = vst [vmem:[#allocation3 + $0x450] sm:$0xff] %v581
        %600 = vst [vmem:[#allocation3 + $0x498] sm:$0xff] %v582
        %601 = vst [vmem:[#allocation3 + $0x4e0] sm:$0xff] %v583
        %v602 = vld [vmem:[#allocation2 + $0x13] sm:$0xff]
        %v603 = vld [vmem:[#allocation2 + $0x1b] sm:$0xff]
        %v604 = vld [vmem:[#allocation2 + $0x23] sm:$0xff]
        %v605 = vld [vmem:[#allocation2 + $0x2b] sm:$0xff]
        %v606 = vld [vmem:[#allocation2 + $0x33] sm:$0xff]
        %v607 = vld [vmem:[#allocation2 + $0x3b] sm:$0xff]
        %v608 = vld [vmem:[#allocation2 + $0x43] sm:$0xff]
        %v609 = vld [vmem:[#allocation2 + $0x4b] sm:$0xff]
        %v610 = vld [vmem:[#allocation2 + $0x53] sm:$0xff]
        %v611 = vld [vmem:[#allocation2 + $0x5b] sm:$0xff]
        %v612 = vld [vmem:[#allocation2 + $0x63] sm:$0xff]
        %v613 = vld [vmem:[#allocation2 + $0x6b] sm:$0xff]
        %v614 = vld [vmem:[#allocation2 + $0x73] sm:$0xff]
        %v615 = vld [vmem:[#allocation2 + $0x7b] sm:$0xff]
        %v616 = vld [vmem:[#allocation2 + $0x83] sm:$0xff]
        %v617 = vld [vmem:[#allocation2 + $0x8b] sm:$0xff]
        %v618 = vld [vmem:[#allocation2 + $0x93] sm:$0xff]
        %v619 = vld [vmem:[#allocation2 + $0x9b] sm:$0xff]
        %v620 = vld [vmem:[#allocation2 + $0xa3] sm:$0xff]
        %v621 = vld [vmem:[#allocation2 + $0xab] sm:$0xff]
        %v622 = vld [vmem:[#allocation2 + $0xb3] sm:$0xff]
        %v623 = vld [vmem:[#allocation2 + $0xbb] sm:$0xff]
        %v624 = vld [vmem:[#allocation2 + $0xc3] sm:$0xff]
        %v625 = vld [vmem:[#allocation2 + $0xcb] sm:$0xff]
        %v626 = vld [vmem:[#allocation2 + $0xd3] sm:$0xff]
        %v627 = vld [vmem:[#allocation2 + $0xdb] sm:$0xff]
        %v628 = vld [vmem:[#allocation2 + $0xe3] sm:$0xff]
        %v629 = vld [vmem:[#allocation2 + $0xeb] sm:$0xff]
        %v630 = vld [vmem:[#allocation2 + $0xf3] sm:$0xff]
        %v631 = vld [vmem:[#allocation2 + $0xfb] sm:$0xff]
        %v632 = vld [vmem:[#allocation2 + $0x103] sm:$0xff]
        %v633 = vld [vmem:[#allocation2 + $0x10b] sm:$0xff]
        %v634 = vld [vmem:[#allocation2 + $0x113] sm:$0xff]
        %v635 = vld [vmem:[#allocation2 + $0x11b] sm:$0xff]
        %v636 = vld [vmem:[#allocation2 + $0x123] sm:$0xff]
        %v637 = vld [vmem:[#allocation2 + $0x12b] sm:$0xff]
        %v638 = vpack.c.bf16 %v603, %v602
        %v639 = vpack.c.bf16 %v605, %v604
        %v640 = vpack.c.bf16 %v607, %v606
        %v641 = vpack.c.bf16 %v609, %v608
        %v642 = vpack.c.bf16 %v611, %v610
        %v643 = vpack.c.bf16 %v613, %v612
        %v644 = vpack.c.bf16 %v615, %v614
        %v645 = vpack.c.bf16 %v617, %v616
        %v646 = vpack.c.bf16 %v619, %v618
        %v647 = vpack.c.bf16 %v621, %v620
        %v648 = vpack.c.bf16 %v623, %v622
        %v649 = vpack.c.bf16 %v625, %v624
        %v650 = vpack.c.bf16 %v627, %v626
        %v651 = vpack.c.bf16 %v629, %v628
        %v652 = vpack.c.bf16 %v631, %v630
        %v653 = vpack.c.bf16 %v633, %v632
        %v654 = vpack.c.bf16 %v635, %v634
        %v655 = vpack.c.bf16 %v637, %v636
        %656 = vst [vmem:[#allocation3 + $0x20] sm:$0xff] %v638
        %657 = vst [vmem:[#allocation3 + $0x68] sm:$0xff] %v639
        %658 = vst [vmem:[#allocation3 + $0xb0] sm:$0xff] %v640
        %659 = vst [vmem:[#allocation3 + $0xf8] sm:$0xff] %v641
        %660 = vst [vmem:[#allocation3 + $0x140] sm:$0xff] %v642
        %661 = vst [vmem:[#allocation3 + $0x188] sm:$0xff] %v643
        %662 = vst [vmem:[#allocation3 + $0x1d0] sm:$0xff] %v644
        %663 = vst [vmem:[#allocation3 + $0x218] sm:$0xff] %v645
        %664 = vst [vmem:[#allocation3 + $0x260] sm:$0xff] %v646
        %665 = vst [vmem:[#allocation3 + $0x2a8] sm:$0xff] %v647
        %666 = vst [vmem:[#allocation3 + $0x2f0] sm:$0xff] %v648
        %667 = vst [vmem:[#allocation3 + $0x338] sm:$0xff] %v649
        %668 = vst [vmem:[#allocation3 + $0x380] sm:$0xff] %v650
        %669 = vst [vmem:[#allocation3 + $0x3c8] sm:$0xff] %v651
        %670 = vst [vmem:[#allocation3 + $0x410] sm:$0xff] %v652
        %671 = vst [vmem:[#allocation3 + $0x458] sm:$0xff] %v653
        %672 = vst [vmem:[#allocation3 + $0x4a0] sm:$0xff] %v654
        %673 = vst [vmem:[#allocation3 + $0x4e8] sm:$0xff] %v655
        %v674 = vld [vmem:[#allocation2 + $0x14] sm:$0xff]
        %v675 = vld [vmem:[#allocation2 + $0x1c] sm:$0xff]
        %v676 = vld [vmem:[#allocation2 + $0x24] sm:$0xff]
        %v677 = vld [vmem:[#allocation2 + $0x2c] sm:$0xff]
        %v678 = vld [vmem:[#allocation2 + $0x34] sm:$0xff]
        %v679 = vld [vmem:[#allocation2 + $0x3c] sm:$0xff]
        %v680 = vld [vmem:[#allocation2 + $0x44] sm:$0xff]
        %v681 = vld [vmem:[#allocation2 + $0x4c] sm:$0xff]
        %v682 = vld [vmem:[#allocation2 + $0x54] sm:$0xff]
        %v683 = vld [vmem:[#allocation2 + $0x5c] sm:$0xff]
        %v684 = vld [vmem:[#allocation2 + $0x64] sm:$0xff]
        %v685 = vld [vmem:[#allocation2 + $0x6c] sm:$0xff]
        %v686 = vld [vmem:[#allocation2 + $0x74] sm:$0xff]
        %v687 = vld [vmem:[#allocation2 + $0x7c] sm:$0xff]
        %v688 = vld [vmem:[#allocation2 + $0x84] sm:$0xff]
        %v689 = vld [vmem:[#allocation2 + $0x8c] sm:$0xff]
        %v690 = vld [vmem:[#allocation2 + $0x94] sm:$0xff]
        %v691 = vld [vmem:[#allocation2 + $0x9c] sm:$0xff]
        %v692 = vld [vmem:[#allocation2 + $0xa4] sm:$0xff]
        %v693 = vld [vmem:[#allocation2 + $0xac] sm:$0xff]
        %v694 = vld [vmem:[#allocation2 + $0xb4] sm:$0xff]
        %v695 = vld [vmem:[#allocation2 + $0xbc] sm:$0xff]
        %v696 = vld [vmem:[#allocation2 + $0xc4] sm:$0xff]
        %v697 = vld [vmem:[#allocation2 + $0xcc] sm:$0xff]
        %v698 = vld [vmem:[#allocation2 + $0xd4] sm:$0xff]
        %v699 = vld [vmem:[#allocation2 + $0xdc] sm:$0xff]
        %v700 = vld [vmem:[#allocation2 + $0xe4] sm:$0xff]
        %v701 = vld [vmem:[#allocation2 + $0xec] sm:$0xff]
        %v702 = vld [vmem:[#allocation2 + $0xf4] sm:$0xff]
        %v703 = vld [vmem:[#allocation2 + $0xfc] sm:$0xff]
        %v704 = vld [vmem:[#allocation2 + $0x104] sm:$0xff]
        %v705 = vld [vmem:[#allocation2 + $0x10c] sm:$0xff]
        %v706 = vld [vmem:[#allocation2 + $0x114] sm:$0xff]
        %v707 = vld [vmem:[#allocation2 + $0x11c] sm:$0xff]
        %v708 = vld [vmem:[#allocation2 + $0x124] sm:$0xff]
        %v709 = vld [vmem:[#allocation2 + $0x12c] sm:$0xff]
        %v710 = vpack.c.bf16 %v675, %v674
        %v711 = vpack.c.bf16 %v677, %v676
        %v712 = vpack.c.bf16 %v679, %v678
        %v713 = vpack.c.bf16 %v681, %v680
        %v714 = vpack.c.bf16 %v683, %v682
        %v715 = vpack.c.bf16 %v685, %v684
        %v716 = vpack.c.bf16 %v687, %v686
        %v717 = vpack.c.bf16 %v689, %v688
        %v718 = vpack.c.bf16 %v691, %v690
        %v719 = vpack.c.bf16 %v693, %v692
        %v720 = vpack.c.bf16 %v695, %v694
        %v721 = vpack.c.bf16 %v697, %v696
        %v722 = vpack.c.bf16 %v699, %v698
        %v723 = vpack.c.bf16 %v701, %v700
        %v724 = vpack.c.bf16 %v703, %v702
        %v725 = vpack.c.bf16 %v705, %v704
        %v726 = vpack.c.bf16 %v707, %v706
        %v727 = vpack.c.bf16 %v709, %v708
        %728 = vst [vmem:[#allocation3 + $0x28] sm:$0xff] %v710
        %729 = vst [vmem:[#allocation3 + $0x70] sm:$0xff] %v711
        %730 = vst [vmem:[#allocation3 + $0xb8] sm:$0xff] %v712
        %731 = vst [vmem:[#allocation3 + $0x100] sm:$0xff] %v713
        %732 = vst [vmem:[#allocation3 + $0x148] sm:$0xff] %v714
        %733 = vst [vmem:[#allocation3 + $0x190] sm:$0xff] %v715
        %734 = vst [vmem:[#allocation3 + $0x1d8] sm:$0xff] %v716
        %735 = vst [vmem:[#allocation3 + $0x220] sm:$0xff] %v717
        %736 = vst [vmem:[#allocation3 + $0x268] sm:$0xff] %v718
        %737 = vst [vmem:[#allocation3 + $0x2b0] sm:$0xff] %v719
        %738 = vst [vmem:[#allocation3 + $0x2f8] sm:$0xff] %v720
        %739 = vst [vmem:[#allocation3 + $0x340] sm:$0xff] %v721
        %740 = vst [vmem:[#allocation3 + $0x388] sm:$0xff] %v722
        %741 = vst [vmem:[#allocation3 + $0x3d0] sm:$0xff] %v723
        %742 = vst [vmem:[#allocation3 + $0x418] sm:$0xff] %v724
        %743 = vst [vmem:[#allocation3 + $0x460] sm:$0xff] %v725
        %744 = vst [vmem:[#allocation3 + $0x4a8] sm:$0xff] %v726
        %745 = vst [vmem:[#allocation3 + $0x4f0] sm:$0xff] %v727
        %v746 = vld [vmem:[#allocation2 + $0x24] sm:$0xff]
        %v747 = vld [vmem:[#allocation2 + $0x2c] sm:$0xff]
        %v748 = vld [vmem:[#allocation2 + $0x34] sm:$0xff]
        %v749 = vld [vmem:[#allocation2 + $0x3c] sm:$0xff]
        %v750 = vld [vmem:[#allocation2 + $0x44] sm:$0xff]
        %v751 = vld [vmem:[#allocation2 + $0x4c] sm:$0xff]
        %v752 = vld [vmem:[#allocation2 + $0x54] sm:$0xff]
        %v753 = vld [vmem:[#allocation2 + $0x5c] sm:$0xff]
        %v754 = vld [vmem:[#allocation2 + $0x64] sm:$0xff]
        %v755 = vld [vmem:[#allocation2 + $0x6c] sm:$0xff]
        %v756 = vld [vmem:[#allocation2 + $0x74] sm:$0xff]
        %v757 = vld [vmem:[#allocation2 + $0x7c] sm:$0xff]
        %v758 = vld [vmem:[#allocation2 + $0x84] sm:$0xff]
        %v759 = vld [vmem:[#allocation2 + $0x8c] sm:$0xff]
        %v760 = vld [vmem:[#allocation2 + $0x94] sm:$0xff]
        %v761 = vld [vmem:[#allocation2 + $0x9c] sm:$0xff]
        %v762 = vld [vmem:[#allocation2 + $0xa4] sm:$0xff]
        %v763 = vld [vmem:[#allocation2 + $0xac] sm:$0xff]
        %v764 = vld [vmem:[#allocation2 + $0xb4] sm:$0xff]
        %v765 = vld [vmem:[#allocation2 + $0xbc] sm:$0xff]
        %v766 = vld [vmem:[#allocation2 + $0xc4] sm:$0xff]
        %v767 = vld [vmem:[#allocation2 + $0xcc] sm:$0xff]
        %v768 = vld [vmem:[#allocation2 + $0xd4] sm:$0xff]
        %v769 = vld [vmem:[#allocation2 + $0xdc] sm:$0xff]
        %v770 = vld [vmem:[#allocation2 + $0xe4] sm:$0xff]
        %v771 = vld [vmem:[#allocation2 + $0xec] sm:$0xff]
        %v772 = vld [vmem:[#allocation2 + $0xf4] sm:$0xff]
        %v773 = vld [vmem:[#allocation2 + $0xfc] sm:$0xff]
        %v774 = vld [vmem:[#allocation2 + $0x104] sm:$0xff]
        %v775 = vld [vmem:[#allocation2 + $0x10c] sm:$0xff]
        %v776 = vld [vmem:[#allocation2 + $0x114] sm:$0xff]
        %v777 = vld [vmem:[#allocation2 + $0x11c] sm:$0xff]
        %v778 = vld [vmem:[#allocation2 + $0x124] sm:$0xff]
        %v779 = vld [vmem:[#allocation2 + $0x12c] sm:$0xff]
        %v780 = vld [vmem:[#allocation2 + $0x134] sm:$0xff]
        %v781 = vld [vmem:[#allocation2 + $0x13c] sm:$0xff]
        %v782 = vpack.c.bf16 %v747, %v746
        %v783 = vpack.c.bf16 %v749, %v748
        %v784 = vpack.c.bf16 %v751, %v750
        %v785 = vpack.c.bf16 %v753, %v752
        %v786 = vpack.c.bf16 %v755, %v754
        %v787 = vpack.c.bf16 %v757, %v756
        %v788 = vpack.c.bf16 %v759, %v758
        %v789 = vpack.c.bf16 %v761, %v760
        %v790 = vpack.c.bf16 %v763, %v762
        %v791 = vpack.c.bf16 %v765, %v764
        %v792 = vpack.c.bf16 %v767, %v766
        %v793 = vpack.c.bf16 %v769, %v768
        %v794 = vpack.c.bf16 %v771, %v770
        %v795 = vpack.c.bf16 %v773, %v772
        %v796 = vpack.c.bf16 %v775, %v774
        %v797 = vpack.c.bf16 %v777, %v776
        %v798 = vpack.c.bf16 %v779, %v778
        %v799 = vpack.c.bf16 %v781, %v780
        %800 = vst [vmem:[#allocation3 + $0x30] sm:$0xff] %v782
        %801 = vst [vmem:[#allocation3 + $0x78] sm:$0xff] %v783
        %802 = vst [vmem:[#allocation3 + $0xc0] sm:$0xff] %v784
        %803 = vst [vmem:[#allocation3 + $0x108] sm:$0xff] %v785
        %804 = vst [vmem:[#allocation3 + $0x150] sm:$0xff] %v786
        %805 = vst [vmem:[#allocation3 + $0x198] sm:$0xff] %v787
        %806 = vst [vmem:[#allocation3 + $0x1e0] sm:$0xff] %v788
        %807 = vst [vmem:[#allocation3 + $0x228] sm:$0xff] %v789
        %808 = vst [vmem:[#allocation3 + $0x270] sm:$0xff] %v790
        %809 = vst [vmem:[#allocation3 + $0x2b8] sm:$0xff] %v791
        %810 = vst [vmem:[#allocation3 + $0x300] sm:$0xff] %v792
        %811 = vst [vmem:[#allocation3 + $0x348] sm:$0xff] %v793
        %812 = vst [vmem:[#allocation3 + $0x390] sm:$0xff] %v794
        %813 = vst [vmem:[#allocation3 + $0x3d8] sm:$0xff] %v795
        %814 = vst [vmem:[#allocation3 + $0x420] sm:$0xff] %v796
        %815 = vst [vmem:[#allocation3 + $0x468] sm:$0xff] %v797
        %816 = vst [vmem:[#allocation3 + $0x4b0] sm:$0xff] %v798
        %817 = vst [vmem:[#allocation3 + $0x4f8] sm:$0xff] %v799
        %v818 = vld [vmem:[#allocation2 + $0x25] sm:$0xff]
        %v819 = vld [vmem:[#allocation2 + $0x2d] sm:$0xff]
        %v820 = vld [vmem:[#allocation2 + $0x35] sm:$0xff]
        %v821 = vld [vmem:[#allocation2 + $0x3d] sm:$0xff]
        %v822 = vld [vmem:[#allocation2 + $0x45] sm:$0xff]
        %v823 = vld [vmem:[#allocation2 + $0x4d] sm:$0xff]
        %v824 = vld [vmem:[#allocation2 + $0x55] sm:$0xff]
        %v825 = vld [vmem:[#allocation2 + $0x5d] sm:$0xff]
        %v826 = vld [vmem:[#allocation2 + $0x65] sm:$0xff]
        %v827 = vld [vmem:[#allocation2 + $0x6d] sm:$0xff]
        %v828 = vld [vmem:[#allocation2 + $0x75] sm:$0xff]
        %v829 = vld [vmem:[#allocation2 + $0x7d] sm:$0xff]
        %v830 = vld [vmem:[#allocation2 + $0x85] sm:$0xff]
        %v831 = vld [vmem:[#allocation2 + $0x8d] sm:$0xff]
        %v832 = vld [vmem:[#allocation2 + $0x95] sm:$0xff]
        %v833 = vld [vmem:[#allocation2 + $0x9d] sm:$0xff]
        %v834 = vld [vmem:[#allocation2 + $0xa5] sm:$0xff]
        %v835 = vld [vmem:[#allocation2 + $0xad] sm:$0xff]
        %v836 = vld [vmem:[#allocation2 + $0xb5] sm:$0xff]
        %v837 = vld [vmem:[#allocation2 + $0xbd] sm:$0xff]
        %v838 = vld [vmem:[#allocation2 + $0xc5] sm:$0xff]
        %v839 = vld [vmem:[#allocation2 + $0xcd] sm:$0xff]
        %v840 = vld [vmem:[#allocation2 + $0xd5] sm:$0xff]
        %v841 = vld [vmem:[#allocation2 + $0xdd] sm:$0xff]
        %v842 = vld [vmem:[#allocation2 + $0xe5] sm:$0xff]
        %v843 = vld [vmem:[#allocation2 + $0xed] sm:$0xff]
        %v844 = vld [vmem:[#allocation2 + $0xf5] sm:$0xff]
        %v845 = vld [vmem:[#allocation2 + $0xfd] sm:$0xff]
        %v846 = vld [vmem:[#allocation2 + $0x105] sm:$0xff]
        %v847 = vld [vmem:[#allocation2 + $0x10d] sm:$0xff]
        %v848 = vld [vmem:[#allocation2 + $0x115] sm:$0xff]
        %v849 = vld [vmem:[#allocation2 + $0x11d] sm:$0xff]
        %v850 = vld [vmem:[#allocation2 + $0x125] sm:$0xff]
        %v851 = vld [vmem:[#allocation2 + $0x12d] sm:$0xff]
        %v852 = vld [vmem:[#allocation2 + $0x135] sm:$0xff]
        %v853 = vld [vmem:[#allocation2 + $0x13d] sm:$0xff]
        %v854 = vpack.c.bf16 %v819, %v818
        %v855 = vpack.c.bf16 %v821, %v820
        %v856 = vpack.c.bf16 %v823, %v822
        %v857 = vpack.c.bf16 %v825, %v824
        %v858 = vpack.c.bf16 %v827, %v826
        %v859 = vpack.c.bf16 %v829, %v828
        %v860 = vpack.c.bf16 %v831, %v830
        %v861 = vpack.c.bf16 %v833, %v832
        %v862 = vpack.c.bf16 %v835, %v834
        %v863 = vpack.c.bf16 %v837, %v836
        %v864 = vpack.c.bf16 %v839, %v838
        %v865 = vpack.c.bf16 %v841, %v840
        %v866 = vpack.c.bf16 %v843, %v842
        %v867 = vpack.c.bf16 %v845, %v844
        %v868 = vpack.c.bf16 %v847, %v846
        %v869 = vpack.c.bf16 %v849, %v848
        %v870 = vpack.c.bf16 %v851, %v850
        %v871 = vpack.c.bf16 %v853, %v852
        %872 = vst [vmem:[#allocation3 + $0x38] sm:$0xff] %v854
        %873 = vst [vmem:[#allocation3 + $0x80] sm:$0xff] %v855
        %874 = vst [vmem:[#allocation3 + $0xc8] sm:$0xff] %v856
        %875 = vst [vmem:[#allocation3 + $0x110] sm:$0xff] %v857
        %876 = vst [vmem:[#allocation3 + $0x158] sm:$0xff] %v858
        %877 = vst [vmem:[#allocation3 + $0x1a0] sm:$0xff] %v859
        %878 = vst [vmem:[#allocation3 + $0x1e8] sm:$0xff] %v860
        %879 = vst [vmem:[#allocation3 + $0x230] sm:$0xff] %v861
        %880 = vst [vmem:[#allocation3 + $0x278] sm:$0xff] %v862
        %881 = vst [vmem:[#allocation3 + $0x2c0] sm:$0xff] %v863
        %882 = vst [vmem:[#allocation3 + $0x308] sm:$0xff] %v864
        %883 = vst [vmem:[#allocation3 + $0x350] sm:$0xff] %v865
        %884 = vst [vmem:[#allocation3 + $0x398] sm:$0xff] %v866
        %885 = vst [vmem:[#allocation3 + $0x3e0] sm:$0xff] %v867
        %886 = vst [vmem:[#allocation3 + $0x428] sm:$0xff] %v868
        %887 = vst [vmem:[#allocation3 + $0x470] sm:$0xff] %v869
        %888 = vst [vmem:[#allocation3 + $0x4b8] sm:$0xff] %v870
        %889 = vst [vmem:[#allocation3 + $0x500] sm:$0xff] %v871
        %v890 = vld [vmem:[#allocation2 + $0x26] sm:$0xff]
        %v891 = vld [vmem:[#allocation2 + $0x2e] sm:$0xff]
        %v892 = vld [vmem:[#allocation2 + $0x36] sm:$0xff]
        %v893 = vld [vmem:[#allocation2 + $0x3e] sm:$0xff]
        %v894 = vld [vmem:[#allocation2 + $0x46] sm:$0xff]
        %v895 = vld [vmem:[#allocation2 + $0x4e] sm:$0xff]
        %v896 = vld [vmem:[#allocation2 + $0x56] sm:$0xff]
        %v897 = vld [vmem:[#allocation2 + $0x5e] sm:$0xff]
        %v898 = vld [vmem:[#allocation2 + $0x66] sm:$0xff]
        %v899 = vld [vmem:[#allocation2 + $0x6e] sm:$0xff]
        %v900 = vld [vmem:[#allocation2 + $0x76] sm:$0xff]
        %v901 = vld [vmem:[#allocation2 + $0x7e] sm:$0xff]
        %v902 = vld [vmem:[#allocation2 + $0x86] sm:$0xff]
        %v903 = vld [vmem:[#allocation2 + $0x8e] sm:$0xff]
        %v904 = vld [vmem:[#allocation2 + $0x96] sm:$0xff]
        %v905 = vld [vmem:[#allocation2 + $0x9e] sm:$0xff]
        %v906 = vld [vmem:[#allocation2 + $0xa6] sm:$0xff]
        %v907 = vld [vmem:[#allocation2 + $0xae] sm:$0xff]
        %v908 = vld [vmem:[#allocation2 + $0xb6] sm:$0xff]
        %v909 = vld [vmem:[#allocation2 + $0xbe] sm:$0xff]
        %v910 = vld [vmem:[#allocation2 + $0xc6] sm:$0xff]
        %v911 = vld [vmem:[#allocation2 + $0xce] sm:$0xff]
        %v912 = vld [vmem:[#allocation2 + $0xd6] sm:$0xff]
        %v913 = vld [vmem:[#allocation2 + $0xde] sm:$0xff]
        %v914 = vld [vmem:[#allocation2 + $0xe6] sm:$0xff]
        %v915 = vld [vmem:[#allocation2 + $0xee] sm:$0xff]
        %v916 = vld [vmem:[#allocation2 + $0xf6] sm:$0xff]
        %v917 = vld [vmem:[#allocation2 + $0xfe] sm:$0xff]
        %v918 = vld [vmem:[#allocation2 + $0x106] sm:$0xff]
        %v919 = vld [vmem:[#allocation2 + $0x10e] sm:$0xff]
        %v920 = vld [vmem:[#allocation2 + $0x116] sm:$0xff]
        %v921 = vld [vmem:[#allocation2 + $0x11e] sm:$0xff]
        %v922 = vld [vmem:[#allocation2 + $0x126] sm:$0xff]
        %v923 = vld [vmem:[#allocation2 + $0x12e] sm:$0xff]
        %v924 = vld [vmem:[#allocation2 + $0x136] sm:$0xff]
        %v925 = vld [vmem:[#allocation2 + $0x13e] sm:$0xff]
        %v926 = vpack.c.bf16 %v891, %v890
        %v927 = vpack.c.bf16 %v893, %v892
        %v928 = vpack.c.bf16 %v895, %v894
        %v929 = vpack.c.bf16 %v897, %v896
        %v930 = vpack.c.bf16 %v899, %v898
        %v931 = vpack.c.bf16 %v901, %v900
        %v932 = vpack.c.bf16 %v903, %v902
        %v933 = vpack.c.bf16 %v905, %v904
        %v934 = vpack.c.bf16 %v907, %v906
        %v935 = vpack.c.bf16 %v909, %v908
        %v936 = vpack.c.bf16 %v911, %v910
        %v937 = vpack.c.bf16 %v913, %v912
        %v938 = vpack.c.bf16 %v915, %v914
        %v939 = vpack.c.bf16 %v917, %v916
        %v940 = vpack.c.bf16 %v919, %v918
        %v941 = vpack.c.bf16 %v921, %v920
        %v942 = vpack.c.bf16 %v923, %v922
        %v943 = vpack.c.bf16 %v925, %v924
        %944 = vst [vmem:[#allocation3 + $0x40] sm:$0xff] %v926
        %945 = vst [vmem:[#allocation3 + $0x88] sm:$0xff] %v927
        %946 = vst [vmem:[#allocation3 + $0xd0] sm:$0xff] %v928
        %947 = vst [vmem:[#allocation3 + $0x118] sm:$0xff] %v929
        %948 = vst [vmem:[#allocation3 + $0x160] sm:$0xff] %v930
        %949 = vst [vmem:[#allocation3 + $0x1a8] sm:$0xff] %v931
        %950 = vst [vmem:[#allocation3 + $0x1f0] sm:$0xff] %v932
        %951 = vst [vmem:[#allocation3 + $0x238] sm:$0xff] %v933
        %952 = vst [vmem:[#allocation3 + $0x280] sm:$0xff] %v934
        %953 = vst [vmem:[#allocation3 + $0x2c8] sm:$0xff] %v935
        %954 = vst [vmem:[#allocation3 + $0x310] sm:$0xff] %v936
        %955 = vst [vmem:[#allocation3 + $0x358] sm:$0xff] %v937
        %956 = vst [vmem:[#allocation3 + $0x3a0] sm:$0xff] %v938
        %957 = vst [vmem:[#allocation3 + $0x3e8] sm:$0xff] %v939
        %958 = vst [vmem:[#allocation3 + $0x430] sm:$0xff] %v940
        %959 = vst [vmem:[#allocation3 + $0x478] sm:$0xff] %v941
        %960 = vst [vmem:[#allocation3 + $0x4c0] sm:$0xff] %v942
        %961 = vst [vmem:[#allocation3 + $0x508] sm:$0xff] %v943
        %v962 = vld [vmem:[#allocation3] sm:$0xff]
        %v963 = vld [vmem:[#allocation3 + $0x8] sm:$0xff]
        %v964 = vld [vmem:[#allocation3 + $0x10] sm:$0xff]
        %v965 = vld [vmem:[#allocation3 + $0x18] sm:$0xff]
        %v966 = vld [vmem:[#allocation3 + $0x20] sm:$0xff]
        %v967 = vld [vmem:[#allocation3 + $0x28] sm:$0xff]
        %v968 = vld [vmem:[#allocation3 + $0x30] sm:$0xff]
        %v969 = vld [vmem:[#allocation3 + $0x38] sm:$0xff]
        %v970 = vld [vmem:[#allocation3 + $0x40] sm:$0xff]
        %v971 = vld [vmem:[#allocation3 + $0x48] sm:$0xff]
        %v972 = vld [vmem:[#allocation3 + $0x50] sm:$0xff]
        %v973 = vld [vmem:[#allocation3 + $0x58] sm:$0xff]
        %v974 = vld [vmem:[#allocation3 + $0x60] sm:$0xff]
        %v975 = vld [vmem:[#allocation3 + $0x68] sm:$0xff]
        %v976 = vld [vmem:[#allocation3 + $0x70] sm:$0xff]
        %v977 = vld [vmem:[#allocation3 + $0x78] sm:$0xff]
        %v978 = vld [vmem:[#allocation3 + $0x80] sm:$0xff]
        %v979 = vld [vmem:[#allocation3 + $0x88] sm:$0xff]
        %v980 = vld [vmem:[#allocation3 + $0x90] sm:$0xff]
        %v981 = vld [vmem:[#allocation3 + $0x98] sm:$0xff]
        %v982 = vld [vmem:[#allocation3 + $0xa0] sm:$0xff]
        %v983 = vld [vmem:[#allocation3 + $0xa8] sm:$0xff]
        %v984 = vld [vmem:[#allocation3 + $0xb0] sm:$0xff]
        %v985 = vld [vmem:[#allocation3 + $0xb8] sm:$0xff]
        %v986 = vld [vmem:[#allocation3 + $0xc0] sm:$0xff]
        %v987 = vld [vmem:[#allocation3 + $0xc8] sm:$0xff]
        %v988 = vld [vmem:[#allocation3 + $0xd0] sm:$0xff]
        %v989 = vld [vmem:[#allocation3 + $0xd8] sm:$0xff]
        %v990 = vld [vmem:[#allocation3 + $0xe0] sm:$0xff]
        %v991 = vld [vmem:[#allocation3 + $0xe8] sm:$0xff]
        %v992 = vld [vmem:[#allocation3 + $0xf0] sm:$0xff]
        %v993 = vld [vmem:[#allocation3 + $0xf8] sm:$0xff]
        %v994 = vld [vmem:[#allocation3 + $0x100] sm:$0xff]
        %v995 = vld [vmem:[#allocation3 + $0x108] sm:$0xff]
        %v996 = vld [vmem:[#allocation3 + $0x110] sm:$0xff]
        %v997 = vld [vmem:[#allocation3 + $0x118] sm:$0xff]
        %v998 = vld [vmem:[#allocation3 + $0x120] sm:$0xff]
        %v999 = vld [vmem:[#allocation3 + $0x128] sm:$0xff]
        %v1000 = vld [vmem:[#allocation3 + $0x130] sm:$0xff]
        %v1001 = vld [vmem:[#allocation3 + $0x138] sm:$0xff]
        %v1002 = vld [vmem:[#allocation3 + $0x140] sm:$0xff]
        %v1003 = vld [vmem:[#allocation3 + $0x148] sm:$0xff]
        %v1004 = vld [vmem:[#allocation3 + $0x150] sm:$0xff]
        %v1005 = vld [vmem:[#allocation3 + $0x158] sm:$0xff]
        %v1006 = vld [vmem:[#allocation3 + $0x160] sm:$0xff]
        %v1007 = vld [vmem:[#allocation3 + $0x168] sm:$0xff]
        %v1008 = vld [vmem:[#allocation3 + $0x170] sm:$0xff]
        %v1009 = vld [vmem:[#allocation3 + $0x178] sm:$0xff]
        %v1010 = vld [vmem:[#allocation3 + $0x180] sm:$0xff]
        %v1011 = vld [vmem:[#allocation3 + $0x188] sm:$0xff]
        %v1012 = vld [vmem:[#allocation3 + $0x190] sm:$0xff]
        %v1013 = vld [vmem:[#allocation3 + $0x198] sm:$0xff]
        %v1014 = vld [vmem:[#allocation3 + $0x1a0] sm:$0xff]
        %v1015 = vld [vmem:[#allocation3 + $0x1a8] sm:$0xff]
        %v1016 = vld [vmem:[#allocation3 + $0x1b0] sm:$0xff]
        %v1017 = vld [vmem:[#allocation3 + $0x1b8] sm:$0xff]
        %v1018 = vld [vmem:[#allocation3 + $0x1c0] sm:$0xff]
        %v1019 = vld [vmem:[#allocation3 + $0x1c8] sm:$0xff]
        %v1020 = vld [vmem:[#allocation3 + $0x1d0] sm:$0xff]
        %v1021 = vld [vmem:[#allocation3 + $0x1d8] sm:$0xff]
        %v1022 = vld [vmem:[#allocation3 + $0x1e0] sm:$0xff]
        %v1023 = vld [vmem:[#allocation3 + $0x1e8] sm:$0xff]
        %v1024 = vld [vmem:[#allocation3 + $0x1f0] sm:$0xff]
        %v1025 = vld [vmem:[#allocation3 + $0x1f8] sm:$0xff]
        %v1026 = vld [vmem:[#allocation3 + $0x200] sm:$0xff]
        %v1027 = vld [vmem:[#allocation3 + $0x208] sm:$0xff]
        %v1028 = vld [vmem:[#allocation3 + $0x210] sm:$0xff]
        %v1029 = vld [vmem:[#allocation3 + $0x218] sm:$0xff]
        %v1030 = vld [vmem:[#allocation3 + $0x220] sm:$0xff]
        %v1031 = vld [vmem:[#allocation3 + $0x228] sm:$0xff]
        %v1032 = vld [vmem:[#allocation3 + $0x230] sm:$0xff]
        %v1033 = vld [vmem:[#allocation3 + $0x238] sm:$0xff]
        %v1034 = vld [vmem:[#allocation3 + $0x240] sm:$0xff]
        %v1035 = vld [vmem:[#allocation3 + $0x248] sm:$0xff]
        %v1036 = vld [vmem:[#allocation3 + $0x250] sm:$0xff]
        %v1037 = vld [vmem:[#allocation3 + $0x258] sm:$0xff]
        %v1038 = vld [vmem:[#allocation3 + $0x260] sm:$0xff]
        %v1039 = vld [vmem:[#allocation3 + $0x268] sm:$0xff]
        %v1040 = vld [vmem:[#allocation3 + $0x270] sm:$0xff]
        %v1041 = vld [vmem:[#allocation3 + $0x278] sm:$0xff]
        %v1042 = vld [vmem:[#allocation3 + $0x280] sm:$0xff]
        %v1043 = vld [vmem:[#allocation3 + $0x288] sm:$0xff]
        %v1044 = vld [vmem:[#allocation3 + $0x290] sm:$0xff]
        %v1045 = vld [vmem:[#allocation3 + $0x298] sm:$0xff]
        %v1046 = vld [vmem:[#allocation3 + $0x2a0] sm:$0xff]
        %v1047 = vld [vmem:[#allocation3 + $0x2a8] sm:$0xff]
        %v1048 = vld [vmem:[#allocation3 + $0x2b0] sm:$0xff]
        %v1049 = vld [vmem:[#allocation3 + $0x2b8] sm:$0xff]
        %v1050 = vld [vmem:[#allocation3 + $0x2c0] sm:$0xff]
        %v1051 = vld [vmem:[#allocation3 + $0x2c8] sm:$0xff]
        %v1052 = vld [vmem:[#allocation3 + $0x2d0] sm:$0xff]
        %v1053 = vld [vmem:[#allocation3 + $0x2d8] sm:$0xff]
        %v1054 = vld [vmem:[#allocation3 + $0x2e0] sm:$0xff]
        %v1055 = vld [vmem:[#allocation3 + $0x2e8] sm:$0xff]
        %v1056 = vld [vmem:[#allocation3 + $0x2f0] sm:$0xff]
        %v1057 = vld [vmem:[#allocation3 + $0x2f8] sm:$0xff]
        %v1058 = vld [vmem:[#allocation3 + $0x300] sm:$0xff]
        %v1059 = vld [vmem:[#allocation3 + $0x308] sm:$0xff]
        %v1060 = vld [vmem:[#allocation3 + $0x310] sm:$0xff]
        %v1061 = vld [vmem:[#allocation3 + $0x318] sm:$0xff]
        %v1062 = vld [vmem:[#allocation3 + $0x320] sm:$0xff]
        %v1063 = vld [vmem:[#allocation3 + $0x328] sm:$0xff]
        %v1064 = vld [vmem:[#allocation3 + $0x330] sm:$0xff]
        %v1065 = vld [vmem:[#allocation3 + $0x338] sm:$0xff]
        %v1066 = vld [vmem:[#allocation3 + $0x340] sm:$0xff]
        %v1067 = vld [vmem:[#allocation3 + $0x348] sm:$0xff]
        %v1068 = vld [vmem:[#allocation3 + $0x350] sm:$0xff]
        %v1069 = vld [vmem:[#allocation3 + $0x358] sm:$0xff]
        %v1070 = vld [vmem:[#allocation3 + $0x360] sm:$0xff]
        %v1071 = vld [vmem:[#allocation3 + $0x368] sm:$0xff]
        %v1072 = vld [vmem:[#allocation3 + $0x370] sm:$0xff]
        %v1073 = vld [vmem:[#allocation3 + $0x378] sm:$0xff]
        %v1074 = vld [vmem:[#allocation3 + $0x380] sm:$0xff]
        %v1075 = vld [vmem:[#allocation3 + $0x388] sm:$0xff]
        %v1076 = vld [vmem:[#allocation3 + $0x390] sm:$0xff]
        %v1077 = vld [vmem:[#allocation3 + $0x398] sm:$0xff]
        %v1078 = vld [vmem:[#allocation3 + $0x3a0] sm:$0xff]
        %v1079 = vld [vmem:[#allocation3 + $0x3a8] sm:$0xff]
        %v1080 = vld [vmem:[#allocation3 + $0x3b0] sm:$0xff]
        %v1081 = vld [vmem:[#allocation3 + $0x3b8] sm:$0xff]
        %v1082 = vld [vmem:[#allocation3 + $0x3c0] sm:$0xff]
        %v1083 = vld [vmem:[#allocation3 + $0x3c8] sm:$0xff]
        %v1084 = vld [vmem:[#allocation3 + $0x3d0] sm:$0xff]
        %v1085 = vld [vmem:[#allocation3 + $0x3d8] sm:$0xff]
        %v1086 = vld [vmem:[#allocation3 + $0x3e0] sm:$0xff]
        %v1087 = vld [vmem:[#allocation3 + $0x3e8] sm:$0xff]
        %v1088 = vld [vmem:[#allocation3 + $0x3f0] sm:$0xff]
        %v1089 = vld [vmem:[#allocation3 + $0x3f8] sm:$0xff]
        %v1090 = vld [vmem:[#allocation3 + $0x400] sm:$0xff]
        %v1091 = vld [vmem:[#allocation3 + $0x408] sm:$0xff]
        %v1092 = vld [vmem:[#allocation3 + $0x410] sm:$0xff]
        %v1093 = vld [vmem:[#allocation3 + $0x418] sm:$0xff]
        %v1094 = vld [vmem:[#allocation3 + $0x420] sm:$0xff]
        %v1095 = vld [vmem:[#allocation3 + $0x428] sm:$0xff]
        %v1096 = vld [vmem:[#allocation3 + $0x430] sm:$0xff]
        %v1097 = vld [vmem:[#allocation3 + $0x438] sm:$0xff]
        %v1098 = vld [vmem:[#allocation3 + $0x440] sm:$0xff]
        %v1099 = vld [vmem:[#allocation3 + $0x448] sm:$0xff]
        %v1100 = vld [vmem:[#allocation3 + $0x450] sm:$0xff]
        %v1101 = vld [vmem:[#allocation3 + $0x458] sm:$0xff]
        %v1102 = vld [vmem:[#allocation3 + $0x460] sm:$0xff]
        %v1103 = vld [vmem:[#allocation3 + $0x468] sm:$0xff]
        %v1104 = vld [vmem:[#allocation3 + $0x470] sm:$0xff]
        %v1105 = vld [vmem:[#allocation3 + $0x478] sm:$0xff]
        %v1106 = vld [vmem:[#allocation3 + $0x480] sm:$0xff]
        %v1107 = vld [vmem:[#allocation3 + $0x488] sm:$0xff]
        %v1108 = vld [vmem:[#allocation3 + $0x490] sm:$0xff]
        %v1109 = vld [vmem:[#allocation3 + $0x498] sm:$0xff]
        %v1110 = vld [vmem:[#allocation3 + $0x4a0] sm:$0xff]
        %v1111 = vld [vmem:[#allocation3 + $0x4a8] sm:$0xff]
        %v1112 = vld [vmem:[#allocation3 + $0x4b0] sm:$0xff]
        %v1113 = vld [vmem:[#allocation3 + $0x4b8] sm:$0xff]
        %v1114 = vld [vmem:[#allocation3 + $0x4c0] sm:$0xff]
        %v1115 = vld [vmem:[#allocation3 + $0x4c8] sm:$0xff]
        %v1116 = vld [vmem:[#allocation3 + $0x4d0] sm:$0xff]
        %v1117 = vld [vmem:[#allocation3 + $0x4d8] sm:$0xff]
        %v1118 = vld [vmem:[#allocation3 + $0x4e0] sm:$0xff]
        %v1119 = vld [vmem:[#allocation3 + $0x4e8] sm:$0xff]
        %v1120 = vld [vmem:[#allocation3 + $0x4f0] sm:$0xff]
        %v1121 = vld [vmem:[#allocation3 + $0x4f8] sm:$0xff]
        %v1122 = vld [vmem:[#allocation3 + $0x500] sm:$0xff]
        %v1123 = vld [vmem:[#allocation3 + $0x508] sm:$0xff]
        %v1124 = vld [vmem:[#allocation4] sm:$0xff]
        %v1125 = vld [vmem:[#allocation4 + $0x8] sm:$0xff]
        %v1126 = vld [vmem:[#allocation4 + $0x10] sm:$0xff]
        %v1127 = vld [vmem:[#allocation4 + $0x18] sm:$0xff]
        %v1128 = vld [vmem:[#allocation4 + $0x20] sm:$0xff]
        %v1129 = vld [vmem:[#allocation4 + $0x28] sm:$0xff]
        %v1130 = vld [vmem:[#allocation4 + $0x30] sm:$0xff]
        %v1131 = vld [vmem:[#allocation4 + $0x38] sm:$0xff]
        %v1132 = vld [vmem:[#allocation4 + $0x40] sm:$0xff]
        %v1133 = vld [vmem:[#allocation4 + $0x48] sm:$0xff]
        %v1134 = vld [vmem:[#allocation4 + $0x50] sm:$0xff]
        %v1135 = vld [vmem:[#allocation4 + $0x58] sm:$0xff]
        %v1136 = vld [vmem:[#allocation4 + $0x60] sm:$0xff]
        %v1137 = vld [vmem:[#allocation4 + $0x68] sm:$0xff]
        %v1138 = vld [vmem:[#allocation4 + $0x70] sm:$0xff]
        %v1139 = vld [vmem:[#allocation4 + $0x78] sm:$0xff]
        %v1140 = vld [vmem:[#allocation4 + $0x80] sm:$0xff]
        %v1141 = vld [vmem:[#allocation4 + $0x88] sm:$0xff]
        %v1142 = vld [vmem:[#allocation4 + $0x90] sm:$0xff]
        %v1143 = vld [vmem:[#allocation4 + $0x98] sm:$0xff]
        %v1144 = vld [vmem:[#allocation4 + $0xa0] sm:$0xff]
        %v1145 = vld [vmem:[#allocation4 + $0xa8] sm:$0xff]
        %v1146 = vld [vmem:[#allocation4 + $0xb0] sm:$0xff]
        %v1147 = vld [vmem:[#allocation4 + $0xb8] sm:$0xff]
        %v1148 = vld [vmem:[#allocation4 + $0xc0] sm:$0xff]
        %v1149 = vld [vmem:[#allocation4 + $0xc8] sm:$0xff]
        %v1150 = vld [vmem:[#allocation4 + $0xd0] sm:$0xff]
        %v1151 = vld [vmem:[#allocation4 + $0xd8] sm:$0xff]
        %v1152 = vld [vmem:[#allocation4 + $0xe0] sm:$0xff]
        %v1153 = vld [vmem:[#allocation4 + $0xe8] sm:$0xff]
        %v1154 = vld [vmem:[#allocation4 + $0xf0] sm:$0xff]
        %v1155 = vld [vmem:[#allocation4 + $0xf8] sm:$0xff]
        %v1156 = vld [vmem:[#allocation4 + $0x100] sm:$0xff]
        %v1157 = vld [vmem:[#allocation4 + $0x108] sm:$0xff]
        %v1158 = vld [vmem:[#allocation4 + $0x110] sm:$0xff]
        %v1159 = vld [vmem:[#allocation4 + $0x118] sm:$0xff]
        %v1160 = vld [vmem:[#allocation4 + $0x120] sm:$0xff]
        %v1161 = vld [vmem:[#allocation4 + $0x128] sm:$0xff]
        %v1162 = vld [vmem:[#allocation4 + $0x130] sm:$0xff]
        %v1163 = vld [vmem:[#allocation4 + $0x138] sm:$0xff]
        %v1164 = vld [vmem:[#allocation4 + $0x140] sm:$0xff]
        %v1165 = vld [vmem:[#allocation4 + $0x148] sm:$0xff]
        %v1166 = vld [vmem:[#allocation4 + $0x150] sm:$0xff]
        %v1167 = vld [vmem:[#allocation4 + $0x158] sm:$0xff]
        %v1168 = vld [vmem:[#allocation4 + $0x160] sm:$0xff]
        %v1169 = vld [vmem:[#allocation4 + $0x168] sm:$0xff]
        %v1170 = vld [vmem:[#allocation4 + $0x170] sm:$0xff]
        %v1171 = vld [vmem:[#allocation4 + $0x178] sm:$0xff]
        %v1172 = vld [vmem:[#allocation4 + $0x180] sm:$0xff]
        %v1173 = vld [vmem:[#allocation4 + $0x188] sm:$0xff]
        %v1174 = vld [vmem:[#allocation4 + $0x190] sm:$0xff]
        %v1175 = vld [vmem:[#allocation4 + $0x198] sm:$0xff]
        %v1176 = vld [vmem:[#allocation4 + $0x1a0] sm:$0xff]
        %v1177 = vld [vmem:[#allocation4 + $0x1a8] sm:$0xff]
        %v1178 = vld [vmem:[#allocation4 + $0x1b0] sm:$0xff]
        %v1179 = vld [vmem:[#allocation4 + $0x1b8] sm:$0xff]
        %v1180 = vld [vmem:[#allocation4 + $0x1c0] sm:$0xff]
        %v1181 = vld [vmem:[#allocation4 + $0x1c8] sm:$0xff]
        %v1182 = vld [vmem:[#allocation4 + $0x1d0] sm:$0xff]
        %v1183 = vld [vmem:[#allocation4 + $0x1d8] sm:$0xff]
        %v1184 = vld [vmem:[#allocation4 + $0x1e0] sm:$0xff]
        %v1185 = vld [vmem:[#allocation4 + $0x1e8] sm:$0xff]
        %v1186 = vld [vmem:[#allocation4 + $0x1f0] sm:$0xff]
        %v1187 = vld [vmem:[#allocation4 + $0x1f8] sm:$0xff]
        %v1188 = vld [vmem:[#allocation4 + $0x200] sm:$0xff]
        %v1189 = vld [vmem:[#allocation4 + $0x208] sm:$0xff]
        %v1190 = vld [vmem:[#allocation4 + $0x210] sm:$0xff]
        %v1191 = vld [vmem:[#allocation4 + $0x218] sm:$0xff]
        %v1192 = vld [vmem:[#allocation4 + $0x220] sm:$0xff]
        %v1193 = vld [vmem:[#allocation4 + $0x228] sm:$0xff]
        %v1194 = vld [vmem:[#allocation4 + $0x230] sm:$0xff]
        %v1195 = vld [vmem:[#allocation4 + $0x238] sm:$0xff]
        %v1196 = vld [vmem:[#allocation4 + $0x240] sm:$0xff]
        %v1197 = vld [vmem:[#allocation4 + $0x248] sm:$0xff]
        %v1198 = vld [vmem:[#allocation4 + $0x250] sm:$0xff]
        %v1199 = vld [vmem:[#allocation4 + $0x258] sm:$0xff]
        %v1200 = vld [vmem:[#allocation4 + $0x260] sm:$0xff]
        %v1201 = vld [vmem:[#allocation4 + $0x268] sm:$0xff]
        %v1202 = vld [vmem:[#allocation4 + $0x270] sm:$0xff]
        %v1203 = vld [vmem:[#allocation4 + $0x278] sm:$0xff]
        %v1204 = vld [vmem:[#allocation4 + $0x280] sm:$0xff]
        %v1205 = vld [vmem:[#allocation4 + $0x288] sm:$0xff]
        %v1206 = vld [vmem:[#allocation4 + $0x290] sm:$0xff]
        %v1207 = vld [vmem:[#allocation4 + $0x298] sm:$0xff]
        %v1208 = vld [vmem:[#allocation4 + $0x2a0] sm:$0xff]
        %v1209 = vld [vmem:[#allocation4 + $0x2a8] sm:$0xff]
        %v1210 = vld [vmem:[#allocation4 + $0x2b0] sm:$0xff]
        %v1211 = vld [vmem:[#allocation4 + $0x2b8] sm:$0xff]
        %v1212 = vld [vmem:[#allocation4 + $0x2c0] sm:$0xff]
        %v1213 = vld [vmem:[#allocation4 + $0x2c8] sm:$0xff]
        %v1214 = vld [vmem:[#allocation4 + $0x2d0] sm:$0xff]
        %v1215 = vld [vmem:[#allocation4 + $0x2d8] sm:$0xff]
        %v1216 = vld [vmem:[#allocation4 + $0x2e0] sm:$0xff]
        %v1217 = vld [vmem:[#allocation4 + $0x2e8] sm:$0xff]
        %v1218 = vld [vmem:[#allocation4 + $0x2f0] sm:$0xff]
        %v1219 = vld [vmem:[#allocation4 + $0x2f8] sm:$0xff]
        %v1220 = vld [vmem:[#allocation4 + $0x300] sm:$0xff]
        %v1221 = vld [vmem:[#allocation4 + $0x308] sm:$0xff]
        %v1222 = vld [vmem:[#allocation4 + $0x310] sm:$0xff]
        %v1223 = vld [vmem:[#allocation4 + $0x318] sm:$0xff]
        %v1224 = vld [vmem:[#allocation4 + $0x320] sm:$0xff]
        %v1225 = vld [vmem:[#allocation4 + $0x328] sm:$0xff]
        %v1226 = vld [vmem:[#allocation4 + $0x330] sm:$0xff]
        %v1227 = vld [vmem:[#allocation4 + $0x338] sm:$0xff]
        %v1228 = vld [vmem:[#allocation4 + $0x340] sm:$0xff]
        %v1229 = vld [vmem:[#allocation4 + $0x348] sm:$0xff]
        %v1230 = vld [vmem:[#allocation4 + $0x350] sm:$0xff]
        %v1231 = vld [vmem:[#allocation4 + $0x358] sm:$0xff]
        %v1232 = vld [vmem:[#allocation4 + $0x360] sm:$0xff]
        %v1233 = vld [vmem:[#allocation4 + $0x368] sm:$0xff]
        %v1234 = vld [vmem:[#allocation4 + $0x370] sm:$0xff]
        %v1235 = vld [vmem:[#allocation4 + $0x378] sm:$0xff]
        %v1236 = vld [vmem:[#allocation4 + $0x380] sm:$0xff]
        %v1237 = vld [vmem:[#allocation4 + $0x388] sm:$0xff]
        %v1238 = vld [vmem:[#allocation4 + $0x390] sm:$0xff]
        %v1239 = vld [vmem:[#allocation4 + $0x398] sm:$0xff]
        %v1240 = vld [vmem:[#allocation4 + $0x3a0] sm:$0xff]
        %v1241 = vld [vmem:[#allocation4 + $0x3a8] sm:$0xff]
        %v1242 = vld [vmem:[#allocation4 + $0x3b0] sm:$0xff]
        %v1243 = vld [vmem:[#allocation4 + $0x3b8] sm:$0xff]
        %v1244 = vld [vmem:[#allocation4 + $0x3c0] sm:$0xff]
        %v1245 = vld [vmem:[#allocation4 + $0x3c8] sm:$0xff]
        %v1246 = vld [vmem:[#allocation4 + $0x3d0] sm:$0xff]
        %v1247 = vld [vmem:[#allocation4 + $0x3d8] sm:$0xff]
        %v1248 = vld [vmem:[#allocation4 + $0x3e0] sm:$0xff]
        %v1249 = vld [vmem:[#allocation4 + $0x3e8] sm:$0xff]
        %v1250 = vld [vmem:[#allocation4 + $0x3f0] sm:$0xff]
        %v1251 = vld [vmem:[#allocation4 + $0x3f8] sm:$0xff]
        %v1252 = vld [vmem:[#allocation4 + $0x400] sm:$0xff]
        %v1253 = vld [vmem:[#allocation4 + $0x408] sm:$0xff]
        %v1254 = vld [vmem:[#allocation4 + $0x410] sm:$0xff]
        %v1255 = vld [vmem:[#allocation4 + $0x418] sm:$0xff]
        %v1256 = vld [vmem:[#allocation4 + $0x420] sm:$0xff]
        %v1257 = vld [vmem:[#allocation4 + $0x428] sm:$0xff]
        %v1258 = vld [vmem:[#allocation4 + $0x430] sm:$0xff]
        %v1259 = vld [vmem:[#allocation4 + $0x438] sm:$0xff]
        %v1260 = vld [vmem:[#allocation4 + $0x440] sm:$0xff]
        %v1261 = vld [vmem:[#allocation4 + $0x448] sm:$0xff]
        %v1262 = vld [vmem:[#allocation4 + $0x450] sm:$0xff]
        %v1263 = vld [vmem:[#allocation4 + $0x458] sm:$0xff]
        %v1264 = vld [vmem:[#allocation4 + $0x460] sm:$0xff]
        %v1265 = vld [vmem:[#allocation4 + $0x468] sm:$0xff]
        %v1266 = vld [vmem:[#allocation4 + $0x470] sm:$0xff]
        %v1267 = vld [vmem:[#allocation4 + $0x478] sm:$0xff]
        %v1268 = vld [vmem:[%s2] sm:$0x3]
        %v1270 = vlaneseq
        %v1271 = vshrl.u32 %v1270, 7
        %v1272 = vsub.s32 0, %v1271
        %v1273 = vrot.slane %v1268, %v1272
        %v1274 = vlaneseq
        %v1275 = vshrl.u32 %v1274, 7
        %v1276 = vsub.s32 1, %v1275
        %v1277 = vrot.slane %v1268, %v1276
        %v1424 = vunpack.c.l.b16 %v1124
        %v1425 = vunpack.c.h.b16 %v1124
        %v1426 = vunpack.c.l.b16 %v1125
        %v1427 = vunpack.c.h.b16 %v1125
        %v1428 = vunpack.c.l.b16 %v1126
        %v1429 = vunpack.c.h.b16 %v1126
        %v1430 = vunpack.c.l.b16 %v1127
        %v1431 = vunpack.c.h.b16 %v1127
        %v1432 = vunpack.c.l.b16 %v1128
        %v1433 = vunpack.c.h.b16 %v1128
        %v1434 = vunpack.c.l.b16 %v1129
        %v1435 = vunpack.c.h.b16 %v1129
        %v1436 = vunpack.c.l.b16 %v1130
        %v1437 = vunpack.c.h.b16 %v1130
        %v1438 = vunpack.c.l.b16 %v1131
        %v1439 = vunpack.c.h.b16 %v1131
        %v1440 = vunpack.c.l.b16 %v1132
        %v1441 = vunpack.c.h.b16 %v1132
        %v1442 = vunpack.c.l.b16 %v1133
        %v1443 = vunpack.c.h.b16 %v1133
        %v1444 = vunpack.c.l.b16 %v1134
        %v1445 = vunpack.c.h.b16 %v1134
        %v1446 = vunpack.c.l.b16 %v1135
        %v1447 = vunpack.c.h.b16 %v1135
        %v1448 = vunpack.c.l.b16 %v1136
        %v1449 = vunpack.c.h.b16 %v1136
        %v1450 = vunpack.c.l.b16 %v1137
        %v1451 = vunpack.c.h.b16 %v1137
        %v1452 = vunpack.c.l.b16 %v1138
        %v1453 = vunpack.c.h.b16 %v1138
        %v1454 = vunpack.c.l.b16 %v1139
        %v1455 = vunpack.c.h.b16 %v1139
        %v1456 = vunpack.c.l.b16 %v1140
        %v1457 = vunpack.c.h.b16 %v1140
        %v1458 = vunpack.c.l.b16 %v1141
        %v1459 = vunpack.c.h.b16 %v1141
        %v1460 = vunpack.c.l.b16 %v1142
        %v1461 = vunpack.c.h.b16 %v1142
        %v1462 = vunpack.c.l.b16 %v1143
        %v1463 = vunpack.c.h.b16 %v1143
        %v1464 = vunpack.c.l.b16 %v1144
        %v1465 = vunpack.c.h.b16 %v1144
        %v1466 = vunpack.c.l.b16 %v1145
        %v1467 = vunpack.c.h.b16 %v1145
        %v1468 = vunpack.c.l.b16 %v1146
        %v1469 = vunpack.c.h.b16 %v1146
        %v1470 = vunpack.c.l.b16 %v1147
        %v1471 = vunpack.c.h.b16 %v1147
        %v1472 = vunpack.c.l.b16 %v1148
        %v1473 = vunpack.c.h.b16 %v1148
        %v1474 = vunpack.c.l.b16 %v1149
        %v1475 = vunpack.c.h.b16 %v1149
        %v1476 = vunpack.c.l.b16 %v1150
        %v1477 = vunpack.c.h.b16 %v1150
        %v1478 = vunpack.c.l.b16 %v1151
        %v1479 = vunpack.c.h.b16 %v1151
        %v1480 = vunpack.c.l.b16 %v1152
        %v1481 = vunpack.c.h.b16 %v1152
        %v1482 = vunpack.c.l.b16 %v1153
        %v1483 = vunpack.c.h.b16 %v1153
        %v1484 = vunpack.c.l.b16 %v1154
        %v1485 = vunpack.c.h.b16 %v1154
        %v1486 = vunpack.c.l.b16 %v1155
        %v1487 = vunpack.c.h.b16 %v1155
        %v1488 = vunpack.c.l.b16 %v1156
        %v1489 = vunpack.c.h.b16 %v1156
        %v1490 = vunpack.c.l.b16 %v1157
        %v1491 = vunpack.c.h.b16 %v1157
        %v1492 = vunpack.c.l.b16 %v1158
        %v1493 = vunpack.c.h.b16 %v1158
        %v1494 = vunpack.c.l.b16 %v1159
        %v1495 = vunpack.c.h.b16 %v1159
        %v1496 = vunpack.c.l.b16 %v1160
        %v1497 = vunpack.c.h.b16 %v1160
        %v1498 = vunpack.c.l.b16 %v1161
        %v1499 = vunpack.c.h.b16 %v1161
        %v1500 = vunpack.c.l.b16 %v1162
        %v1501 = vunpack.c.h.b16 %v1162
        %v1502 = vunpack.c.l.b16 %v1163
        %v1503 = vunpack.c.h.b16 %v1163
        %v1504 = vunpack.c.l.b16 %v1164
        %v1505 = vunpack.c.h.b16 %v1164
        %v1506 = vunpack.c.l.b16 %v1165
        %v1507 = vunpack.c.h.b16 %v1165
        %v1508 = vunpack.c.l.b16 %v1166
        %v1509 = vunpack.c.h.b16 %v1166
        %v1510 = vunpack.c.l.b16 %v1167
        %v1511 = vunpack.c.h.b16 %v1167
        %v1512 = vunpack.c.l.b16 %v1168
        %v1513 = vunpack.c.h.b16 %v1168
        %v1514 = vunpack.c.l.b16 %v1169
        %v1515 = vunpack.c.h.b16 %v1169
        %v1516 = vunpack.c.l.b16 %v1170
        %v1517 = vunpack.c.h.b16 %v1170
        %v1518 = vunpack.c.l.b16 %v1171
        %v1519 = vunpack.c.h.b16 %v1171
        %v1520 = vunpack.c.l.b16 %v1172
        %v1521 = vunpack.c.h.b16 %v1172
        %v1522 = vunpack.c.l.b16 %v1173
        %v1523 = vunpack.c.h.b16 %v1173
        %v1524 = vunpack.c.l.b16 %v1174
        %v1525 = vunpack.c.h.b16 %v1174
        %v1526 = vunpack.c.l.b16 %v1175
        %v1527 = vunpack.c.h.b16 %v1175
        %v1528 = vunpack.c.l.b16 %v1176
        %v1529 = vunpack.c.h.b16 %v1176
        %v1530 = vunpack.c.l.b16 %v1177
        %v1531 = vunpack.c.h.b16 %v1177
        %v1532 = vunpack.c.l.b16 %v1178
        %v1533 = vunpack.c.h.b16 %v1178
        %v1534 = vunpack.c.l.b16 %v1179
        %v1535 = vunpack.c.h.b16 %v1179
        %v1536 = vunpack.c.l.b16 %v1180
        %v1537 = vunpack.c.h.b16 %v1180
        %v1538 = vunpack.c.l.b16 %v1181
        %v1539 = vunpack.c.h.b16 %v1181
        %v1540 = vunpack.c.l.b16 %v1182
        %v1541 = vunpack.c.h.b16 %v1182
        %v1542 = vunpack.c.l.b16 %v1183
        %v1543 = vunpack.c.h.b16 %v1183
        %v1544 = vunpack.c.l.b16 %v1184
        %v1545 = vunpack.c.h.b16 %v1184
        %v1546 = vunpack.c.l.b16 %v1185
        %v1547 = vunpack.c.h.b16 %v1185
        %v1548 = vunpack.c.l.b16 %v1186
        %v1549 = vunpack.c.h.b16 %v1186
        %v1550 = vunpack.c.l.b16 %v1187
        %v1551 = vunpack.c.h.b16 %v1187
        %v1552 = vunpack.c.l.b16 %v1188
        %v1553 = vunpack.c.h.b16 %v1188
        %v1554 = vunpack.c.l.b16 %v1189
        %v1555 = vunpack.c.h.b16 %v1189
        %v1556 = vunpack.c.l.b16 %v1190
        %v1557 = vunpack.c.h.b16 %v1190
        %v1558 = vunpack.c.l.b16 %v1191
        %v1559 = vunpack.c.h.b16 %v1191
        %v1560 = vunpack.c.l.b16 %v1192
        %v1561 = vunpack.c.h.b16 %v1192
        %v1562 = vunpack.c.l.b16 %v1193
        %v1563 = vunpack.c.h.b16 %v1193
        %v1564 = vunpack.c.l.b16 %v1194
        %v1565 = vunpack.c.h.b16 %v1194
        %v1566 = vunpack.c.l.b16 %v1195
        %v1567 = vunpack.c.h.b16 %v1195
        %v1568 = vunpack.c.l.b16 %v1196
        %v1569 = vunpack.c.h.b16 %v1196
        %v1570 = vunpack.c.l.b16 %v1197
        %v1571 = vunpack.c.h.b16 %v1197
        %v1572 = vunpack.c.l.b16 %v1198
        %v1573 = vunpack.c.h.b16 %v1198
        %v1574 = vunpack.c.l.b16 %v1199
        %v1575 = vunpack.c.h.b16 %v1199
        %v1576 = vunpack.c.l.b16 %v1200
        %v1577 = vunpack.c.h.b16 %v1200
        %v1578 = vunpack.c.l.b16 %v1201
        %v1579 = vunpack.c.h.b16 %v1201
        %v1580 = vunpack.c.l.b16 %v1202
        %v1581 = vunpack.c.h.b16 %v1202
        %v1582 = vunpack.c.l.b16 %v1203
        %v1583 = vunpack.c.h.b16 %v1203
        %v1584 = vunpack.c.l.b16 %v1204
        %v1585 = vunpack.c.h.b16 %v1204
        %v1586 = vunpack.c.l.b16 %v1205
        %v1587 = vunpack.c.h.b16 %v1205
        %v1588 = vunpack.c.l.b16 %v1206
        %v1589 = vunpack.c.h.b16 %v1206
        %v1590 = vunpack.c.l.b16 %v1207
        %v1591 = vunpack.c.h.b16 %v1207
        %v1592 = vunpack.c.l.b16 %v1208
        %v1593 = vunpack.c.h.b16 %v1208
        %v1594 = vunpack.c.l.b16 %v1209
        %v1595 = vunpack.c.h.b16 %v1209
        %v1596 = vunpack.c.l.b16 %v1210
        %v1597 = vunpack.c.h.b16 %v1210
        %v1598 = vunpack.c.l.b16 %v1211
        %v1599 = vunpack.c.h.b16 %v1211
        %v1600 = vunpack.c.l.b16 %v1212
        %v1601 = vunpack.c.h.b16 %v1212
        %v1602 = vunpack.c.l.b16 %v1213
        %v1603 = vunpack.c.h.b16 %v1213
        %v1604 = vunpack.c.l.b16 %v1214
        %v1605 = vunpack.c.h.b16 %v1214
        %v1606 = vunpack.c.l.b16 %v1215
        %v1607 = vunpack.c.h.b16 %v1215
        %v1608 = vunpack.c.l.b16 %v1216
        %v1609 = vunpack.c.h.b16 %v1216
        %v1610 = vunpack.c.l.b16 %v1217
        %v1611 = vunpack.c.h.b16 %v1217
        %v1612 = vunpack.c.l.b16 %v1218
        %v1613 = vunpack.c.h.b16 %v1218
        %v1614 = vunpack.c.l.b16 %v1219
        %v1615 = vunpack.c.h.b16 %v1219
        %v1616 = vunpack.c.l.b16 %v1220
        %v1617 = vunpack.c.h.b16 %v1220
        %v1618 = vunpack.c.l.b16 %v1221
        %v1619 = vunpack.c.h.b16 %v1221
        %v1620 = vunpack.c.l.b16 %v1222
        %v1621 = vunpack.c.h.b16 %v1222
        %v1622 = vunpack.c.l.b16 %v1223
        %v1623 = vunpack.c.h.b16 %v1223
        %v1624 = vunpack.c.l.b16 %v1224
        %v1625 = vunpack.c.h.b16 %v1224
        %v1626 = vunpack.c.l.b16 %v1225
        %v1627 = vunpack.c.h.b16 %v1225
        %v1628 = vunpack.c.l.b16 %v1226
        %v1629 = vunpack.c.h.b16 %v1226
        %v1630 = vunpack.c.l.b16 %v1227
        %v1631 = vunpack.c.h.b16 %v1227
        %v1632 = vunpack.c.l.b16 %v1228
        %v1633 = vunpack.c.h.b16 %v1228
        %v1634 = vunpack.c.l.b16 %v1229
        %v1635 = vunpack.c.h.b16 %v1229
        %v1636 = vunpack.c.l.b16 %v1230
        %v1637 = vunpack.c.h.b16 %v1230
        %v1638 = vunpack.c.l.b16 %v1231
        %v1639 = vunpack.c.h.b16 %v1231
        %v1640 = vunpack.c.l.b16 %v1232
        %v1641 = vunpack.c.h.b16 %v1232
        %v1642 = vunpack.c.l.b16 %v1233
        %v1643 = vunpack.c.h.b16 %v1233
        %v1644 = vunpack.c.l.b16 %v1234
        %v1645 = vunpack.c.h.b16 %v1234
        %v1646 = vunpack.c.l.b16 %v1235
        %v1647 = vunpack.c.h.b16 %v1235
        %v1648 = vunpack.c.l.b16 %v1236
        %v1649 = vunpack.c.h.b16 %v1236
        %v1650 = vunpack.c.l.b16 %v1237
        %v1651 = vunpack.c.h.b16 %v1237
        %v1652 = vunpack.c.l.b16 %v1238
        %v1653 = vunpack.c.h.b16 %v1238
        %v1654 = vunpack.c.l.b16 %v1239
        %v1655 = vunpack.c.h.b16 %v1239
        %v1656 = vunpack.c.l.b16 %v1240
        %v1657 = vunpack.c.h.b16 %v1240
        %v1658 = vunpack.c.l.b16 %v1241
        %v1659 = vunpack.c.h.b16 %v1241
        %v1660 = vunpack.c.l.b16 %v1242
        %v1661 = vunpack.c.h.b16 %v1242
        %v1662 = vunpack.c.l.b16 %v1243
        %v1663 = vunpack.c.h.b16 %v1243
        %v1664 = vunpack.c.l.b16 %v1244
        %v1665 = vunpack.c.h.b16 %v1244
        %v1666 = vunpack.c.l.b16 %v1245
        %v1667 = vunpack.c.h.b16 %v1245
        %v1668 = vunpack.c.l.b16 %v1246
        %v1669 = vunpack.c.h.b16 %v1246
        %v1670 = vunpack.c.l.b16 %v1247
        %v1671 = vunpack.c.h.b16 %v1247
        %v1672 = vunpack.c.l.b16 %v1248
        %v1673 = vunpack.c.h.b16 %v1248
        %v1674 = vunpack.c.l.b16 %v1249
        %v1675 = vunpack.c.h.b16 %v1249
        %v1676 = vunpack.c.l.b16 %v1250
        %v1677 = vunpack.c.h.b16 %v1250
        %v1678 = vunpack.c.l.b16 %v1251
        %v1679 = vunpack.c.h.b16 %v1251
        %v1680 = vunpack.c.l.b16 %v1252
        %v1681 = vunpack.c.h.b16 %v1252
        %v1682 = vunpack.c.l.b16 %v1253
        %v1683 = vunpack.c.h.b16 %v1253
        %v1684 = vunpack.c.l.b16 %v1254
        %v1685 = vunpack.c.h.b16 %v1254
        %v1686 = vunpack.c.l.b16 %v1255
        %v1687 = vunpack.c.h.b16 %v1255
        %v1688 = vunpack.c.l.b16 %v1256
        %v1689 = vunpack.c.h.b16 %v1256
        %v1690 = vunpack.c.l.b16 %v1257
        %v1691 = vunpack.c.h.b16 %v1257
        %v1692 = vunpack.c.l.b16 %v1258
        %v1693 = vunpack.c.h.b16 %v1258
        %v1694 = vunpack.c.l.b16 %v1259
        %v1695 = vunpack.c.h.b16 %v1259
        %v1696 = vunpack.c.l.b16 %v1260
        %v1697 = vunpack.c.h.b16 %v1260
        %v1698 = vunpack.c.l.b16 %v1261
        %v1699 = vunpack.c.h.b16 %v1261
        %v1700 = vunpack.c.l.b16 %v1262
        %v1701 = vunpack.c.h.b16 %v1262
        %v1702 = vunpack.c.l.b16 %v1263
        %v1703 = vunpack.c.h.b16 %v1263
        %v1704 = vunpack.c.l.b16 %v1264
        %v1705 = vunpack.c.h.b16 %v1264
        %v1706 = vunpack.c.l.b16 %v1265
        %v1707 = vunpack.c.h.b16 %v1265
        %v1708 = vunpack.c.l.b16 %v1266
        %v1709 = vunpack.c.h.b16 %v1266
        %v1710 = vunpack.c.l.b16 %v1267
        %v1711 = vunpack.c.h.b16 %v1267
        %v1712 = vpack.c.b16 %v1426, %v1424
        %v1713 = vpack.c.b16 %v1427, %v1425
        %v1714 = vpack.c.b16 %v1430, %v1428
        %v1715 = vpack.c.b16 %v1431, %v1429
        %v1716 = vpack.c.b16 %v1434, %v1432
        %v1717 = vpack.c.b16 %v1435, %v1433
        %v1718 = vpack.c.b16 %v1438, %v1436
        %v1719 = vpack.c.b16 %v1439, %v1437
        %v1720 = vpack.c.b16 %v1442, %v1440
        %v1721 = vpack.c.b16 %v1443, %v1441
        %v1722 = vpack.c.b16 %v1446, %v1444
        %v1723 = vpack.c.b16 %v1447, %v1445
        %v1724 = vpack.c.b16 %v1450, %v1448
        %v1725 = vpack.c.b16 %v1451, %v1449
        %v1726 = vpack.c.b16 %v1454, %v1452
        %v1727 = vpack.c.b16 %v1455, %v1453
        %v1728 = vpack.c.b16 %v1458, %v1456
        %v1729 = vpack.c.b16 %v1459, %v1457
        %v1730 = vpack.c.b16 %v1462, %v1460
        %v1731 = vpack.c.b16 %v1463, %v1461
        %v1732 = vpack.c.b16 %v1466, %v1464
        %v1733 = vpack.c.b16 %v1467, %v1465
        %v1734 = vpack.c.b16 %v1470, %v1468
        %v1735 = vpack.c.b16 %v1471, %v1469
        %v1736 = vpack.c.b16 %v1474, %v1472
        %v1737 = vpack.c.b16 %v1475, %v1473
        %v1738 = vpack.c.b16 %v1478, %v1476
        %v1739 = vpack.c.b16 %v1479, %v1477
        %v1740 = vpack.c.b16 %v1482, %v1480
        %v1741 = vpack.c.b16 %v1483, %v1481
        %v1742 = vpack.c.b16 %v1486, %v1484
        %v1743 = vpack.c.b16 %v1487, %v1485
        %v1744 = vpack.c.b16 %v1490, %v1488
        %v1745 = vpack.c.b16 %v1491, %v1489
        %v1746 = vpack.c.b16 %v1494, %v1492
        %v1747 = vpack.c.b16 %v1495, %v1493
        %v1748 = vpack.c.b16 %v1498, %v1496
        %v1749 = vpack.c.b16 %v1499, %v1497
        %v1750 = vpack.c.b16 %v1502, %v1500
        %v1751 = vpack.c.b16 %v1503, %v1501
        %v1752 = vpack.c.b16 %v1506, %v1504
        %v1753 = vpack.c.b16 %v1507, %v1505
        %v1754 = vpack.c.b16 %v1510, %v1508
        %v1755 = vpack.c.b16 %v1511, %v1509
        %v1756 = vpack.c.b16 %v1514, %v1512
        %v1757 = vpack.c.b16 %v1515, %v1513
        %v1758 = vpack.c.b16 %v1518, %v1516
        %v1759 = vpack.c.b16 %v1519, %v1517
        %v1760 = vpack.c.b16 %v1522, %v1520
        %v1761 = vpack.c.b16 %v1523, %v1521
        %v1762 = vpack.c.b16 %v1526, %v1524
        %v1763 = vpack.c.b16 %v1527, %v1525
        %v1764 = vpack.c.b16 %v1530, %v1528
        %v1765 = vpack.c.b16 %v1531, %v1529
        %v1766 = vpack.c.b16 %v1534, %v1532
        %v1767 = vpack.c.b16 %v1535, %v1533
        %v1768 = vpack.c.b16 %v1538, %v1536
        %v1769 = vpack.c.b16 %v1539, %v1537
        %v1770 = vpack.c.b16 %v1542, %v1540
        %v1771 = vpack.c.b16 %v1543, %v1541
        %v1772 = vpack.c.b16 %v1546, %v1544
        %v1773 = vpack.c.b16 %v1547, %v1545
        %v1774 = vpack.c.b16 %v1550, %v1548
        %v1775 = vpack.c.b16 %v1551, %v1549
        %v1776 = vpack.c.b16 %v1554, %v1552
        %v1777 = vpack.c.b16 %v1555, %v1553
        %v1778 = vpack.c.b16 %v1558, %v1556
        %v1779 = vpack.c.b16 %v1559, %v1557
        %v1780 = vpack.c.b16 %v1562, %v1560
        %v1781 = vpack.c.b16 %v1563, %v1561
        %v1782 = vpack.c.b16 %v1566, %v1564
        %v1783 = vpack.c.b16 %v1567, %v1565
        %v1784 = vpack.c.b16 %v1570, %v1568
        %v1785 = vpack.c.b16 %v1571, %v1569
        %v1786 = vpack.c.b16 %v1574, %v1572
        %v1787 = vpack.c.b16 %v1575, %v1573
        %v1788 = vpack.c.b16 %v1578, %v1576
        %v1789 = vpack.c.b16 %v1579, %v1577
        %v1790 = vpack.c.b16 %v1582, %v1580
        %v1791 = vpack.c.b16 %v1583, %v1581
        %v1792 = vpack.c.b16 %v1586, %v1584
        %v1793 = vpack.c.b16 %v1587, %v1585
        %v1794 = vpack.c.b16 %v1590, %v1588
        %v1795 = vpack.c.b16 %v1591, %v1589
        %v1796 = vpack.c.b16 %v1594, %v1592
        %v1797 = vpack.c.b16 %v1595, %v1593
        %v1798 = vpack.c.b16 %v1598, %v1596
        %v1799 = vpack.c.b16 %v1599, %v1597
        %v1800 = vpack.c.b16 %v1602, %v1600
        %v1801 = vpack.c.b16 %v1603, %v1601
        %v1802 = vpack.c.b16 %v1606, %v1604
        %v1803 = vpack.c.b16 %v1607, %v1605
        %v1804 = vpack.c.b16 %v1610, %v1608
        %v1805 = vpack.c.b16 %v1611, %v1609
        %v1806 = vpack.c.b16 %v1614, %v1612
        %v1807 = vpack.c.b16 %v1615, %v1613
        %v1808 = vpack.c.b16 %v1618, %v1616
        %v1809 = vpack.c.b16 %v1619, %v1617
        %v1810 = vpack.c.b16 %v1622, %v1620
        %v1811 = vpack.c.b16 %v1623, %v1621
        %v1812 = vpack.c.b16 %v1626, %v1624
        %v1813 = vpack.c.b16 %v1627, %v1625
        %v1814 = vpack.c.b16 %v1630, %v1628
        %v1815 = vpack.c.b16 %v1631, %v1629
        %v1816 = vpack.c.b16 %v1634, %v1632
        %v1817 = vpack.c.b16 %v1635, %v1633
        %v1818 = vpack.c.b16 %v1638, %v1636
        %v1819 = vpack.c.b16 %v1639, %v1637
        %v1820 = vpack.c.b16 %v1642, %v1640
        %v1821 = vpack.c.b16 %v1643, %v1641
        %v1822 = vpack.c.b16 %v1646, %v1644
        %v1823 = vpack.c.b16 %v1647, %v1645
        %v1824 = vpack.c.b16 %v1650, %v1648
        %v1825 = vpack.c.b16 %v1651, %v1649
        %v1826 = vpack.c.b16 %v1654, %v1652
        %v1827 = vpack.c.b16 %v1655, %v1653
        %v1828 = vpack.c.b16 %v1658, %v1656
        %v1829 = vpack.c.b16 %v1659, %v1657
        %v1830 = vpack.c.b16 %v1662, %v1660
        %v1831 = vpack.c.b16 %v1663, %v1661
        %v1832 = vpack.c.b16 %v1666, %v1664
        %v1833 = vpack.c.b16 %v1667, %v1665
        %v1834 = vpack.c.b16 %v1670, %v1668
        %v1835 = vpack.c.b16 %v1671, %v1669
        %v1836 = vpack.c.b16 %v1674, %v1672
        %v1837 = vpack.c.b16 %v1675, %v1673
        %v1838 = vpack.c.b16 %v1678, %v1676
        %v1839 = vpack.c.b16 %v1679, %v1677
        %v1840 = vpack.c.b16 %v1682, %v1680
        %v1841 = vpack.c.b16 %v1683, %v1681
        %v1842 = vpack.c.b16 %v1686, %v1684
        %v1843 = vpack.c.b16 %v1687, %v1685
        %v1844 = vpack.c.b16 %v1690, %v1688
        %v1845 = vpack.c.b16 %v1691, %v1689
        %v1846 = vpack.c.b16 %v1694, %v1692
        %v1847 = vpack.c.b16 %v1695, %v1693
        %v1848 = vpack.c.b16 %v1698, %v1696
        %v1849 = vpack.c.b16 %v1699, %v1697
        %v1850 = vpack.c.b16 %v1702, %v1700
        %v1851 = vpack.c.b16 %v1703, %v1701
        %v1852 = vpack.c.b16 %v1706, %v1704
        %v1853 = vpack.c.b16 %v1707, %v1705
        %v1854 = vpack.c.b16 %v1710, %v1708
        %v1855 = vpack.c.b16 %v1711, %v1709
        %2000 = vmatprep.subr.bf16.mxu0 %v1713
        %2001 = vmatpush1.bf16.msra.mxu0 %v1712
        %2002 = vmatprep.subr.bf16.mxu0 %v1715
        %2003 = vmatpush1.bf16.msra.mxu0 %v1714
        %2004 = vmatprep.subr.bf16.mxu0 %v1717
        %2005 = vmatpush1.bf16.msra.mxu0 %v1716
        %2006 = vmatprep.subr.bf16.mxu0 %v1719
        %2007 = vmatpush1.bf16.msra.mxu0 %v1718
        %2008 = vmatprep.subr.bf16.mxu0 %v1721
        %2009 = vmatpush1.bf16.msra.mxu0 %v1720
        %2010 = vmatprep.subr.bf16.mxu0 %v1723
        %2011 = vmatpush1.bf16.msra.mxu0 %v1722
        %2012 = vmatprep.subr.bf16.mxu0 %v1725
        %2013 = vmatpush1.bf16.msra.mxu0 %v1724
        %2014 = vmatprep.subr.bf16.mxu0 %v1727
        %2015 = vmatpush1.bf16.msra.mxu0 %v1726
        %2016 = vmatprep.subr.bf16.mxu0 %v1729
        %2017 = vmatpush1.bf16.msra.mxu0 %v1728
        %2018 = vmatprep.subr.bf16.mxu0 %v1731
        %2019 = vmatpush1.bf16.msra.mxu0 %v1730
        %2020 = vmatprep.subr.bf16.mxu0 %v1733
        %2021 = vmatpush1.bf16.msra.mxu0 %v1732
        %2022 = vmatprep.subr.bf16.mxu0 %v1735
        %2023 = vmatpush1.bf16.msra.mxu0 %v1734
        %2024 = vmatprep.subr.bf16.mxu0 %v1737
        %2025 = vmatpush1.bf16.msra.mxu0 %v1736
        %2026 = vmatprep.subr.bf16.mxu0 %v1739
        %2027 = vmatpush1.bf16.msra.mxu0 %v1738
        %2028 = vmatprep.subr.bf16.mxu0 %v1741
        %2029 = vmatpush1.bf16.msra.mxu0 %v1740
        %2030 = vmatprep.subr.bf16.mxu0 %v1743
        %2031 = vmatpush1.bf16.msra.mxu0 %v1742
        %2032 = vmatprep.mubr.bf16.mxu0 %v963
        %2033 = vmatmul.mubr.bf16.gmra.mrb[0].mxu0 %v962
        %v2034 = vpop.f32.mrb[0].mxu0
        %v2035 = vadd.f32 %v1273, %v2034
        %v2036 = vpop.f32.mrb[0].mxu0
        %v2037 = vadd.f32 %v1277, %v2036
        %v2038 = vpop.f32.mrb[0].mxu0
        %v2039 = vadd.f32 %v1273, %v2038
        %v2040 = vpop.f32.mrb[0].mxu0
        %v2041 = vadd.f32 %v1277, %v2040
        %2042 = vmatprep.mubr.bf16.mxu0 %v972
        %2043 = vmatmul.mubr.bf16.gmra.mrb[0].mxu0 %v971
        %v2044 = vpop.f32.mrb[0].mxu0
        %v2045 = vadd.f32 %v1273, %v2044
        %v2046 = vpop.f32.mrb[0].mxu0
        %v2047 = vadd.f32 %v1277, %v2046
        %v2048 = vpop.f32.mrb[0].mxu0
        %v2049 = vadd.f32 %v1273, %v2048
        %v2050 = vpop.f32.mrb[0].mxu0
        %v2051 = vadd.f32 %v1277, %v2050
        %2052 = vmatprep.mubr.bf16.mxu0 %v981
        %2053 = vmatmul.mubr.bf16.gmra.mrb[0].mxu0 %v980
        %v2054 = vpop.f32.mrb[0].mxu0
        %v2055 = vadd.f32 %v1273, %v2054
        %v2056 = vpop.f32.mrb[0].mxu0
        %v2057 = vadd.f32 %v1277, %v2056
        %v2058 = vpop.f32.mrb[0].mxu0
        %v2059 = vadd.f32 %v1273, %v2058
        %v2060 = vpop.f32.mrb[0].mxu0
        %v2061 = vadd.f32 %v1277, %v2060
        %2062 = vmatprep.mubr.bf16.mxu0 %v990
        %2063 = vmatmul.mubr.bf16.gmra.mrb[0].mxu0 %v989
        %v2064 = vpop.f32.mrb[0].mxu0
        %v2065 = vadd.f32 %v1273, %v2064
        %v2066 = vpop.f32.mrb[0].mxu0
        %v2067 = vadd.f32 %v1277, %v2066
        %v2068 = vpop.f32.mrb[0].mxu0
        %v2069 = vadd.f32 %v1273, %v2068
        %v2070 = vpop.f32.mrb[0].mxu0
        %v2071 = vadd.f32 %v1277, %v2070
        %2072 = vmatprep.mubr.bf16.mxu0 %v999
        %2073 = vmatmul.mubr.bf16.gmra.mrb[0].mxu0 %v998
        %v2074 = vpop.f32.mrb[0].mxu0
        %v2075 = vadd.f32 %v1273, %v2074
        %v2076 = vpop.f32.mrb[0].mxu0
        %v2077 = vadd.f32 %v1277, %v2076
        %v2078 = vpop.f32.mrb[0].mxu0
        %v2079 = vadd.f32 %v1273, %v2078
        %v2080 = vpop.f32.mrb[0].mxu0
        %v2081 = vadd.f32 %v1277, %v2080
        %2082 = vmatprep.mubr.bf16.mxu0 %v1008
        %2083 = vmatmul.mubr.bf16.gmra.mrb[0].mxu0 %v1007
        %v2084 = vpop.f32.mrb[0].mxu0
        %v2085 = vadd.f32 %v1273, %v2084
        %v2086 = vpop.f32.mrb[0].mxu0
        %v2087 = vadd.f32 %v1277, %v2086
        %v2088 = vpop.f32.mrb[0].mxu0
        %v2089 = vadd.f32 %v1273, %v2088
        %v2090 = vpop.f32.mrb[0].mxu0
        %v2091 = vadd.f32 %v1277, %v2090
        %2092 = vmatprep.mubr.bf16.mxu0 %v1017
        %2093 = vmatmul.mubr.bf16.gmra.mrb[0].mxu0 %v1016
        %v2094 = vpop.f32.mrb[0].mxu0
        %v2095 = vadd.f32 %v1273, %v2094
        %v2096 = vpop.f32.mrb[0].mxu0
        %v2097 = vadd.f32 %v1277, %v2096
        %v2098 = vpop.f32.mrb[0].mxu0
        %v2099 = vadd.f32 %v1273, %v2098
        %v2100 = vpop.f32.mrb[0].mxu0
        %v2101 = vadd.f32 %v1277, %v2100
        %2102 = vmatprep.mubr.bf16.mxu0 %v1026
        %2103 = vmatmul.mubr.bf16.gmra.mrb[0].mxu0 %v1025
        %v2104 = vpop.f32.mrb[0].mxu0
        %v2105 = vadd.f32 %v1273, %v2104
        %v2106 = vpop.f32.mrb[0].mxu0
        %v2107 = vadd.f32 %v1277, %v2106
        %v2108 = vpop.f32.mrb[0].mxu0
        %v2109 = vadd.f32 %v1273, %v2108
        %v2110 = vpop.f32.mrb[0].mxu0
        %v2111 = vadd.f32 %v1277, %v2110
        %2112 = vmatprep.mubr.bf16.mxu0 %v1035
        %2113 = vmatmul.mubr.bf16.gmra.mrb[0].mxu0 %v1034
        %v2114 = vpop.f32.mrb[0].mxu0
        %v2115 = vadd.f32 %v1273, %v2114
        %v2116 = vpop.f32.mrb[0].mxu0
        %v2117 = vadd.f32 %v1277, %v2116
        %v2118 = vpop.f32.mrb[0].mxu0
        %v2119 = vadd.f32 %v1273, %v2118
        %v2120 = vpop.f32.mrb[0].mxu0
        %v2121 = vadd.f32 %v1277, %v2120
        %2122 = vmatprep.mubr.bf16.mxu0 %v1044
        %2123 = vmatmul.mubr.bf16.gmra.mrb[0].mxu0 %v1043
        %v2124 = vpop.f32.mrb[0].mxu0
        %v2125 = vadd.f32 %v1273, %v2124
        %v2126 = vpop.f32.mrb[0].mxu0
        %v2127 = vadd.f32 %v1277, %v2126
        %v2128 = vpop.f32.mrb[0].mxu0
        %v2129 = vadd.f32 %v1273, %v2128
        %v2130 = vpop.f32.mrb[0].mxu0
        %v2131 = vadd.f32 %v1277, %v2130
        %2132 = vmatprep.mubr.bf16.mxu0 %v1053
        %2133 = vmatmul.mubr.bf16.gmra.mrb[0].mxu0 %v1052
        %v2134 = vpop.f32.mrb[0].mxu0
        %v2135 = vadd.f32 %v1273, %v2134
        %v2136 = vpop.f32.mrb[0].mxu0
        %v2137 = vadd.f32 %v1277, %v2136
        %v2138 = vpop.f32.mrb[0].mxu0
        %v2139 = vadd.f32 %v1273, %v2138
        %v2140 = vpop.f32.mrb[0].mxu0
        %v2141 = vadd.f32 %v1277, %v2140
        %2142 = vmatprep.mubr.bf16.mxu0 %v1062
        %2143 = vmatmul.mubr.bf16.gmra.mrb[0].mxu0 %v1061
        %v2144 = vpop.f32.mrb[0].mxu0
        %v2145 = vadd.f32 %v1273, %v2144
        %v2146 = vpop.f32.mrb[0].mxu0
        %v2147 = vadd.f32 %v1277, %v2146
        %v2148 = vpop.f32.mrb[0].mxu0
        %v2149 = vadd.f32 %v1273, %v2148
        %v2150 = vpop.f32.mrb[0].mxu0
        %v2151 = vadd.f32 %v1277, %v2150
        %2152 = vmatprep.mubr.bf16.mxu0 %v1071
        %2153 = vmatmul.mubr.bf16.gmra.mrb[0].mxu0 %v1070
        %v2154 = vpop.f32.mrb[0].mxu0
        %v2155 = vadd.f32 %v1273, %v2154
        %v2156 = vpop.f32.mrb[0].mxu0
        %v2157 = vadd.f32 %v1277, %v2156
        %v2158 = vpop.f32.mrb[0].mxu0
        %v2159 = vadd.f32 %v1273, %v2158
        %v2160 = vpop.f32.mrb[0].mxu0
        %v2161 = vadd.f32 %v1277, %v2160
        %2162 = vmatprep.mubr.bf16.mxu0 %v1080
        %2163 = vmatmul.mubr.bf16.gmra.mrb[0].mxu0 %v1079
        %v2164 = vpop.f32.mrb[0].mxu0
        %v2165 = vadd.f32 %v1273, %v2164
        %v2166 = vpop.f32.mrb[0].mxu0
        %v2167 = vadd.f32 %v1277, %v2166
        %v2168 = vpop.f32.mrb[0].mxu0
        %v2169 = vadd.f32 %v1273, %v2168
        %v2170 = vpop.f32.mrb[0].mxu0
        %v2171 = vadd.f32 %v1277, %v2170
        %2172 = vmatprep.mubr.bf16.mxu0 %v1089
        %2173 = vmatmul.mubr.bf16.gmra.mrb[0].mxu0 %v1088
        %v2174 = vpop.f32.mrb[0].mxu0
        %v2175 = vadd.f32 %v1273, %v2174
        %v2176 = vpop.f32.mrb[0].mxu0
        %v2177 = vadd.f32 %v1277, %v2176
        %v2178 = vpop.f32.mrb[0].mxu0
        %v2179 = vadd.f32 %v1273, %v2178
        %v2180 = vpop.f32.mrb[0].mxu0
        %v2181 = vadd.f32 %v1277, %v2180
        %2182 = vmatprep.mubr.bf16.mxu0 %v1098
        %2183 = vmatmul.mubr.bf16.gmra.mrb[0].mxu0 %v1097
        %v2184 = vpop.f32.mrb[0].mxu0
        %v2185 = vadd.f32 %v1273, %v2184
        %v2186 = vpop.f32.mrb[0].mxu0
        %v2187 = vadd.f32 %v1277, %v2186
        %v2188 = vpop.f32.mrb[0].mxu0
        %v2189 = vadd.f32 %v1273, %v2188
        %v2190 = vpop.f32.mrb[0].mxu0
        %v2191 = vadd.f32 %v1277, %v2190
        %2192 = vmatprep.mubr.bf16.mxu0 %v1107
        %2193 = vmatmul.mubr.bf16.gmra.mrb[0].mxu0 %v1106
        %v2194 = vpop.f32.mrb[0].mxu0
        %v2195 = vadd.f32 %v1273, %v2194
        %v2196 = vpop.f32.mrb[0].mxu0
        %v2197 = vadd.f32 %v1277, %v2196
        %v2198 = vpop.f32.mrb[0].mxu0
        %v2199 = vadd.f32 %v1273, %v2198
        %v2200 = vpop.f32.mrb[0].mxu0
        %v2201 = vadd.f32 %v1277, %v2200
        %2202 = vmatprep.mubr.bf16.mxu0 %v1116
        %2203 = vmatmul.mubr.bf16.gmra.mrb[0].mxu0 %v1115
        %v2204 = vpop.f32.mrb[0].mxu0
        %v2205 = vadd.f32 %v1273, %v2204
        %v2206 = vpop.f32.mrb[0].mxu0
        %v2207 = vadd.f32 %v1277, %v2206
        %v2208 = vpop.f32.mrb[0].mxu0
        %v2209 = vadd.f32 %v1273, %v2208
        %v2210 = vpop.f32.mrb[0].mxu0
        %v2211 = vadd.f32 %v1277, %v2210
        %2212 = vdwg.mxu0
        %2213 = vmatprep.subr.bf16.mxu0 %v1745
        %2214 = vmatpush1.bf16.msra.mxu0 %v1744
        %2215 = vmatprep.subr.bf16.mxu0 %v1747
        %2216 = vmatpush1.bf16.msra.mxu0 %v1746
        %2217 = vmatprep.subr.bf16.mxu0 %v1749
        %2218 = vmatpush1.bf16.msra.mxu0 %v1748
        %2219 = vmatprep.subr.bf16.mxu0 %v1751
        %2220 = vmatpush1.bf16.msra.mxu0 %v1750
        %2221 = vmatprep.subr.bf16.mxu0 %v1753
        %2222 = vmatpush1.bf16.msra.mxu0 %v1752
        %2223 = vmatprep.subr.bf16.mxu0 %v1755
        %2224 = vmatpush1.bf16.msra.mxu0 %v1754
        %2225 = vmatprep.subr.bf16.mxu0 %v1757
        %2226 = vmatpush1.bf16.msra.mxu0 %v1756
        %2227 = vmatprep.subr.bf16.mxu0 %v1759
        %2228 = vmatpush1.bf16.msra.mxu0 %v1758
        %2229 = vmatprep.subr.bf16.mxu0 %v1761
        %2230 = vmatpush1.bf16.msra.mxu0 %v1760
        %2231 = vmatprep.subr.bf16.mxu0 %v1763
        %2232 = vmatpush1.bf16.msra.mxu0 %v1762
        %2233 = vmatprep.subr.bf16.mxu0 %v1765
        %2234 = vmatpush1.bf16.msra.mxu0 %v1764
        %2235 = vmatprep.subr.bf16.mxu0 %v1767
        %2236 = vmatpush1.bf16.msra.mxu0 %v1766
        %2237 = vmatprep.subr.bf16.mxu0 %v1769
        %2238 = vmatpush1.bf16.msra.mxu0 %v1768
        %2239 = vmatprep.subr.bf16.mxu0 %v1771
        %2240 = vmatpush1.bf16.msra.mxu0 %v1770
        %2241 = vmatprep.subr.bf16.mxu0 %v1773
        %2242 = vmatpush1.bf16.msra.mxu0 %v1772
        %2243 = vmatprep.subr.bf16.mxu0 %v1775
        %2244 = vmatpush1.bf16.msra.mxu0 %v1774
        %2245 = vmatprep.mubr.bf16.mxu0 %v965
        %2246 = vmatmul.mubr.bf16.gmra.mrb[0].mxu0 %v964
        %v2247 = vpop.f32.mrb[0].mxu0
        %v2248 = vadd.f32 %v2035, %v2247
        %v2249 = vpop.f32.mrb[0].mxu0
        %v2250 = vadd.f32 %v2037, %v2249
        %v2251 = vpop.f32.mrb[0].mxu0
        %v2252 = vadd.f32 %v2039, %v2251
        %v2253 = vpop.f32.mrb[0].mxu0
        %v2254 = vadd.f32 %v2041, %v2253
        %2255 = vmatprep.mubr.bf16.mxu0 %v974
        %2256 = vmatmul.mubr.bf16.gmra.mrb[0].mxu0 %v973
        %v2257 = vpop.f32.mrb[0].mxu0
        %v2258 = vadd.f32 %v2045, %v2257
        %v2259 = vpop.f32.mrb[0].mxu0
        %v2260 = vadd.f32 %v2047, %v2259
        %v2261 = vpop.f32.mrb[0].mxu0
        %v2262 = vadd.f32 %v2049, %v2261
        %v2263 = vpop.f32.mrb[0].mxu0
        %v2264 = vadd.f32 %v2051, %v2263
        %2265 = vmatprep.mubr.bf16.mxu0 %v983
        %2266 = vmatmul.mubr.bf16.gmra.mrb[0].mxu0 %v982
        %v2267 = vpop.f32.mrb[0].mxu0
        %v2268 = vadd.f32 %v2055, %v2267
        %v2269 = vpop.f32.mrb[0].mxu0
        %v2270 = vadd.f32 %v2057, %v2269
        %v2271 = vpop.f32.mrb[0].mxu0
        %v2272 = vadd.f32 %v2059, %v2271
        %v2273 = vpop.f32.mrb[0].mxu0
        %v2274 = vadd.f32 %v2061, %v2273
        %2275 = vmatprep.mubr.bf16.mxu0 %v992
        %2276 = vmatmul.mubr.bf16.gmra.mrb[0].mxu0 %v991
        %v2277 = vpop.f32.mrb[0].mxu0
        %v2278 = vadd.f32 %v2065, %v2277
        %v2279 = vpop.f32.mrb[0].mxu0
        %v2280 = vadd.f32 %v2067, %v2279
        %v2281 = vpop.f32.mrb[0].mxu0
        %v2282 = vadd.f32 %v2069, %v2281
        %v2283 = vpop.f32.mrb[0].mxu0
        %v2284 = vadd.f32 %v2071, %v2283
        %2285 = vmatprep.mubr.bf16.mxu0 %v1001
        %2286 = vmatmul.mubr.bf16.gmra.mrb[0].mxu0 %v1000
        %v2287 = vpop.f32.mrb[0].mxu0
        %v2288 = vadd.f32 %v2075, %v2287
        %v2289 = vpop.f32.mrb[0].mxu0
        %v2290 = vadd.f32 %v2077, %v2289
        %v2291 = vpop.f32.mrb[0].mxu0
        %v2292 = vadd.f32 %v2079, %v2291
        %v2293 = vpop.f32.mrb[0].mxu0
        %v2294 = vadd.f32 %v2081, %v2293
        %2295 = vmatprep.mubr.bf16.mxu0 %v1010
        %2296 = vmatmul.mubr.bf16.gmra.mrb[0].mxu0 %v1009
        %v2297 = vpop.f32.mrb[0].mxu0
        %v2298 = vadd.f32 %v2085, %v2297
        %v2299 = vpop.f32.mrb[0].mxu0
        %v2300 = vadd.f32 %v2087, %v2299
        %v2301 = vpop.f32.mrb[0].mxu0
        %v2302 = vadd.f32 %v2089, %v2301
        %v2303 = vpop.f32.mrb[0].mxu0
        %v2304 = vadd.f32 %v2091, %v2303
        %2305 = vmatprep.mubr.bf16.mxu0 %v1019
        %2306 = vmatmul.mubr.bf16.gmra.mrb[0].mxu0 %v1018
        %v2307 = vpop.f32.mrb[0].mxu0
        %v2308 = vadd.f32 %v2095, %v2307
        %v2309 = vpop.f32.mrb[0].mxu0
        %v2310 = vadd.f32 %v2097, %v2309
        %v2311 = vpop.f32.mrb[0].mxu0
        %v2312 = vadd.f32 %v2099, %v2311
        %v2313 = vpop.f32.mrb[0].mxu0
        %v2314 = vadd.f32 %v2101, %v2313
        %2315 = vmatprep.mubr.bf16.mxu0 %v1028
        %2316 = vmatmul.mubr.bf16.gmra.mrb[0].mxu0 %v1027
        %v2317 = vpop.f32.mrb[0].mxu0
        %v2318 = vadd.f32 %v2105, %v2317
        %v2319 = vpop.f32.mrb[0].mxu0
        %v2320 = vadd.f32 %v2107, %v2319
        %v2321 = vpop.f32.mrb[0].mxu0
        %v2322 = vadd.f32 %v2109, %v2321
        %v2323 = vpop.f32.mrb[0].mxu0
        %v2324 = vadd.f32 %v2111, %v2323
        %2325 = vmatprep.mubr.bf16.mxu0 %v1037
        %2326 = vmatmul.mubr.bf16.gmra.mrb[0].mxu0 %v1036
        %v2327 = vpop.f32.mrb[0].mxu0
        %v2328 = vadd.f32 %v2115, %v2327
        %v2329 = vpop.f32.mrb[0].mxu0
        %v2330 = vadd.f32 %v2117, %v2329
        %v2331 = vpop.f32.mrb[0].mxu0
        %v2332 = vadd.f32 %v2119, %v2331
        %v2333 = vpop.f32.mrb[0].mxu0
        %v2334 = vadd.f32 %v2121, %v2333
        %2335 = vmatprep.mubr.bf16.mxu0 %v1046
        %2336 = vmatmul.mubr.bf16.gmra.mrb[0].mxu0 %v1045
        %v2337 = vpop.f32.mrb[0].mxu0
        %v2338 = vadd.f32 %v2125, %v2337
        %v2339 = vpop.f32.mrb[0].mxu0
        %v2340 = vadd.f32 %v2127, %v2339
        %v2341 = vpop.f32.mrb[0].mxu0
        %v2342 = vadd.f32 %v2129, %v2341
        %v2343 = vpop.f32.mrb[0].mxu0
        %v2344 = vadd.f32 %v2131, %v2343
        %2345 = vmatprep.mubr.bf16.mxu0 %v1055
        %2346 = vmatmul.mubr.bf16.gmra.mrb[0].mxu0 %v1054
        %v2347 = vpop.f32.mrb[0].mxu0
        %v2348 = vadd.f32 %v2135, %v2347
        %v2349 = vpop.f32.mrb[0].mxu0
        %v2350 = vadd.f32 %v2137, %v2349
        %v2351 = vpop.f32.mrb[0].mxu0
        %v2352 = vadd.f32 %v2139, %v2351
        %v2353 = vpop.f32.mrb[0].mxu0
        %v2354 = vadd.f32 %v2141, %v2353
        %2355 = vmatprep.mubr.bf16.mxu0 %v1064
        %2356 = vmatmul.mubr.bf16.gmra.mrb[0].mxu0 %v1063
        %v2357 = vpop.f32.mrb[0].mxu0
        %v2358 = vadd.f32 %v2145, %v2357
        %v2359 = vpop.f32.mrb[0].mxu0
        %v2360 = vadd.f32 %v2147, %v2359
        %v2361 = vpop.f32.mrb[0].mxu0
        %v2362 = vadd.f32 %v2149, %v2361
        %v2363 = vpop.f32.mrb[0].mxu0
        %v2364 = vadd.f32 %v2151, %v2363
        %2365 = vmatprep.mubr.bf16.mxu0 %v1073
        %2366 = vmatmul.mubr.bf16.gmra.mrb[0].mxu0 %v1072
        %v2367 = vpop.f32.mrb[0].mxu0
        %v2368 = vadd.f32 %v2155, %v2367
        %v2369 = vpop.f32.mrb[0].mxu0
        %v2370 = vadd.f32 %v2157, %v2369
        %v2371 = vpop.f32.mrb[0].mxu0
        %v2372 = vadd.f32 %v2159, %v2371
        %v2373 = vpop.f32.mrb[0].mxu0
        %v2374 = vadd.f32 %v2161, %v2373
        %2375 = vmatprep.mubr.bf16.mxu0 %v1082
        %2376 = vmatmul.mubr.bf16.gmra.mrb[0].mxu0 %v1081
        %v2377 = vpop.f32.mrb[0].mxu0
        %v2378 = vadd.f32 %v2165, %v2377
        %v2379 = vpop.f32.mrb[0].mxu0
        %v2380 = vadd.f32 %v2167, %v2379
        %v2381 = vpop.f32.mrb[0].mxu0
        %v2382 = vadd.f32 %v2169, %v2381
        %v2383 = vpop.f32.mrb[0].mxu0
        %v2384 = vadd.f32 %v2171, %v2383
        %2385 = vmatprep.mubr.bf16.mxu0 %v1091
        %2386 = vmatmul.mubr.bf16.gmra.mrb[0].mxu0 %v1090
        %v2387 = vpop.f32.mrb[0].mxu0
        %v2388 = vadd.f32 %v2175, %v2387
        %v2389 = vpop.f32.mrb[0].mxu0
        %v2390 = vadd.f32 %v2177, %v2389
        %v2391 = vpop.f32.mrb[0].mxu0
        %v2392 = vadd.f32 %v2179, %v2391
        %v2393 = vpop.f32.mrb[0].mxu0
        %v2394 = vadd.f32 %v2181, %v2393
        %2395 = vmatprep.mubr.bf16.mxu0 %v1100
        %2396 = vmatmul.mubr.bf16.gmra.mrb[0].mxu0 %v1099
        %v2397 = vpop.f32.mrb[0].mxu0
        %v2398 = vadd.f32 %v2185, %v2397
        %v2399 = vpop.f32.mrb[0].mxu0
        %v2400 = vadd.f32 %v2187, %v2399
        %v2401 = vpop.f32.mrb[0].mxu0
        %v2402 = vadd.f32 %v2189, %v2401
        %v2403 = vpop.f32.mrb[0].mxu0
        %v2404 = vadd.f32 %v2191, %v2403
        %2405 = vmatprep.mubr.bf16.mxu0 %v1109
        %2406 = vmatmul.mubr.bf16.gmra.mrb[0].mxu0 %v1108
        %v2407 = vpop.f32.mrb[0].mxu0
        %v2408 = vadd.f32 %v2195, %v2407
        %v2409 = vpop.f32.mrb[0].mxu0
        %v2410 = vadd.f32 %v2197, %v2409
        %v2411 = vpop.f32.mrb[0].mxu0
        %v2412 = vadd.f32 %v2199, %v2411
        %v2413 = vpop.f32.mrb[0].mxu0
        %v2414 = vadd.f32 %v2201, %v2413
        %2415 = vmatprep.mubr.bf16.mxu0 %v1118
        %2416 = vmatmul.mubr.bf16.gmra.mrb[0].mxu0 %v1117
        %v2417 = vpop.f32.mrb[0].mxu0
        %v2418 = vadd.f32 %v2205, %v2417
        %v2419 = vpop.f32.mrb[0].mxu0
        %v2420 = vadd.f32 %v2207, %v2419
        %v2421 = vpop.f32.mrb[0].mxu0
        %v2422 = vadd.f32 %v2209, %v2421
        %v2423 = vpop.f32.mrb[0].mxu0
        %v2424 = vadd.f32 %v2211, %v2423
        %2425 = vdwg.mxu0
        %2426 = vmatprep.subr.bf16.mxu0 %v1777
        %2427 = vmatpush1.bf16.msra.mxu0 %v1776
        %2428 = vmatprep.subr.bf16.mxu0 %v1779
        %2429 = vmatpush1.bf16.msra.mxu0 %v1778
        %2430 = vmatprep.subr.bf16.mxu0 %v1781
        %2431 = vmatpush1.bf16.msra.mxu0 %v1780
        %2432 = vmatprep.subr.bf16.mxu0 %v1783
        %2433 = vmatpush1.bf16.msra.mxu0 %v1782
        %2434 = vmatprep.subr.bf16.mxu0 %v1785
        %2435 = vmatpush1.bf16.msra.mxu0 %v1784
        %2436 = vmatprep.subr.bf16.mxu0 %v1787
        %2437 = vmatpush1.bf16.msra.mxu0 %v1786
        %2438 = vmatprep.subr.bf16.mxu0 %v1789
        %2439 = vmatpush1.bf16.msra.mxu0 %v1788
        %2440 = vmatprep.subr.bf16.mxu0 %v1791
        %2441 = vmatpush1.bf16.msra.mxu0 %v1790
        %2442 = vmatprep.subr.bf16.mxu0 %v1793
        %2443 = vmatpush1.bf16.msra.mxu0 %v1792
        %2444 = vmatprep.subr.bf16.mxu0 %v1795
        %2445 = vmatpush1.bf16.msra.mxu0 %v1794
        %2446 = vmatprep.subr.bf16.mxu0 %v1797
        %2447 = vmatpush1.bf16.msra.mxu0 %v1796
        %2448 = vmatprep.subr.bf16.mxu0 %v1799
        %2449 = vmatpush1.bf16.msra.mxu0 %v1798
        %2450 = vmatprep.subr.bf16.mxu0 %v1801
        %2451 = vmatpush1.bf16.msra.mxu0 %v1800
        %2452 = vmatprep.subr.bf16.mxu0 %v1803
        %2453 = vmatpush1.bf16.msra.mxu0 %v1802
        %2454 = vmatprep.subr.bf16.mxu0 %v1805
        %2455 = vmatpush1.bf16.msra.mxu0 %v1804
        %2456 = vmatprep.subr.bf16.mxu0 %v1807
        %2457 = vmatpush1.bf16.msra.mxu0 %v1806
        %2458 = vmatprep.mubr.bf16.mxu0 %v967
        %2459 = vmatmul.mubr.bf16.gmra.mrb[0].mxu0 %v966
        %v2460 = vpop.f32.mrb[0].mxu0
        %v2461 = vadd.f32 %v2248, %v2460
        %v2462 = vpop.f32.mrb[0].mxu0
        %v2463 = vadd.f32 %v2250, %v2462
        %v2464 = vpop.f32.mrb[0].mxu0
        %v2465 = vadd.f32 %v2252, %v2464
        %v2466 = vpop.f32.mrb[0].mxu0
        %v2467 = vadd.f32 %v2254, %v2466
        %2468 = vmatprep.mubr.bf16.mxu0 %v976
        %2469 = vmatmul.mubr.bf16.gmra.mrb[0].mxu0 %v975
        %v2470 = vpop.f32.mrb[0].mxu0
        %v2471 = vadd.f32 %v2258, %v2470
        %v2472 = vpop.f32.mrb[0].mxu0
        %v2473 = vadd.f32 %v2260, %v2472
        %v2474 = vpop.f32.mrb[0].mxu0
        %v2475 = vadd.f32 %v2262, %v2474
        %v2476 = vpop.f32.mrb[0].mxu0
        %v2477 = vadd.f32 %v2264, %v2476
        %2478 = vmatprep.mubr.bf16.mxu0 %v985
        %2479 = vmatmul.mubr.bf16.gmra.mrb[0].mxu0 %v984
        %v2480 = vpop.f32.mrb[0].mxu0
        %v2481 = vadd.f32 %v2268, %v2480
        %v2482 = vpop.f32.mrb[0].mxu0
        %v2483 = vadd.f32 %v2270, %v2482
        %v2484 = vpop.f32.mrb[0].mxu0
        %v2485 = vadd.f32 %v2272, %v2484
        %v2486 = vpop.f32.mrb[0].mxu0
        %v2487 = vadd.f32 %v2274, %v2486
        %2488 = vmatprep.mubr.bf16.mxu0 %v994
        %2489 = vmatmul.mubr.bf16.gmra.mrb[0].mxu0 %v993
        %v2490 = vpop.f32.mrb[0].mxu0
        %v2491 = vadd.f32 %v2278, %v2490
        %v2492 = vpop.f32.mrb[0].mxu0
        %v2493 = vadd.f32 %v2280, %v2492
        %v2494 = vpop.f32.mrb[0].mxu0
        %v2495 = vadd.f32 %v2282, %v2494
        %v2496 = vpop.f32.mrb[0].mxu0
        %v2497 = vadd.f32 %v2284, %v2496
        %2498 = vmatprep.mubr.bf16.mxu0 %v1003
        %2499 = vmatmul.mubr.bf16.gmra.mrb[0].mxu0 %v1002
        %v2500 = vpop.f32.mrb[0].mxu0
        %v2501 = vadd.f32 %v2288, %v2500
        %v2502 = vpop.f32.mrb[0].mxu0
        %v2503 = vadd.f32 %v2290, %v2502
        %v2504 = vpop.f32.mrb[0].mxu0
        %v2505 = vadd.f32 %v2292, %v2504
        %v2506 = vpop.f32.mrb[0].mxu0
        %v2507 = vadd.f32 %v2294, %v2506
        %2508 = vmatprep.mubr.bf16.mxu0 %v1012
        %2509 = vmatmul.mubr.bf16.gmra.mrb[0].mxu0 %v1011
        %v2510 = vpop.f32.mrb[0].mxu0
        %v2511 = vadd.f32 %v2298, %v2510
        %v2512 = vpop.f32.mrb[0].mxu0
        %v2513 = vadd.f32 %v2300, %v2512
        %v2514 = vpop.f32.mrb[0].mxu0
        %v2515 = vadd.f32 %v2302, %v2514
        %v2516 = vpop.f32.mrb[0].mxu0
        %v2517 = vadd.f32 %v2304, %v2516
        %2518 = vmatprep.mubr.bf16.mxu0 %v1021
        %2519 = vmatmul.mubr.bf16.gmra.mrb[0].mxu0 %v1020
        %v2520 = vpop.f32.mrb[0].mxu0
        %v2521 = vadd.f32 %v2308, %v2520
        %v2522 = vpop.f32.mrb[0].mxu0
        %v2523 = vadd.f32 %v2310, %v2522
        %v2524 = vpop.f32.mrb[0].mxu0
        %v2525 = vadd.f32 %v2312, %v2524
        %v2526 = vpop.f32.mrb[0].mxu0
        %v2527 = vadd.f32 %v2314, %v2526
        %2528 = vmatprep.mubr.bf16.mxu0 %v1030
        %2529 = vmatmul.mubr.bf16.gmra.mrb[0].mxu0 %v1029
        %v2530 = vpop.f32.mrb[0].mxu0
        %v2531 = vadd.f32 %v2318, %v2530
        %v2532 = vpop.f32.mrb[0].mxu0
        %v2533 = vadd.f32 %v2320, %v2532
        %v2534 = vpop.f32.mrb[0].mxu0
        %v2535 = vadd.f32 %v2322, %v2534
        %v2536 = vpop.f32.mrb[0].mxu0
        %v2537 = vadd.f32 %v2324, %v2536
        %2538 = vmatprep.mubr.bf16.mxu0 %v1039
        %2539 = vmatmul.mubr.bf16.gmra.mrb[0].mxu0 %v1038
        %v2540 = vpop.f32.mrb[0].mxu0
        %v2541 = vadd.f32 %v2328, %v2540
        %v2542 = vpop.f32.mrb[0].mxu0
        %v2543 = vadd.f32 %v2330, %v2542
        %v2544 = vpop.f32.mrb[0].mxu0
        %v2545 = vadd.f32 %v2332, %v2544
        %v2546 = vpop.f32.mrb[0].mxu0
        %v2547 = vadd.f32 %v2334, %v2546
        %2548 = vmatprep.mubr.bf16.mxu0 %v1048
        %2549 = vmatmul.mubr.bf16.gmra.mrb[0].mxu0 %v1047
        %v2550 = vpop.f32.mrb[0].mxu0
        %v2551 = vadd.f32 %v2338, %v2550
        %v2552 = vpop.f32.mrb[0].mxu0
        %v2553 = vadd.f32 %v2340, %v2552
        %v2554 = vpop.f32.mrb[0].mxu0
        %v2555 = vadd.f32 %v2342, %v2554
        %v2556 = vpop.f32.mrb[0].mxu0
        %v2557 = vadd.f32 %v2344, %v2556
        %2558 = vmatprep.mubr.bf16.mxu0 %v1057
        %2559 = vmatmul.mubr.bf16.gmra.mrb[0].mxu0 %v1056
        %v2560 = vpop.f32.mrb[0].mxu0
        %v2561 = vadd.f32 %v2348, %v2560
        %v2562 = vpop.f32.mrb[0].mxu0
        %v2563 = vadd.f32 %v2350, %v2562
        %v2564 = vpop.f32.mrb[0].mxu0
        %v2565 = vadd.f32 %v2352, %v2564
        %v2566 = vpop.f32.mrb[0].mxu0
        %v2567 = vadd.f32 %v2354, %v2566
        %2568 = vmatprep.mubr.bf16.mxu0 %v1066
        %2569 = vmatmul.mubr.bf16.gmra.mrb[0].mxu0 %v1065
        %v2570 = vpop.f32.mrb[0].mxu0
        %v2571 = vadd.f32 %v2358, %v2570
        %v2572 = vpop.f32.mrb[0].mxu0
        %v2573 = vadd.f32 %v2360, %v2572
        %v2574 = vpop.f32.mrb[0].mxu0
        %v2575 = vadd.f32 %v2362, %v2574
        %v2576 = vpop.f32.mrb[0].mxu0
        %v2577 = vadd.f32 %v2364, %v2576
        %2578 = vmatprep.mubr.bf16.mxu0 %v1075
        %2579 = vmatmul.mubr.bf16.gmra.mrb[0].mxu0 %v1074
        %v2580 = vpop.f32.mrb[0].mxu0
        %v2581 = vadd.f32 %v2368, %v2580
        %v2582 = vpop.f32.mrb[0].mxu0
        %v2583 = vadd.f32 %v2370, %v2582
        %v2584 = vpop.f32.mrb[0].mxu0
        %v2585 = vadd.f32 %v2372, %v2584
        %v2586 = vpop.f32.mrb[0].mxu0
        %v2587 = vadd.f32 %v2374, %v2586
        %2588 = vmatprep.mubr.bf16.mxu0 %v1084
        %2589 = vmatmul.mubr.bf16.gmra.mrb[0].mxu0 %v1083
        %v2590 = vpop.f32.mrb[0].mxu0
        %v2591 = vadd.f32 %v2378, %v2590
        %v2592 = vpop.f32.mrb[0].mxu0
        %v2593 = vadd.f32 %v2380, %v2592
        %v2594 = vpop.f32.mrb[0].mxu0
        %v2595 = vadd.f32 %v2382, %v2594
        %v2596 = vpop.f32.mrb[0].mxu0
        %v2597 = vadd.f32 %v2384, %v2596
        %2598 = vmatprep.mubr.bf16.mxu0 %v1093
        %2599 = vmatmul.mubr.bf16.gmra.mrb[0].mxu0 %v1092
        %v2600 = vpop.f32.mrb[0].mxu0
        %v2601 = vadd.f32 %v2388, %v2600
        %v2602 = vpop.f32.mrb[0].mxu0
        %v2603 = vadd.f32 %v2390, %v2602
        %v2604 = vpop.f32.mrb[0].mxu0
        %v2605 = vadd.f32 %v2392, %v2604
        %v2606 = vpop.f32.mrb[0].mxu0
        %v2607 = vadd.f32 %v2394, %v2606
        %2608 = vmatprep.mubr.bf16.mxu0 %v1102
        %2609 = vmatmul.mubr.bf16.gmra.mrb[0].mxu0 %v1101
        %v2610 = vpop.f32.mrb[0].mxu0
        %v2611 = vadd.f32 %v2398, %v2610
        %v2612 = vpop.f32.mrb[0].mxu0
        %v2613 = vadd.f32 %v2400, %v2612
        %v2614 = vpop.f32.mrb[0].mxu0
        %v2615 = vadd.f32 %v2402, %v2614
        %v2616 = vpop.f32.mrb[0].mxu0
        %v2617 = vadd.f32 %v2404, %v2616
        %2618 = vmatprep.mubr.bf16.mxu0 %v1111
        %2619 = vmatmul.mubr.bf16.gmra.mrb[0].mxu0 %v1110
        %v2620 = vpop.f32.mrb[0].mxu0
        %v2621 = vadd.f32 %v2408, %v2620
        %v2622 = vpop.f32.mrb[0].mxu0
        %v2623 = vadd.f32 %v2410, %v2622
        %v2624 = vpop.f32.mrb[0].mxu0
        %v2625 = vadd.f32 %v2412, %v2624
        %v2626 = vpop.f32.mrb[0].mxu0
        %v2627 = vadd.f32 %v2414, %v2626
        %2628 = vmatprep.mubr.bf16.mxu0 %v1120
        %2629 = vmatmul.mubr.bf16.gmra.mrb[0].mxu0 %v1119
        %v2630 = vpop.f32.mrb[0].mxu0
        %v2631 = vadd.f32 %v2418, %v2630
        %v2632 = vpop.f32.mrb[0].mxu0
        %v2633 = vadd.f32 %v2420, %v2632
        %v2634 = vpop.f32.mrb[0].mxu0
        %v2635 = vadd.f32 %v2422, %v2634
        %v2636 = vpop.f32.mrb[0].mxu0
        %v2637 = vadd.f32 %v2424, %v2636
        %2638 = vdwg.mxu0
        %2639 = vmatprep.subr.bf16.mxu0 %v1809
        %2640 = vmatpush1.bf16.msra.mxu0 %v1808
        %2641 = vmatprep.subr.bf16.mxu0 %v1811
        %2642 = vmatpush1.bf16.msra.mxu0 %v1810
        %2643 = vmatprep.subr.bf16.mxu0 %v1813
        %2644 = vmatpush1.bf16.msra.mxu0 %v1812
        %2645 = vmatprep.subr.bf16.mxu0 %v1815
        %2646 = vmatpush1.bf16.msra.mxu0 %v1814
        %2647 = vmatprep.subr.bf16.mxu0 %v1817
        %2648 = vmatpush1.bf16.msra.mxu0 %v1816
        %2649 = vmatprep.subr.bf16.mxu0 %v1819
        %2650 = vmatpush1.bf16.msra.mxu0 %v1818
        %2651 = vmatprep.subr.bf16.mxu0 %v1821
        %2652 = vmatpush1.bf16.msra.mxu0 %v1820
        %2653 = vmatprep.subr.bf16.mxu0 %v1823
        %2654 = vmatpush1.bf16.msra.mxu0 %v1822
        %2655 = vmatprep.subr.bf16.mxu0 %v1825
        %2656 = vmatpush1.bf16.msra.mxu0 %v1824
        %2657 = vmatprep.subr.bf16.mxu0 %v1827
        %2658 = vmatpush1.bf16.msra.mxu0 %v1826
        %2659 = vmatprep.subr.bf16.mxu0 %v1829
        %2660 = vmatpush1.bf16.msra.mxu0 %v1828
        %2661 = vmatprep.subr.bf16.mxu0 %v1831
        %2662 = vmatpush1.bf16.msra.mxu0 %v1830
        %2663 = vmatprep.subr.bf16.mxu0 %v1833
        %2664 = vmatpush1.bf16.msra.mxu0 %v1832
        %2665 = vmatprep.subr.bf16.mxu0 %v1835
        %2666 = vmatpush1.bf16.msra.mxu0 %v1834
        %2667 = vmatprep.subr.bf16.mxu0 %v1837
        %2668 = vmatpush1.bf16.msra.mxu0 %v1836
        %2669 = vmatprep.subr.bf16.mxu0 %v1839
        %2670 = vmatpush1.bf16.msra.mxu0 %v1838
        %2671 = vmatprep.mubr.bf16.mxu0 %v969
        %2672 = vmatmul.mubr.bf16.gmra.mrb[0].mxu0 %v968
        %v2673 = vpop.f32.mrb[0].mxu0
        %v2674 = vadd.f32 %v2461, %v2673
        %v2675 = vpop.f32.mrb[0].mxu0
        %v2676 = vadd.f32 %v2463, %v2675
        %v2677 = vpop.f32.mrb[0].mxu0
        %v2678 = vadd.f32 %v2465, %v2677
        %v2679 = vpop.f32.mrb[0].mxu0
        %v2680 = vadd.f32 %v2467, %v2679
        %2681 = vmatprep.mubr.bf16.mxu0 %v978
        %2682 = vmatmul.mubr.bf16.gmra.mrb[0].mxu0 %v977
        %v2683 = vpop.f32.mrb[0].mxu0
        %v2684 = vadd.f32 %v2471, %v2683
        %v2685 = vpop.f32.mrb[0].mxu0
        %v2686 = vadd.f32 %v2473, %v2685
        %v2687 = vpop.f32.mrb[0].mxu0
        %v2688 = vadd.f32 %v2475, %v2687
        %v2689 = vpop.f32.mrb[0].mxu0
        %v2690 = vadd.f32 %v2477, %v2689
        %2691 = vmatprep.mubr.bf16.mxu0 %v987
        %2692 = vmatmul.mubr.bf16.gmra.mrb[0].mxu0 %v986
        %v2693 = vpop.f32.mrb[0].mxu0
        %v2694 = vadd.f32 %v2481, %v2693
        %v2695 = vpop.f32.mrb[0].mxu0
        %v2696 = vadd.f32 %v2483, %v2695
        %v2697 = vpop.f32.mrb[0].mxu0
        %v2698 = vadd.f32 %v2485, %v2697
        %v2699 = vpop.f32.mrb[0].mxu0
        %v2700 = vadd.f32 %v2487, %v2699
        %2701 = vmatprep.mubr.bf16.mxu0 %v996
        %2702 = vmatmul.mubr.bf16.gmra.mrb[0].mxu0 %v995
        %v2703 = vpop.f32.mrb[0].mxu0
        %v2704 = vadd.f32 %v2491, %v2703
        %v2705 = vpop.f32.mrb[0].mxu0
        %v2706 = vadd.f32 %v2493, %v2705
        %v2707 = vpop.f32.mrb[0].mxu0
        %v2708 = vadd.f32 %v2495, %v2707
        %v2709 = vpop.f32.mrb[0].mxu0
        %v2710 = vadd.f32 %v2497, %v2709
        %2711 = vmatprep.mubr.bf16.mxu0 %v1005
        %2712 = vmatmul.mubr.bf16.gmra.mrb[0].mxu0 %v1004
        %v2713 = vpop.f32.mrb[0].mxu0
        %v2714 = vadd.f32 %v2501, %v2713
        %v2715 = vpop.f32.mrb[0].mxu0
        %v2716 = vadd.f32 %v2503, %v2715
        %v2717 = vpop.f32.mrb[0].mxu0
        %v2718 = vadd.f32 %v2505, %v2717
        %v2719 = vpop.f32.mrb[0].mxu0
        %v2720 = vadd.f32 %v2507, %v2719
        %2721 = vmatprep.mubr.bf16.mxu0 %v1014
        %2722 = vmatmul.mubr.bf16.gmra.mrb[0].mxu0 %v1013
        %v2723 = vpop.f32.mrb[0].mxu0
        %v2724 = vadd.f32 %v2511, %v2723
        %v2725 = vpop.f32.mrb[0].mxu0
        %v2726 = vadd.f32 %v2513, %v2725
        %v2727 = vpop.f32.mrb[0].mxu0
        %v2728 = vadd.f32 %v2515, %v2727
        %v2729 = vpop.f32.mrb[0].mxu0
        %v2730 = vadd.f32 %v2517, %v2729
        %2731 = vmatprep.mubr.bf16.mxu0 %v1023
        %2732 = vmatmul.mubr.bf16.gmra.mrb[0].mxu0 %v1022
        %v2733 = vpop.f32.mrb[0].mxu0
        %v2734 = vadd.f32 %v2521, %v2733
        %v2735 = vpop.f32.mrb[0].mxu0
        %v2736 = vadd.f32 %v2523, %v2735
        %v2737 = vpop.f32.mrb[0].mxu0
        %v2738 = vadd.f32 %v2525, %v2737
        %v2739 = vpop.f32.mrb[0].mxu0
        %v2740 = vadd.f32 %v2527, %v2739
        %2741 = vmatprep.mubr.bf16.mxu0 %v1032
        %2742 = vmatmul.mubr.bf16.gmra.mrb[0].mxu0 %v1031
        %v2743 = vpop.f32.mrb[0].mxu0
        %v2744 = vadd.f32 %v2531, %v2743
        %v2745 = vpop.f32.mrb[0].mxu0
        %v2746 = vadd.f32 %v2533, %v2745
        %v2747 = vpop.f32.mrb[0].mxu0
        %v2748 = vadd.f32 %v2535, %v2747
        %v2749 = vpop.f32.mrb[0].mxu0
        %v2750 = vadd.f32 %v2537, %v2749
        %2751 = vmatprep.mubr.bf16.mxu0 %v1041
        %2752 = vmatmul.mubr.bf16.gmra.mrb[0].mxu0 %v1040
        %v2753 = vpop.f32.mrb[0].mxu0
        %v2754 = vadd.f32 %v2541, %v2753
        %v2755 = vpop.f32.mrb[0].mxu0
        %v2756 = vadd.f32 %v2543, %v2755
        %v2757 = vpop.f32.mrb[0].mxu0
        %v2758 = vadd.f32 %v2545, %v2757
        %v2759 = vpop.f32.mrb[0].mxu0
        %v2760 = vadd.f32 %v2547, %v2759
        %2761 = vmatprep.mubr.bf16.mxu0 %v1050
        %2762 = vmatmul.mubr.bf16.gmra.mrb[0].mxu0 %v1049
        %v2763 = vpop.f32.mrb[0].mxu0
        %v2764 = vadd.f32 %v2551, %v2763
        %v2765 = vpop.f32.mrb[0].mxu0
        %v2766 = vadd.f32 %v2553, %v2765
        %v2767 = vpop.f32.mrb[0].mxu0
        %v2768 = vadd.f32 %v2555, %v2767
        %v2769 = vpop.f32.mrb[0].mxu0
        %v2770 = vadd.f32 %v2557, %v2769
        %2771 = vmatprep.mubr.bf16.mxu0 %v1059
        %2772 = vmatmul.mubr.bf16.gmra.mrb[0].mxu0 %v1058
        %v2773 = vpop.f32.mrb[0].mxu0
        %v2774 = vadd.f32 %v2561, %v2773
        %v2775 = vpop.f32.mrb[0].mxu0
        %v2776 = vadd.f32 %v2563, %v2775
        %v2777 = vpop.f32.mrb[0].mxu0
        %v2778 = vadd.f32 %v2565, %v2777
        %v2779 = vpop.f32.mrb[0].mxu0
        %v2780 = vadd.f32 %v2567, %v2779
        %2781 = vmatprep.mubr.bf16.mxu0 %v1068
        %2782 = vmatmul.mubr.bf16.gmra.mrb[0].mxu0 %v1067
        %v2783 = vpop.f32.mrb[0].mxu0
        %v2784 = vadd.f32 %v2571, %v2783
        %v2785 = vpop.f32.mrb[0].mxu0
        %v2786 = vadd.f32 %v2573, %v2785
        %v2787 = vpop.f32.mrb[0].mxu0
        %v2788 = vadd.f32 %v2575, %v2787
        %v2789 = vpop.f32.mrb[0].mxu0
        %v2790 = vadd.f32 %v2577, %v2789
        %2791 = vmatprep.mubr.bf16.mxu0 %v1077
        %2792 = vmatmul.mubr.bf16.gmra.mrb[0].mxu0 %v1076
        %v2793 = vpop.f32.mrb[0].mxu0
        %v2794 = vadd.f32 %v2581, %v2793
        %v2795 = vpop.f32.mrb[0].mxu0
        %v2796 = vadd.f32 %v2583, %v2795
        %v2797 = vpop.f32.mrb[0].mxu0
        %v2798 = vadd.f32 %v2585, %v2797
        %v2799 = vpop.f32.mrb[0].mxu0
        %v2800 = vadd.f32 %v2587, %v2799
        %2801 = vmatprep.mubr.bf16.mxu0 %v1086
        %2802 = vmatmul.mubr.bf16.gmra.mrb[0].mxu0 %v1085
        %v2803 = vpop.f32.mrb[0].mxu0
        %v2804 = vadd.f32 %v2591, %v2803
        %v2805 = vpop.f32.mrb[0].mxu0
        %v2806 = vadd.f32 %v2593, %v2805
        %v2807 = vpop.f32.mrb[0].mxu0
        %v2808 = vadd.f32 %v2595, %v2807
        %v2809 = vpop.f32.mrb[0].mxu0
        %v2810 = vadd.f32 %v2597, %v2809
        %2811 = vmatprep.mubr.bf16.mxu0 %v1095
        %2812 = vmatmul.mubr.bf16.gmra.mrb[0].mxu0 %v1094
        %v2813 = vpop.f32.mrb[0].mxu0
        %v2814 = vadd.f32 %v2601, %v2813
        %v2815 = vpop.f32.mrb[0].mxu0
        %v2816 = vadd.f32 %v2603, %v2815
        %v2817 = vpop.f32.mrb[0].mxu0
        %v2818 = vadd.f32 %v2605, %v2817
        %v2819 = vpop.f32.mrb[0].mxu0
        %v2820 = vadd.f32 %v2607, %v2819
        %2821 = vmatprep.mubr.bf16.mxu0 %v1104
        %2822 = vmatmul.mubr.bf16.gmra.mrb[0].mxu0 %v1103
        %v2823 = vpop.f32.mrb[0].mxu0
        %v2824 = vadd.f32 %v2611, %v2823
        %v2825 = vpop.f32.mrb[0].mxu0
        %v2826 = vadd.f32 %v2613, %v2825
        %v2827 = vpop.f32.mrb[0].mxu0
        %v2828 = vadd.f32 %v2615, %v2827
        %v2829 = vpop.f32.mrb[0].mxu0
        %v2830 = vadd.f32 %v2617, %v2829
        %2831 = vmatprep.mubr.bf16.mxu0 %v1113
        %2832 = vmatmul.mubr.bf16.gmra.mrb[0].mxu0 %v1112
        %v2833 = vpop.f32.mrb[0].mxu0
        %v2834 = vadd.f32 %v2621, %v2833
        %v2835 = vpop.f32.mrb[0].mxu0
        %v2836 = vadd.f32 %v2623, %v2835
        %v2837 = vpop.f32.mrb[0].mxu0
        %v2838 = vadd.f32 %v2625, %v2837
        %v2839 = vpop.f32.mrb[0].mxu0
        %v2840 = vadd.f32 %v2627, %v2839
        %2841 = vmatprep.mubr.bf16.mxu0 %v1122
        %2842 = vmatmul.mubr.bf16.gmra.mrb[0].mxu0 %v1121
        %v2843 = vpop.f32.mrb[0].mxu0
        %v2844 = vadd.f32 %v2631, %v2843
        %v2845 = vpop.f32.mrb[0].mxu0
        %v2846 = vadd.f32 %v2633, %v2845
        %v2847 = vpop.f32.mrb[0].mxu0
        %v2848 = vadd.f32 %v2635, %v2847
        %v2849 = vpop.f32.mrb[0].mxu0
        %v2850 = vadd.f32 %v2637, %v2849
        %2851 = vdwg.mxu0
        %2852 = vmatprep.subr.bf16.mxu0 %v1841
        %2853 = vmatpush1.bf16.msra.mxu0 %v1840
        %2854 = vmatprep.subr.bf16.mxu0 %v1843
        %2855 = vmatpush1.bf16.msra.mxu0 %v1842
        %2856 = vmatprep.subr.bf16.mxu0 %v1845
        %2857 = vmatpush1.bf16.msra.mxu0 %v1844
        %2858 = vmatprep.subr.bf16.mxu0 %v1847
        %2859 = vmatpush1.bf16.msra.mxu0 %v1846
        %2860 = vmatprep.subr.bf16.mxu0 %v1849
        %2861 = vmatpush1.bf16.msra.mxu0 %v1848
        %2862 = vmatprep.subr.bf16.mxu0 %v1851
        %2863 = vmatpush1.bf16.msra.mxu0 %v1850
        %2864 = vmatprep.subr.bf16.mxu0 %v1853
        %2865 = vmatpush1.bf16.msra.mxu0 %v1852
        %2866 = vmatprep.subr.bf16.mxu0 %v1855
        %2867 = vmatpush1.bf16.msra.mxu0 %v1854
        %2868 = vmatprep.subr.bf16.mxu0 0
        %2869 = vmatpush1.bf16.msra.mxu0 0
        %2870 = vmatprep.subr.bf16.mxu0 0
        %2871 = vmatpush1.bf16.msra.mxu0 0
        %2872 = vmatprep.subr.bf16.mxu0 0
        %2873 = vmatpush1.bf16.msra.mxu0 0
        %2874 = vmatprep.subr.bf16.mxu0 0
        %2875 = vmatpush1.bf16.msra.mxu0 0
        %2876 = vmatprep.subr.bf16.mxu0 0
        %2877 = vmatpush1.bf16.msra.mxu0 0
        %2878 = vmatprep.subr.bf16.mxu0 0
        %2879 = vmatpush1.bf16.msra.mxu0 0
        %2880 = vmatprep.subr.bf16.mxu0 0
        %2881 = vmatpush1.bf16.msra.mxu0 0
        %2882 = vmatprep.subr.bf16.mxu0 0
        %2883 = vmatpush1.bf16.msra.mxu0 0
        %2884 = vmatprep.mubr.bf16.mxu0 0
        %2885 = vmatmul.mubr.bf16.gmra.mrb[0].mxu0 %v970
        %v2886 = vpop.f32.mrb[0].mxu0
        %v2887 = vadd.f32 %v2674, %v2886
        %v2888 = vpop.f32.mrb[0].mxu0
        %v2889 = vadd.f32 %v2676, %v2888
        %v2890 = vpop.f32.mrb[0].mxu0
        %v2891 = vadd.f32 %v2678, %v2890
        %v2892 = vpop.f32.mrb[0].mxu0
        %v2893 = vadd.f32 %v2680, %v2892
        %2894 = vmatprep.mubr.bf16.mxu0 0
        %2895 = vmatmul.mubr.bf16.gmra.mrb[0].mxu0 %v979
        %v2896 = vpop.f32.mrb[0].mxu0
        %v2897 = vadd.f32 %v2684, %v2896
        %v2898 = vpop.f32.mrb[0].mxu0
        %v2899 = vadd.f32 %v2686, %v2898
        %v2900 = vpop.f32.mrb[0].mxu0
        %v2901 = vadd.f32 %v2688, %v2900
        %v2902 = vpop.f32.mrb[0].mxu0
        %v2903 = vadd.f32 %v2690, %v2902
        %2904 = vmatprep.mubr.bf16.mxu0 0
        %2905 = vmatmul.mubr.bf16.gmra.mrb[0].mxu0 %v988
        %v2906 = vpop.f32.mrb[0].mxu0
        %v2907 = vadd.f32 %v2694, %v2906
        %v2908 = vpop.f32.mrb[0].mxu0
        %v2909 = vadd.f32 %v2696, %v2908
        %v2910 = vpop.f32.mrb[0].mxu0
        %v2911 = vadd.f32 %v2698, %v2910
        %v2912 = vpop.f32.mrb[0].mxu0
        %v2913 = vadd.f32 %v2700, %v2912
        %2914 = vmatprep.mubr.bf16.mxu0 0
        %2915 = vmatmul.mubr.bf16.gmra.mrb[0].mxu0 %v997
        %v2916 = vpop.f32.mrb[0].mxu0
        %v2917 = vadd.f32 %v2704, %v2916
        %v2918 = vpop.f32.mrb[0].mxu0
        %v2919 = vadd.f32 %v2706, %v2918
        %v2920 = vpop.f32.mrb[0].mxu0
        %v2921 = vadd.f32 %v2708, %v2920
        %v2922 = vpop.f32.mrb[0].mxu0
        %v2923 = vadd.f32 %v2710, %v2922
        %2924 = vmatprep.mubr.bf16.mxu0 0
        %2925 = vmatmul.mubr.bf16.gmra.mrb[0].mxu0 %v1006
        %v2926 = vpop.f32.mrb[0].mxu0
        %v2927 = vadd.f32 %v2714, %v2926
        %v2928 = vpop.f32.mrb[0].mxu0
        %v2929 = vadd.f32 %v2716, %v2928
        %v2930 = vpop.f32.mrb[0].mxu0
        %v2931 = vadd.f32 %v2718, %v2930
        %v2932 = vpop.f32.mrb[0].mxu0
        %v2933 = vadd.f32 %v2720, %v2932
        %2934 = vmatprep.mubr.bf16.mxu0 0
        %2935 = vmatmul.mubr.bf16.gmra.mrb[0].mxu0 %v1015
        %v2936 = vpop.f32.mrb[0].mxu0
        %v2937 = vadd.f32 %v2724, %v2936
        %v2938 = vpop.f32.mrb[0].mxu0
        %v2939 = vadd.f32 %v2726, %v2938
        %v2940 = vpop.f32.mrb[0].mxu0
        %v2941 = vadd.f32 %v2728, %v2940
        %v2942 = vpop.f32.mrb[0].mxu0
        %v2943 = vadd.f32 %v2730, %v2942
        %2944 = vmatprep.mubr.bf16.mxu0 0
        %2945 = vmatmul.mubr.bf16.gmra.mrb[0].mxu0 %v1024
        %v2946 = vpop.f32.mrb[0].mxu0
        %v2947 = vadd.f32 %v2734, %v2946
        %v2948 = vpop.f32.mrb[0].mxu0
        %v2949 = vadd.f32 %v2736, %v2948
        %v2950 = vpop.f32.mrb[0].mxu0
        %v2951 = vadd.f32 %v2738, %v2950
        %v2952 = vpop.f32.mrb[0].mxu0
        %v2953 = vadd.f32 %v2740, %v2952
        %2954 = vmatprep.mubr.bf16.mxu0 0
        %2955 = vmatmul.mubr.bf16.gmra.mrb[0].mxu0 %v1033
        %v2956 = vpop.f32.mrb[0].mxu0
        %v2957 = vadd.f32 %v2744, %v2956
        %v2958 = vpop.f32.mrb[0].mxu0
        %v2959 = vadd.f32 %v2746, %v2958
        %v2960 = vpop.f32.mrb[0].mxu0
        %v2961 = vadd.f32 %v2748, %v2960
        %v2962 = vpop.f32.mrb[0].mxu0
        %v2963 = vadd.f32 %v2750, %v2962
        %2964 = vmatprep.mubr.bf16.mxu0 0
        %2965 = vmatmul.mubr.bf16.gmra.mrb[0].mxu0 %v1042
        %v2966 = vpop.f32.mrb[0].mxu0
        %v2967 = vadd.f32 %v2754, %v2966
        %v2968 = vpop.f32.mrb[0].mxu0
        %v2969 = vadd.f32 %v2756, %v2968
        %v2970 = vpop.f32.mrb[0].mxu0
        %v2971 = vadd.f32 %v2758, %v2970
        %v2972 = vpop.f32.mrb[0].mxu0
        %v2973 = vadd.f32 %v2760, %v2972
        %2974 = vmatprep.mubr.bf16.mxu0 0
        %2975 = vmatmul.mubr.bf16.gmra.mrb[0].mxu0 %v1051
        %v2976 = vpop.f32.mrb[0].mxu0
        %v2977 = vadd.f32 %v2764, %v2976
        %v2978 = vpop.f32.mrb[0].mxu0
        %v2979 = vadd.f32 %v2766, %v2978
        %v2980 = vpop.f32.mrb[0].mxu0
        %v2981 = vadd.f32 %v2768, %v2980
        %v2982 = vpop.f32.mrb[0].mxu0
        %v2983 = vadd.f32 %v2770, %v2982
        %2984 = vmatprep.mubr.bf16.mxu0 0
        %2985 = vmatmul.mubr.bf16.gmra.mrb[0].mxu0 %v1060
        %v2986 = vpop.f32.mrb[0].mxu0
        %v2987 = vadd.f32 %v2774, %v2986
        %v2988 = vpop.f32.mrb[0].mxu0
        %v2989 = vadd.f32 %v2776, %v2988
        %v2990 = vpop.f32.mrb[0].mxu0
        %v2991 = vadd.f32 %v2778, %v2990
        %v2992 = vpop.f32.mrb[0].mxu0
        %v2993 = vadd.f32 %v2780, %v2992
        %2994 = vmatprep.mubr.bf16.mxu0 0
        %2995 = vmatmul.mubr.bf16.gmra.mrb[0].mxu0 %v1069
        %v2996 = vpop.f32.mrb[0].mxu0
        %v2997 = vadd.f32 %v2784, %v2996
        %v2998 = vpop.f32.mrb[0].mxu0
        %v2999 = vadd.f32 %v2786, %v2998
        %v3000 = vpop.f32.mrb[0].mxu0
        %v3001 = vadd.f32 %v2788, %v3000
        %v3002 = vpop.f32.mrb[0].mxu0
        %v3003 = vadd.f32 %v2790, %v3002
        %3004 = vmatprep.mubr.bf16.mxu0 0
        %3005 = vmatmul.mubr.bf16.gmra.mrb[0].mxu0 %v1078
        %v3006 = vpop.f32.mrb[0].mxu0
        %v3007 = vadd.f32 %v2794, %v3006
        %v3008 = vpop.f32.mrb[0].mxu0
        %v3009 = vadd.f32 %v2796, %v3008
        %v3010 = vpop.f32.mrb[0].mxu0
        %v3011 = vadd.f32 %v2798, %v3010
        %v3012 = vpop.f32.mrb[0].mxu0
        %v3013 = vadd.f32 %v2800, %v3012
        %3014 = vmatprep.mubr.bf16.mxu0 0
        %3015 = vmatmul.mubr.bf16.gmra.mrb[0].mxu0 %v1087
        %v3016 = vpop.f32.mrb[0].mxu0
        %v3017 = vadd.f32 %v2804, %v3016
        %v3018 = vpop.f32.mrb[0].mxu0
        %v3019 = vadd.f32 %v2806, %v3018
        %v3020 = vpop.f32.mrb[0].mxu0
        %v3021 = vadd.f32 %v2808, %v3020
        %v3022 = vpop.f32.mrb[0].mxu0
        %v3023 = vadd.f32 %v2810, %v3022
        %3024 = vmatprep.mubr.bf16.mxu0 0
        %3025 = vmatmul.mubr.bf16.gmra.mrb[0].mxu0 %v1096
        %v3026 = vpop.f32.mrb[0].mxu0
        %v3027 = vadd.f32 %v2814, %v3026
        %v3028 = vpop.f32.mrb[0].mxu0
        %v3029 = vadd.f32 %v2816, %v3028
        %v3030 = vpop.f32.mrb[0].mxu0
        %v3031 = vadd.f32 %v2818, %v3030
        %v3032 = vpop.f32.mrb[0].mxu0
        %v3033 = vadd.f32 %v2820, %v3032
        %3034 = vmatprep.mubr.bf16.mxu0 0
        %3035 = vmatmul.mubr.bf16.gmra.mrb[0].mxu0 %v1105
        %v3036 = vpop.f32.mrb[0].mxu0
        %v3037 = vadd.f32 %v2824, %v3036
        %v3038 = vpop.f32.mrb[0].mxu0
        %v3039 = vadd.f32 %v2826, %v3038
        %v3040 = vpop.f32.mrb[0].mxu0
        %v3041 = vadd.f32 %v2828, %v3040
        %v3042 = vpop.f32.mrb[0].mxu0
        %v3043 = vadd.f32 %v2830, %v3042
        %3044 = vmatprep.mubr.bf16.mxu0 0
        %3045 = vmatmul.mubr.bf16.gmra.mrb[0].mxu0 %v1114
        %v3046 = vpop.f32.mrb[0].mxu0
        %v3047 = vadd.f32 %v2834, %v3046
        %v3048 = vpop.f32.mrb[0].mxu0
        %v3049 = vadd.f32 %v2836, %v3048
        %v3050 = vpop.f32.mrb[0].mxu0
        %v3051 = vadd.f32 %v2838, %v3050
        %v3052 = vpop.f32.mrb[0].mxu0
        %v3053 = vadd.f32 %v2840, %v3052
        %3054 = vmatprep.mubr.bf16.mxu0 0
        %3055 = vmatmul.mubr.bf16.gmra.mrb[0].mxu0 %v1123
        %v3056 = vpop.f32.mrb[0].mxu0
        %v3057 = vadd.f32 %v2844, %v3056
        %v3058 = vpop.f32.mrb[0].mxu0
        %v3059 = vadd.f32 %v2846, %v3058
        %v3060 = vpop.f32.mrb[0].mxu0
        %v3061 = vadd.f32 %v2848, %v3060
        %v3062 = vpop.f32.mrb[0].mxu0
        %v3063 = vadd.f32 %v2850, %v3062
        %3064 = vdwg.mxu0
        %v3065 = vmul.f32 %v2887, 0.5
        %v3066 = vmul.f32 %v2889, 0.5
        %v3067 = vmul.f32 %v2891, 0.5
        %v3068 = vmul.f32 %v2893, 0.5
        %v3069 = vmul.f32 %v2897, 0.5
        %v3070 = vmul.f32 %v2899, 0.5
        %v3071 = vmul.f32 %v2901, 0.5
        %v3072 = vmul.f32 %v2903, 0.5
        %v3073 = vmul.f32 %v2907, 0.5
        %v3074 = vmul.f32 %v2909, 0.5
        %v3075 = vmul.f32 %v2911, 0.5
        %v3076 = vmul.f32 %v2913, 0.5
        %v3077 = vmul.f32 %v2917, 0.5
        %v3078 = vmul.f32 %v2919, 0.5
        %v3079 = vmul.f32 %v2921, 0.5
        %v3080 = vmul.f32 %v2923, 0.5
        %v3081 = vmul.f32 %v2927, 0.5
        %v3082 = vmul.f32 %v2929, 0.5
        %v3083 = vmul.f32 %v2931, 0.5
        %v3084 = vmul.f32 %v2933, 0.5
        %v3085 = vmul.f32 %v2937, 0.5
        %v3086 = vmul.f32 %v2939, 0.5
        %v3087 = vmul.f32 %v2941, 0.5
        %v3088 = vmul.f32 %v2943, 0.5
        %v3089 = vmul.f32 %v2947, 0.5
        %v3090 = vmul.f32 %v2949, 0.5
        %v3091 = vmul.f32 %v2951, 0.5
        %v3092 = vmul.f32 %v2953, 0.5
        %v3093 = vmul.f32 %v2957, 0.5
        %v3094 = vmul.f32 %v2959, 0.5
        %v3095 = vmul.f32 %v2961, 0.5
        %v3096 = vmul.f32 %v2963, 0.5
        %v3097 = vmul.f32 %v2967, 0.5
        %v3098 = vmul.f32 %v2969, 0.5
        %v3099 = vmul.f32 %v2971, 0.5
        %v3100 = vmul.f32 %v2973, 0.5
        %v3101 = vmul.f32 %v2977, 0.5
        %v3102 = vmul.f32 %v2979, 0.5
        %v3103 = vmul.f32 %v2981, 0.5
        %v3104 = vmul.f32 %v2983, 0.5
        %v3105 = vmul.f32 %v2987, 0.5
        %v3106 = vmul.f32 %v2989, 0.5
        %v3107 = vmul.f32 %v2991, 0.5
        %v3108 = vmul.f32 %v2993, 0.5
        %v3109 = vmul.f32 %v2997, 0.5
        %v3110 = vmul.f32 %v2999, 0.5
        %v3111 = vmul.f32 %v3001, 0.5
        %v3112 = vmul.f32 %v3003, 0.5
        %v3113 = vmul.f32 %v3007, 0.5
        %v3114 = vmul.f32 %v3009, 0.5
        %v3115 = vmul.f32 %v3011, 0.5
        %v3116 = vmul.f32 %v3013, 0.5
        %v3117 = vmul.f32 %v3017, 0.5
        %v3118 = vmul.f32 %v3019, 0.5
        %v3119 = vmul.f32 %v3021, 0.5
        %v3120 = vmul.f32 %v3023, 0.5
        %v3121 = vmul.f32 %v3027, 0.5
        %v3122 = vmul.f32 %v3029, 0.5
        %v3123 = vmul.f32 %v3031, 0.5
        %v3124 = vmul.f32 %v3033, 0.5
        %v3125 = vmul.f32 %v3037, 0.5
        %v3126 = vmul.f32 %v3039, 0.5
        %v3127 = vmul.f32 %v3041, 0.5
        %v3128 = vmul.f32 %v3043, 0.5
        %v3129 = vmul.f32 %v3047, 0.5
        %v3130 = vmul.f32 %v3049, 0.5
        %v3131 = vmul.f32 %v3051, 0.5
        %v3132 = vmul.f32 %v3053, 0.5
        %v3133 = vmul.f32 %v3057, 0.5
        %v3134 = vmul.f32 %v3059, 0.5
        %v3135 = vmul.f32 %v3061, 0.5
        %v3136 = vmul.f32 %v3063, 0.5
        %v3137 = vtanh.pop %v3065
        %v3138 = vtanh.pop %v3066
        %v3139 = vtanh.pop %v3067
        %v3140 = vtanh.pop %v3068
        %v3141 = vtanh.pop %v3069
        %v3142 = vtanh.pop %v3070
        %v3143 = vtanh.pop %v3071
        %v3144 = vtanh.pop %v3072
        %v3145 = vtanh.pop %v3073
        %v3146 = vtanh.pop %v3074
        %v3147 = vtanh.pop %v3075
        %v3148 = vtanh.pop %v3076
        %v3149 = vtanh.pop %v3077
        %v3150 = vtanh.pop %v3078
        %v3151 = vtanh.pop %v3079
        %v3152 = vtanh.pop %v3080
        %v3153 = vtanh.pop %v3081
        %v3154 = vtanh.pop %v3082
        %v3155 = vtanh.pop %v3083
        %v3156 = vtanh.pop %v3084
        %v3157 = vtanh.pop %v3085
        %v3158 = vtanh.pop %v3086
        %v3159 = vtanh.pop %v3087
        %v3160 = vtanh.pop %v3088
        %v3161 = vtanh.pop %v3089
        %v3162 = vtanh.pop %v3090
        %v3163 = vtanh.pop %v3091
        %v3164 = vtanh.pop %v3092
        %v3165 = vtanh.pop %v3093
        %v3166 = vtanh.pop %v3094
        %v3167 = vtanh.pop %v3095
        %v3168 = vtanh.pop %v3096
        %v3169 = vtanh.pop %v3097
        %v3170 = vtanh.pop %v3098
        %v3171 = vtanh.pop %v3099
        %v3172 = vtanh.pop %v3100
        %v3173 = vtanh.pop %v3101
        %v3174 = vtanh.pop %v3102
        %v3175 = vtanh.pop %v3103
        %v3176 = vtanh.pop %v3104
        %v3177 = vtanh.pop %v3105
        %v3178 = vtanh.pop %v3106
        %v3179 = vtanh.pop %v3107
        %v3180 = vtanh.pop %v3108
        %v3181 = vtanh.pop %v3109
        %v3182 = vtanh.pop %v3110
        %v3183 = vtanh.pop %v3111
        %v3184 = vtanh.pop %v3112
        %v3185 = vtanh.pop %v3113
        %v3186 = vtanh.pop %v3114
        %v3187 = vtanh.pop %v3115
        %v3188 = vtanh.pop %v3116
        %v3189 = vtanh.pop %v3117
        %v3190 = vtanh.pop %v3118
        %v3191 = vtanh.pop %v3119
        %v3192 = vtanh.pop %v3120
        %v3193 = vtanh.pop %v3121
        %v3194 = vtanh.pop %v3122
        %v3195 = vtanh.pop %v3123
        %v3196 = vtanh.pop %v3124
        %v3197 = vtanh.pop %v3125
        %v3198 = vtanh.pop %v3126
        %v3199 = vtanh.pop %v3127
        %v3200 = vtanh.pop %v3128
        %v3201 = vtanh.pop %v3129
        %v3202 = vtanh.pop %v3130
        %v3203 = vtanh.pop %v3131
        %v3204 = vtanh.pop %v3132
        %v3205 = vtanh.pop %v3133
        %v3206 = vtanh.pop %v3134
        %v3207 = vtanh.pop %v3135
        %v3208 = vtanh.pop %v3136
        %v3209 = vmul.f32 %v3137, 0.5
        %v3210 = vmul.f32 %v3138, 0.5
        %v3211 = vmul.f32 %v3139, 0.5
        %v3212 = vmul.f32 %v3140, 0.5
        %v3213 = vmul.f32 %v3141, 0.5
        %v3214 = vmul.f32 %v3142, 0.5
        %v3215 = vmul.f32 %v3143, 0.5
        %v3216 = vmul.f32 %v3144, 0.5
        %v3217 = vmul.f32 %v3145, 0.5
        %v3218 = vmul.f32 %v3146, 0.5
        %v3219 = vmul.f32 %v3147, 0.5
        %v3220 = vmul.f32 %v3148, 0.5
        %v3221 = vmul.f32 %v3149, 0.5
        %v3222 = vmul.f32 %v3150, 0.5
        %v3223 = vmul.f32 %v3151, 0.5
        %v3224 = vmul.f32 %v3152, 0.5
        %v3225 = vmul.f32 %v3153, 0.5
        %v3226 = vmul.f32 %v3154, 0.5
        %v3227 = vmul.f32 %v3155, 0.5
        %v3228 = vmul.f32 %v3156, 0.5
        %v3229 = vmul.f32 %v3157, 0.5
        %v3230 = vmul.f32 %v3158, 0.5
        %v3231 = vmul.f32 %v3159, 0.5
        %v3232 = vmul.f32 %v3160, 0.5
        %v3233 = vmul.f32 %v3161, 0.5
        %v3234 = vmul.f32 %v3162, 0.5
        %v3235 = vmul.f32 %v3163, 0.5
        %v3236 = vmul.f32 %v3164, 0.5
        %v3237 = vmul.f32 %v3165, 0.5
        %v3238 = vmul.f32 %v3166, 0.5
        %v3239 = vmul.f32 %v3167, 0.5
        %v3240 = vmul.f32 %v3168, 0.5
        %v3241 = vmul.f32 %v3169, 0.5
        %v3242 = vmul.f32 %v3170, 0.5
        %v3243 = vmul.f32 %v3171, 0.5
        %v3244 = vmul.f32 %v3172, 0.5
        %v3245 = vmul.f32 %v3173, 0.5
        %v3246 = vmul.f32 %v3174, 0.5
        %v3247 = vmul.f32 %v3175, 0.5
        %v3248 = vmul.f32 %v3176, 0.5
        %v3249 = vmul.f32 %v3177, 0.5
        %v3250 = vmul.f32 %v3178, 0.5
        %v3251 = vmul.f32 %v3179, 0.5
        %v3252 = vmul.f32 %v3180, 0.5
        %v3253 = vmul.f32 %v3181, 0.5
        %v3254 = vmul.f32 %v3182, 0.5
        %v3255 = vmul.f32 %v3183, 0.5
        %v3256 = vmul.f32 %v3184, 0.5
        %v3257 = vmul.f32 %v3185, 0.5
        %v3258 = vmul.f32 %v3186, 0.5
        %v3259 = vmul.f32 %v3187, 0.5
        %v3260 = vmul.f32 %v3188, 0.5
        %v3261 = vmul.f32 %v3189, 0.5
        %v3262 = vmul.f32 %v3190, 0.5
        %v3263 = vmul.f32 %v3191, 0.5
        %v3264 = vmul.f32 %v3192, 0.5
        %v3265 = vmul.f32 %v3193, 0.5
        %v3266 = vmul.f32 %v3194, 0.5
        %v3267 = vmul.f32 %v3195, 0.5
        %v3268 = vmul.f32 %v3196, 0.5
        %v3269 = vmul.f32 %v3197, 0.5
        %v3270 = vmul.f32 %v3198, 0.5
        %v3271 = vmul.f32 %v3199, 0.5
        %v3272 = vmul.f32 %v3200, 0.5
        %v3273 = vmul.f32 %v3201, 0.5
        %v3274 = vmul.f32 %v3202, 0.5
        %v3275 = vmul.f32 %v3203, 0.5
        %v3276 = vmul.f32 %v3204, 0.5
        %v3277 = vmul.f32 %v3205, 0.5
        %v3278 = vmul.f32 %v3206, 0.5
        %v3279 = vmul.f32 %v3207, 0.5
        %v3280 = vmul.f32 %v3208, 0.5
        %v3281 = vadd.f32 %v3209, 0.5
        %v3282 = vadd.f32 %v3210, 0.5
        %v3283 = vadd.f32 %v3211, 0.5
        %v3284 = vadd.f32 %v3212, 0.5
        %v3285 = vadd.f32 %v3213, 0.5
        %v3286 = vadd.f32 %v3214, 0.5
        %v3287 = vadd.f32 %v3215, 0.5
        %v3288 = vadd.f32 %v3216, 0.5
        %v3289 = vadd.f32 %v3217, 0.5
        %v3290 = vadd.f32 %v3218, 0.5
        %v3291 = vadd.f32 %v3219, 0.5
        %v3292 = vadd.f32 %v3220, 0.5
        %v3293 = vadd.f32 %v3221, 0.5
        %v3294 = vadd.f32 %v3222, 0.5
        %v3295 = vadd.f32 %v3223, 0.5
        %v3296 = vadd.f32 %v3224, 0.5
        %v3297 = vadd.f32 %v3225, 0.5
        %v3298 = vadd.f32 %v3226, 0.5
        %v3299 = vadd.f32 %v3227, 0.5
        %v3300 = vadd.f32 %v3228, 0.5
        %v3301 = vadd.f32 %v3229, 0.5
        %v3302 = vadd.f32 %v3230, 0.5
        %v3303 = vadd.f32 %v3231, 0.5
        %v3304 = vadd.f32 %v3232, 0.5
        %v3305 = vadd.f32 %v3233, 0.5
        %v3306 = vadd.f32 %v3234, 0.5
        %v3307 = vadd.f32 %v3235, 0.5
        %v3308 = vadd.f32 %v3236, 0.5
        %v3309 = vadd.f32 %v3237, 0.5
        %v3310 = vadd.f32 %v3238, 0.5
        %v3311 = vadd.f32 %v3239, 0.5
        %v3312 = vadd.f32 %v3240, 0.5
        %v3313 = vadd.f32 %v3241, 0.5
        %v3314 = vadd.f32 %v3242, 0.5
        %v3315 = vadd.f32 %v3243, 0.5
        %v3316 = vadd.f32 %v3244, 0.5
        %v3317 = vadd.f32 %v3245, 0.5
        %v3318 = vadd.f32 %v3246, 0.5
        %v3319 = vadd.f32 %v3247, 0.5
        %v3320 = vadd.f32 %v3248, 0.5
        %v3321 = vadd.f32 %v3249, 0.5
        %v3322 = vadd.f32 %v3250, 0.5
        %v3323 = vadd.f32 %v3251, 0.5
        %v3324 = vadd.f32 %v3252, 0.5
        %v3325 = vadd.f32 %v3253, 0.5
        %v3326 = vadd.f32 %v3254, 0.5
        %v3327 = vadd.f32 %v3255, 0.5
        %v3328 = vadd.f32 %v3256, 0.5
        %v3329 = vadd.f32 %v3257, 0.5
        %v3330 = vadd.f32 %v3258, 0.5
        %v3331 = vadd.f32 %v3259, 0.5
        %v3332 = vadd.f32 %v3260, 0.5
        %v3333 = vadd.f32 %v3261, 0.5
        %v3334 = vadd.f32 %v3262, 0.5
        %v3335 = vadd.f32 %v3263, 0.5
        %v3336 = vadd.f32 %v3264, 0.5
        %v3337 = vadd.f32 %v3265, 0.5
        %v3338 = vadd.f32 %v3266, 0.5
        %v3339 = vadd.f32 %v3267, 0.5
        %v3340 = vadd.f32 %v3268, 0.5
        %v3341 = vadd.f32 %v3269, 0.5
        %v3342 = vadd.f32 %v3270, 0.5
        %v3343 = vadd.f32 %v3271, 0.5
        %v3344 = vadd.f32 %v3272, 0.5
        %v3345 = vadd.f32 %v3273, 0.5
        %v3346 = vadd.f32 %v3274, 0.5
        %v3347 = vadd.f32 %v3275, 0.5
        %v3348 = vadd.f32 %v3276, 0.5
        %v3349 = vadd.f32 %v3277, 0.5
        %v3350 = vadd.f32 %v3278, 0.5
        %v3351 = vadd.f32 %v3279, 0.5
        %v3352 = vadd.f32 %v3280, 0.5
        %v3353 = vmul.f32 %v2887, %v3281
        %v3354 = vmul.f32 %v2889, %v3282
        %v3355 = vmul.f32 %v2891, %v3283
        %v3356 = vmul.f32 %v2893, %v3284
        %v3357 = vmul.f32 %v2897, %v3285
        %v3358 = vmul.f32 %v2899, %v3286
        %v3359 = vmul.f32 %v2901, %v3287
        %v3360 = vmul.f32 %v2903, %v3288
        %v3361 = vmul.f32 %v2907, %v3289
        %v3362 = vmul.f32 %v2909, %v3290
        %v3363 = vmul.f32 %v2911, %v3291
        %v3364 = vmul.f32 %v2913, %v3292
        %v3365 = vmul.f32 %v2917, %v3293
        %v3366 = vmul.f32 %v2919, %v3294
        %v3367 = vmul.f32 %v2921, %v3295
        %v3368 = vmul.f32 %v2923, %v3296
        %v3369 = vmul.f32 %v2927, %v3297
        %v3370 = vmul.f32 %v2929, %v3298
        %v3371 = vmul.f32 %v2931, %v3299
        %v3372 = vmul.f32 %v2933, %v3300
        %v3373 = vmul.f32 %v2937, %v3301
        %v3374 = vmul.f32 %v2939, %v3302
        %v3375 = vmul.f32 %v2941, %v3303
        %v3376 = vmul.f32 %v2943, %v3304
        %v3377 = vmul.f32 %v2947, %v3305
        %v3378 = vmul.f32 %v2949, %v3306
        %v3379 = vmul.f32 %v2951, %v3307
        %v3380 = vmul.f32 %v2953, %v3308
        %v3381 = vmul.f32 %v2957, %v3309
        %v3382 = vmul.f32 %v2959, %v3310
        %v3383 = vmul.f32 %v2961, %v3311
        %v3384 = vmul.f32 %v2963, %v3312
        %v3385 = vmul.f32 %v2967, %v3313
        %v3386 = vmul.f32 %v2969, %v3314
        %v3387 = vmul.f32 %v2971, %v3315
        %v3388 = vmul.f32 %v2973, %v3316
        %v3389 = vmul.f32 %v2977, %v3317
        %v3390 = vmul.f32 %v2979, %v3318
        %v3391 = vmul.f32 %v2981, %v3319
        %v3392 = vmul.f32 %v2983, %v3320
        %v3393 = vmul.f32 %v2987, %v3321
        %v3394 = vmul.f32 %v2989, %v3322
        %v3395 = vmul.f32 %v2991, %v3323
        %v3396 = vmul.f32 %v2993, %v3324
        %v3397 = vmul.f32 %v2997, %v3325
        %v3398 = vmul.f32 %v2999, %v3326
        %v3399 = vmul.f32 %v3001, %v3327
        %v3400 = vmul.f32 %v3003, %v3328
        %v3401 = vmul.f32 %v3007, %v3329
        %v3402 = vmul.f32 %v3009, %v3330
        %v3403 = vmul.f32 %v3011, %v3331
        %v3404 = vmul.f32 %v3013, %v3332
        %v3405 = vmul.f32 %v3017, %v3333
        %v3406 = vmul.f32 %v3019, %v3334
        %v3407 = vmul.f32 %v3021, %v3335
        %v3408 = vmul.f32 %v3023, %v3336
        %v3409 = vmul.f32 %v3027, %v3337
        %v3410 = vmul.f32 %v3029, %v3338
        %v3411 = vmul.f32 %v3031, %v3339
        %v3412 = vmul.f32 %v3033, %v3340
        %v3413 = vmul.f32 %v3037, %v3341
        %v3414 = vmul.f32 %v3039, %v3342
        %v3415 = vmul.f32 %v3041, %v3343
        %v3416 = vmul.f32 %v3043, %v3344
        %v3417 = vmul.f32 %v3047, %v3345
        %v3418 = vmul.f32 %v3049, %v3346
        %v3419 = vmul.f32 %v3051, %v3347
        %v3420 = vmul.f32 %v3053, %v3348
        %v3421 = vmul.f32 %v3057, %v3349
        %v3422 = vmul.f32 %v3059, %v3350
        %v3423 = vmul.f32 %v3061, %v3351
        %v3424 = vmul.f32 %v3063, %v3352
        %v3425 = vpack.c.bf16 %v3355, %v3353
        %v3426 = vpack.c.bf16 %v3356, %v3354
        %v3429 = vunpack.c.l.b16 %v3425
        %v3430 = vunpack.c.l.b16 %v3426
        %v3431 = vunpack.c.h.b16 %v3425
        %v3432 = vunpack.c.h.b16 %v3426
        %v3433 = vpack.c.b16 %v3430, %v3429
        %v3434 = vpack.c.b16 %v3432, %v3431
        %3437 = vst [vmem:[%s178] sm:$0xff] %v3433
        %3438 = vst [vmem:[%s178 + $0x8] sm:$0xff] %v3434
        %v3439 = vpack.c.bf16 %v3359, %v3357
        %v3440 = vpack.c.bf16 %v3360, %v3358
        %v3441 = vpack.c.bf16 %v3361, %v3361
        %v3442 = vpack.c.bf16 %v3362, %v3362
        %v3447 = vunpack.c.l.b16 %v3439
        %v3448 = vunpack.c.l.b16 %v3440
        %v3449 = vunpack.c.h.b16 %v3439
        %v3450 = vunpack.c.h.b16 %v3440
        %v3451 = vunpack.c.l.b16 %v3441
        %v3452 = vunpack.c.l.b16 %v3442
        %v3453 = vpack.c.b16 %v3448, %v3447
        %v3454 = vpack.c.b16 %v3450, %v3449
        %v3455 = vpack.c.b16 %v3452, %v3451
        %vm3456 = vcmask 1042432
        %vm3457 = vcmask 1046532
        %vm3458 = vmor %vm3456, %vm3457
        %v3459 = vrot.slane %v3453, 5
        %v3460 = vrot.slane %v3459, 4
        %v3461 = vrot.slane %v3454, 5
        %v3462 = vsel %vm3458, %v3460, %v3461
        %v3463 = vrot.slane %v3461, 4
        %v3464 = vrot.slane %v3455, 5
        %v3465 = vsel %vm3458, %v3463, %v3464
        %s3468 = scalar_lea.vmem %s178, 16 [#allocation7]
        %3469 = vst [vmem:[%s3468] sm:$0xff] %v3462
        %3470 = vst [vmem:[%s3468 + $0x8] sm:$0xff] %v3465
        %v3471 = vpack.c.bf16 %v3363, %v3361
        %v3472 = vpack.c.bf16 %v3364, %v3362
        %v3473 = vpack.c.bf16 %v3365, %v3365
        %v3474 = vpack.c.bf16 %v3366, %v3366
        %v3479 = vunpack.c.l.b16 %v3471
        %v3480 = vunpack.c.l.b16 %v3472
        %v3481 = vunpack.c.h.b16 %v3471
        %v3482 = vunpack.c.h.b16 %v3472
        %v3483 = vunpack.c.l.b16 %v3473
        %v3484 = vunpack.c.l.b16 %v3474
        %v3485 = vpack.c.b16 %v3480, %v3479
        %v3486 = vpack.c.b16 %v3482, %v3481
        %v3487 = vpack.c.b16 %v3484, %v3483
        %vm3488 = vcmask 1041408
        %vm3489 = vcmask 1045508
        %vm3490 = vmor %vm3488, %vm3489
        %v3491 = vrot.slane %v3485, 6
        %v3492 = vrot.slane %v3491, 4
        %v3493 = vrot.slane %v3486, 6
        %v3494 = vsel %vm3490, %v3492, %v3493
        %v3495 = vrot.slane %v3493, 4
        %v3496 = vrot.slane %v3487, 6
        %v3497 = vsel %vm3490, %v3495, %v3496
        %s3500 = scalar_lea.vmem %s178, 32 [#allocation7]
        %3501 = vst [vmem:[%s3500] sm:$0xff] %v3494
        %3502 = vst [vmem:[%s3500 + $0x8] sm:$0xff] %v3497
        %v3503 = vpack.c.bf16 %v3367, %v3365
        %v3504 = vpack.c.bf16 %v3368, %v3366
        %v3505 = vpack.c.bf16 %v3369, %v3369
        %v3506 = vpack.c.bf16 %v3370, %v3370
        %v3511 = vunpack.c.l.b16 %v3503
        %v3512 = vunpack.c.l.b16 %v3504
        %v3513 = vunpack.c.h.b16 %v3503
        %v3514 = vunpack.c.h.b16 %v3504
        %v3515 = vunpack.c.l.b16 %v3505
        %v3516 = vunpack.c.l.b16 %v3506
        %v3517 = vpack.c.b16 %v3512, %v3511
        %v3518 = vpack.c.b16 %v3514, %v3513
        %v3519 = vpack.c.b16 %v3516, %v3515
        %vm3520 = vcmask 1040384
        %vm3521 = vcmask 1044484
        %vm3522 = vmor %vm3520, %vm3521
        %v3523 = vrot.slane %v3517, 7
        %v3524 = vrot.slane %v3523, 4
        %v3525 = vrot.slane %v3518, 7
        %v3526 = vsel %vm3522, %v3524, %v3525
        %v3527 = vrot.slane %v3525, 4
        %v3528 = vrot.slane %v3519, 7
        %v3529 = vsel %vm3522, %v3527, %v3528
        %s3532 = scalar_lea.vmem %s178, 48 [#allocation7]
        %3533 = vst [vmem:[%s3532] sm:$0xff] %v3526
        %3534 = vst [vmem:[%s3532 + $0x8] sm:$0xff] %v3529
        %v3535 = vpack.c.bf16 %v3373, %v3371
        %v3536 = vpack.c.bf16 %v3374, %v3372
        %v3539 = vunpack.c.l.b16 %v3535
        %v3540 = vunpack.c.l.b16 %v3536
        %v3541 = vunpack.c.h.b16 %v3535
        %v3542 = vunpack.c.h.b16 %v3536
        %v3543 = vpack.c.b16 %v3540, %v3539
        %v3544 = vpack.c.b16 %v3542, %v3541
        %s3547 = scalar_lea.vmem %s178, 64 [#allocation7]
        %3548 = vst [vmem:[%s3547] sm:$0xff] %v3543
        %3549 = vst [vmem:[%s3547 + $0x8] sm:$0xff] %v3544
        %v3550 = vpack.c.bf16 %v3377, %v3375
        %v3551 = vpack.c.bf16 %v3378, %v3376
        %v3552 = vpack.c.bf16 %v3379, %v3379
        %v3553 = vpack.c.bf16 %v3380, %v3380
        %v3558 = vunpack.c.l.b16 %v3550
        %v3559 = vunpack.c.l.b16 %v3551
        %v3560 = vunpack.c.h.b16 %v3550
        %v3561 = vunpack.c.h.b16 %v3551
        %v3562 = vunpack.c.l.b16 %v3552
        %v3563 = vunpack.c.l.b16 %v3553
        %v3564 = vpack.c.b16 %v3559, %v3558
        %v3565 = vpack.c.b16 %v3561, %v3560
        %v3566 = vpack.c.b16 %v3563, %v3562
        %v3567 = vrot.slane %v3564, 5
        %v3568 = vrot.slane %v3567, 4
        %v3569 = vrot.slane %v3565, 5
        %v3570 = vsel %vm3458, %v3568, %v3569
        %v3571 = vrot.slane %v3569, 4
        %v3572 = vrot.slane %v3566, 5
        %v3573 = vsel %vm3458, %v3571, %v3572
        %s3576 = scalar_lea.vmem %s178, 80 [#allocation7]
        %3577 = vst [vmem:[%s3576] sm:$0xff] %v3570
        %3578 = vst [vmem:[%s3576 + $0x8] sm:$0xff] %v3573
        %v3579 = vpack.c.bf16 %v3381, %v3379
        %v3580 = vpack.c.bf16 %v3382, %v3380
        %v3581 = vpack.c.bf16 %v3383, %v3383
        %v3582 = vpack.c.bf16 %v3384, %v3384
        %v3587 = vunpack.c.l.b16 %v3579
        %v3588 = vunpack.c.l.b16 %v3580
        %v3589 = vunpack.c.h.b16 %v3579
        %v3590 = vunpack.c.h.b16 %v3580
        %v3591 = vunpack.c.l.b16 %v3581
        %v3592 = vunpack.c.l.b16 %v3582
        %v3593 = vpack.c.b16 %v3588, %v3587
        %v3594 = vpack.c.b16 %v3590, %v3589
        %v3595 = vpack.c.b16 %v3592, %v3591
        %v3596 = vrot.slane %v3593, 6
        %v3597 = vrot.slane %v3596, 4
        %v3598 = vrot.slane %v3594, 6
        %v3599 = vsel %vm3490, %v3597, %v3598
        %v3600 = vrot.slane %v3598, 4
        %v3601 = vrot.slane %v3595, 6
        %v3602 = vsel %vm3490, %v3600, %v3601
        %s3605 = scalar_lea.vmem %s178, 96 [#allocation7]
        %3606 = vst [vmem:[%s3605] sm:$0xff] %v3599
        %3607 = vst [vmem:[%s3605 + $0x8] sm:$0xff] %v3602
        %v3608 = vpack.c.bf16 %v3385, %v3383
        %v3609 = vpack.c.bf16 %v3386, %v3384
        %v3610 = vpack.c.bf16 %v3387, %v3387
        %v3611 = vpack.c.bf16 %v3388, %v3388
        %v3616 = vunpack.c.l.b16 %v3608
        %v3617 = vunpack.c.l.b16 %v3609
        %v3618 = vunpack.c.h.b16 %v3608
        %v3619 = vunpack.c.h.b16 %v3609
        %v3620 = vunpack.c.l.b16 %v3610
        %v3621 = vunpack.c.l.b16 %v3611
        %v3622 = vpack.c.b16 %v3617, %v3616
        %v3623 = vpack.c.b16 %v3619, %v3618
        %v3624 = vpack.c.b16 %v3621, %v3620
        %v3625 = vrot.slane %v3622, 7
        %v3626 = vrot.slane %v3625, 4
        %v3627 = vrot.slane %v3623, 7
        %v3628 = vsel %vm3522, %v3626, %v3627
        %v3629 = vrot.slane %v3627, 4
        %v3630 = vrot.slane %v3624, 7
        %v3631 = vsel %vm3522, %v3629, %v3630
        %s3634 = scalar_lea.vmem %s178, 112 [#allocation7]
        %3635 = vst [vmem:[%s3634] sm:$0xff] %v3628
        %3636 = vst [vmem:[%s3634 + $0x8] sm:$0xff] %v3631
        %v3637 = vpack.c.bf16 %v3391, %v3389
        %v3638 = vpack.c.bf16 %v3392, %v3390
        %v3641 = vunpack.c.l.b16 %v3637
        %v3642 = vunpack.c.l.b16 %v3638
        %v3643 = vunpack.c.h.b16 %v3637
        %v3644 = vunpack.c.h.b16 %v3638
        %v3645 = vpack.c.b16 %v3642, %v3641
        %v3646 = vpack.c.b16 %v3644, %v3643
        %s3649 = scalar_lea.vmem %s178, 128 [#allocation7]
        %3650 = vst [vmem:[%s3649] sm:$0xff] %v3645
        %3651 = vst [vmem:[%s3649 + $0x8] sm:$0xff] %v3646
        %v3652 = vpack.c.bf16 %v3395, %v3393
        %v3653 = vpack.c.bf16 %v3396, %v3394
        %v3654 = vpack.c.bf16 %v3397, %v3397
        %v3655 = vpack.c.bf16 %v3398, %v3398
        %v3660 = vunpack.c.l.b16 %v3652
        %v3661 = vunpack.c.l.b16 %v3653
        %v3662 = vunpack.c.h.b16 %v3652
        %v3663 = vunpack.c.h.b16 %v3653
        %v3664 = vunpack.c.l.b16 %v3654
        %v3665 = vunpack.c.l.b16 %v3655
        %v3666 = vpack.c.b16 %v3661, %v3660
        %v3667 = vpack.c.b16 %v3663, %v3662
        %v3668 = vpack.c.b16 %v3665, %v3664
        %v3669 = vrot.slane %v3666, 5
        %v3670 = vrot.slane %v3669, 4
        %v3671 = vrot.slane %v3667, 5
        %v3672 = vsel %vm3458, %v3670, %v3671
        %v3673 = vrot.slane %v3671, 4
        %v3674 = vrot.slane %v3668, 5
        %v3675 = vsel %vm3458, %v3673, %v3674
        %s3678 = scalar_lea.vmem %s178, 144 [#allocation7]
        %3679 = vst [vmem:[%s3678] sm:$0xff] %v3672
        %3680 = vst [vmem:[%s3678 + $0x8] sm:$0xff] %v3675
        %v3681 = vpack.c.bf16 %v3399, %v3397
        %v3682 = vpack.c.bf16 %v3400, %v3398
        %v3683 = vpack.c.bf16 %v3401, %v3401
        %v3684 = vpack.c.bf16 %v3402, %v3402
        %v3689 = vunpack.c.l.b16 %v3681
        %v3690 = vunpack.c.l.b16 %v3682
        %v3691 = vunpack.c.h.b16 %v3681
        %v3692 = vunpack.c.h.b16 %v3682
        %v3693 = vunpack.c.l.b16 %v3683
        %v3694 = vunpack.c.l.b16 %v3684
        %v3695 = vpack.c.b16 %v3690, %v3689
        %v3696 = vpack.c.b16 %v3692, %v3691
        %v3697 = vpack.c.b16 %v3694, %v3693
        %v3698 = vrot.slane %v3695, 6
        %v3699 = vrot.slane %v3698, 4
        %v3700 = vrot.slane %v3696, 6
        %v3701 = vsel %vm3490, %v3699, %v3700
        %v3702 = vrot.slane %v3700, 4
        %v3703 = vrot.slane %v3697, 6
        %v3704 = vsel %vm3490, %v3702, %v3703
        %s3707 = scalar_lea.vmem %s178, 160 [#allocation7]
        %3708 = vst [vmem:[%s3707] sm:$0xff] %v3701
        %3709 = vst [vmem:[%s3707 + $0x8] sm:$0xff] %v3704
        %v3710 = vpack.c.bf16 %v3403, %v3401
        %v3711 = vpack.c.bf16 %v3404, %v3402
        %v3712 = vpack.c.bf16 %v3405, %v3405
        %v3713 = vpack.c.bf16 %v3406, %v3406
        %v3718 = vunpack.c.l.b16 %v3710
        %v3719 = vunpack.c.l.b16 %v3711
        %v3720 = vunpack.c.h.b16 %v3710
        %v3721 = vunpack.c.h.b16 %v3711
        %v3722 = vunpack.c.l.b16 %v3712
        %v3723 = vunpack.c.l.b16 %v3713
        %v3724 = vpack.c.b16 %v3719, %v3718
        %v3725 = vpack.c.b16 %v3721, %v3720
        %v3726 = vpack.c.b16 %v3723, %v3722
        %v3727 = vrot.slane %v3724, 7
        %v3728 = vrot.slane %v3727, 4
        %v3729 = vrot.slane %v3725, 7
        %v3730 = vsel %vm3522, %v3728, %v3729
        %v3731 = vrot.slane %v3729, 4
        %v3732 = vrot.slane %v3726, 7
        %v3733 = vsel %vm3522, %v3731, %v3732
        %s3736 = scalar_lea.vmem %s178, 176 [#allocation7]
        %3737 = vst [vmem:[%s3736] sm:$0xff] %v3730
        %3738 = vst [vmem:[%s3736 + $0x8] sm:$0xff] %v3733
        %v3739 = vpack.c.bf16 %v3409, %v3407
        %v3740 = vpack.c.bf16 %v3410, %v3408
        %v3743 = vunpack.c.l.b16 %v3739
        %v3744 = vunpack.c.l.b16 %v3740
        %v3745 = vunpack.c.h.b16 %v3739
        %v3746 = vunpack.c.h.b16 %v3740
        %v3747 = vpack.c.b16 %v3744, %v3743
        %v3748 = vpack.c.b16 %v3746, %v3745
        %s3751 = scalar_lea.vmem %s178, 192 [#allocation7]
        %3752 = vst [vmem:[%s3751] sm:$0xff] %v3747
        %3753 = vst [vmem:[%s3751 + $0x8] sm:$0xff] %v3748
        %v3754 = vpack.c.bf16 %v3413, %v3411
        %v3755 = vpack.c.bf16 %v3414, %v3412
        %v3756 = vpack.c.bf16 %v3415, %v3415
        %v3757 = vpack.c.bf16 %v3416, %v3416
        %v3762 = vunpack.c.l.b16 %v3754
        %v3763 = vunpack.c.l.b16 %v3755
        %v3764 = vunpack.c.h.b16 %v3754
        %v3765 = vunpack.c.h.b16 %v3755
        %v3766 = vunpack.c.l.b16 %v3756
        %v3767 = vunpack.c.l.b16 %v3757
        %v3768 = vpack.c.b16 %v3763, %v3762
        %v3769 = vpack.c.b16 %v3765, %v3764
        %v3770 = vpack.c.b16 %v3767, %v3766
        %v3771 = vrot.slane %v3768, 5
        %v3772 = vrot.slane %v3771, 4
        %v3773 = vrot.slane %v3769, 5
        %v3774 = vsel %vm3458, %v3772, %v3773
        %v3775 = vrot.slane %v3773, 4
        %v3776 = vrot.slane %v3770, 5
        %v3777 = vsel %vm3458, %v3775, %v3776
        %s3780 = scalar_lea.vmem %s178, 208 [#allocation7]
        %3781 = vst [vmem:[%s3780] sm:$0xff] %v3774
        %3782 = vst [vmem:[%s3780 + $0x8] sm:$0xff] %v3777
        %v3783 = vpack.c.bf16 %v3417, %v3415
        %v3784 = vpack.c.bf16 %v3418, %v3416
        %v3785 = vpack.c.bf16 %v3419, %v3419
        %v3786 = vpack.c.bf16 %v3420, %v3420
        %v3791 = vunpack.c.l.b16 %v3783
        %v3792 = vunpack.c.l.b16 %v3784
        %v3793 = vunpack.c.h.b16 %v3783
        %v3794 = vunpack.c.h.b16 %v3784
        %v3795 = vunpack.c.l.b16 %v3785
        %v3796 = vunpack.c.l.b16 %v3786
        %v3797 = vpack.c.b16 %v3792, %v3791
        %v3798 = vpack.c.b16 %v3794, %v3793
        %v3799 = vpack.c.b16 %v3796, %v3795
        %v3800 = vrot.slane %v3797, 6
        %v3801 = vrot.slane %v3800, 4
        %v3802 = vrot.slane %v3798, 6
        %v3803 = vsel %vm3490, %v3801, %v3802
        %v3804 = vrot.slane %v3802, 4
        %v3805 = vrot.slane %v3799, 6
        %v3806 = vsel %vm3490, %v3804, %v3805
        %s3809 = scalar_lea.vmem %s178, 224 [#allocation7]
        %3810 = vst [vmem:[%s3809] sm:$0xff] %v3803
        %3811 = vst [vmem:[%s3809 + $0x8] sm:$0xff] %v3806
        %v3812 = vpack.c.bf16 %v3421, %v3419
        %v3813 = vpack.c.bf16 %v3422, %v3420
        %v3814 = vpack.c.bf16 %v3423, %v3423
        %v3815 = vpack.c.bf16 %v3424, %v3424
        %v3820 = vunpack.c.l.b16 %v3812
        %v3821 = vunpack.c.l.b16 %v3813
        %v3822 = vunpack.c.h.b16 %v3812
        %v3823 = vunpack.c.h.b16 %v3813
        %v3824 = vunpack.c.l.b16 %v3814
        %v3825 = vunpack.c.l.b16 %v3815
        %v3826 = vpack.c.b16 %v3821, %v3820
        %v3827 = vpack.c.b16 %v3823, %v3822
        %v3828 = vpack.c.b16 %v3825, %v3824
        %v3829 = vrot.slane %v3826, 7
        %v3830 = vrot.slane %v3829, 4
        %v3831 = vrot.slane %v3827, 7
        %v3832 = vsel %vm3522, %v3830, %v3831
        %v3833 = vrot.slane %v3831, 4
        %v3834 = vrot.slane %v3828, 7
        %v3835 = vsel %vm3522, %v3833, %v3834
        %s3838 = scalar_lea.vmem %s178, 240 [#allocation7]
        %3839 = vst [vmem:[%s3838] sm:$0xff] %v3832
        %3840 = vst [vmem:[%s3838 + $0x8] sm:$0xff] %v3835
        %s3841 = sand.u32 %s94, 1
        %s3842 = scalar_lea.sflag [#allocation6], %s3841
        %s3843 = sand.u32 %s94, 1
        %s3844 = smul.addr %s3843, 256
        %s3845 = scalar_lea.vmem [#allocation7], %s3844
        // Predicated region
        $region37: #{tpu_custom_call.1} parent=31 // pred_check
          %p3846 = pneg %p104
        $region38: #{tpu_custom_call.1} parent=31 // pred_check_branch
          %3848 = sbr.rel (%p3846) target = $region40
        $region39: #{tpu_custom_call.1} parent=31 // pred_region
          %s3850 = ssub.s32 4096, 4096
          %3851 = vsyncadd %s3842, %s3850
          %s3852 = smul.addr %s18, 64
          %s3853 = smul.addr %s3852, 64
          %s3854 = scalar_lea.hbm %s3, %s3853
          %s3855 = sshll.u32 %s3845, 4
          %s3856 = int_to_ptr.vmem [resolvable:$true] %s3855
          %3861 = dma.vmem_to_hbm [thread:$0]  %s3856, 4096, %s3854, %s3842, 128, 128, 8
        $region40: #{tpu_custom_call.1} parent=31 // pred_fallthru
          _
      $region32: #{tpu_custom_call.1} parent=5 // pred_fallthru
        _
      %p3862 = scmp.le.s32.totalorder 2, %s13
      // Predicated region
      $region41: #{tpu_custom_call.1} parent=5 // pred_check
        %p3863 = pneg %p3862
      $region42: #{tpu_custom_call.1} parent=5 // pred_check_branch
        %3865 = sbr.rel (%p3863) target = $region44
      $region43: #{tpu_custom_call.1} parent=5 // pred_region
        %s3866 = ssub.s32 %s13, 2
        // Predicated region
        $region45: #{tpu_custom_call.1} parent=43 // pred_check
          %p3867 = pneg %p110
        $region46: #{tpu_custom_call.1} parent=43 // pred_check_branch
          %3869 = sbr.rel (%p3867) target = $region48
        $region47: #{tpu_custom_call.1} parent=43 // pred_region
          %s3870 = sand.u32 %s95, 1
          %s3871 = scalar_lea.sflag [#allocation6], %s3870
          %s3872 = sand.u32 %s95, 1
          %s3873 = smul.addr %s3872, 256
          %s3874 = scalar_lea.vmem [#allocation7], %s3873
          %3875 = dma.done %s3871, 4096
        $region48: #{tpu_custom_call.1} parent=43 // pred_fallthru
          _
      $region44: #{tpu_custom_call.1} parent=5 // pred_fallthru
        _
    $region6: #{tpu_custom_call.1} parent=1 // loop_footer
      %s17 = sadd.s32 1, %s13
    $region7: #{tpu_custom_call.1} parent=1 // loop_footer_branch
      %12 = sbr.rel target = $region3
    $region8: #{tpu_custom_call.1} parent=1 // loop_exit
      _
    %3876 = vsyncpa [#allocation5], 1
    %s3877 = scalar_lea.sflag [#allocation5], 1
    %3878 = vsyncpa %s3877, 1
    %3879 = vsyncpa [#allocation6], 1
    %s3880 = scalar_lea.sflag [#allocation6], 1
    %3881 = vsyncpa %s3880, 1

</llo_original>
